<compile_context>
chip_gen: v5e
topology: v5e:2x2
jax: 0.10.0
libtpu: 0.0.40
codegen_flags: <defaults>
</compile_context>

<pallas_src>
import math

import jax
import jax.numpy as jnp
import numpy as np
from jax.experimental import pallas as pl
from jax.experimental.pallas import tpu as pltpu

HASH_Y = -1640531535   # int32 view of 2654435761
HASH_Z = 805459861


def _make_kernel(max_size: int, n_feat: int, tile_n: int):
    """max_size is the (128-padded) per-sub-grid column count of the packed table."""

    def kernel(scale_ref, size_ref, iscale_ref, xyz_ref, table_ref, out_ref):
        level = pl.program_id(0)
        scale = scale_ref[level]          # f32 scalar (SMEM)
        size = size_ref[level]            # i32 scalar (SMEM)
        isc = iscale_ref[level]           # i32 scalar; 0 => hashing path
        isc2 = isc * isc                  # hoisted out of the sub-grid loop
        hash_mask = size - 1              # hash path only runs when size == 2^m
        is_hash = isc == 0

        xyz = xyz_ref[...]                # [3, TILE_N] f32 -- points on the lane axis
        xs = xyz * scale + 0.5
        g = jnp.floor(xs)
        d = xs - g
        gi = g.astype(jnp.int32)

        x0 = gi[0:1, :]
        y0 = gi[1:2, :]
        z0 = gi[2:3, :]
        dx = d[0:1, :]
        dy = d[1:2, :]
        dz = d[2:3, :]
        omdx = 1.0 - dx                   # hoisted (used by 4 of the 8 weights)
        omdy = 1.0 - dy
        omdz = 1.0 - dz
        px = x0 & 1                       # base-cell parity per axis (0/1)
        py = y0 & 1
        pz = z0 & 1

        tab = table_ref[...]              # [F, 8*max_size] f32, lane-dense, level-resident

        # iota over a SINGLE sub-grid's columns (8x smaller than the packed axis)
        iota_m = jax.lax.broadcasted_iota(jnp.int32, (max_size, tile_n), 0)

        acc = jnp.zeros((n_feat, tile_n), jnp.float32)

        # Loop over the 8 parity sub-grids.  Each point's 8 cell corners map
        # bijectively onto the 8 sub-grids: the corner landing in sub-grid j has
        # offset bits (ox,oy,oz) = base_parity XOR bits(j).
        for j in range(8):
            jx = (j >> 2) & 1
            jy = (j >> 1) & 1
            jz = j & 1
            ox = px ^ jx                  # per-point 0/1 corner offsets
            oy = py ^ jy
            oz = pz ^ jz
            x = x0 + ox
            y = y0 + oy
            z = z0 + oz
            # hashed index (size is a power of two on this path -> mask)
            h = x ^ (y * jnp.int32(HASH_Y)) ^ (z * jnp.int32(HASH_Z))
            hash_idx = h & hash_mask
            # dense (non-hashing) index
            lin_idx = jnp.mod(x + y * isc + z * isc2, size)
            idx = jnp.where(is_hash, hash_idx, lin_idx)          # [1, TILE_N]
            # gather from sub-grid j expressed as 0/1 one-hot x table on the MXU:
            #   [F, max_size] @ [max_size, TILE_N] -> [F, TILE_N]
            onehot = jnp.where(iota_m == idx,
                               jnp.float32(1.0), jnp.float32(0.0))
            tab_j = tab[:, j * max_size:(j + 1) * max_size]      # lane-aligned slice
            corner = jnp.dot(tab_j, onehot,
                             preferred_element_type=jnp.float32)
            # trilinear weight of this point's corner in sub-grid j
            wx = jnp.where(ox != 0, dx, omdx)
            wy = jnp.where(oy != 0, dy, omdy)
            wz = jnp.where(oz != 0, dz, omdz)
            acc = acc + corner * (wx * wy * wz)

        out_ref[...] = acc                 # lane-dense (F, TILE_N) store

    return kernel


def hash_encoding_forward(inputs, table, scales, sizes, int_scales,
                          n_feat: int, max_size: int, tile_n: int = 128):
    """inputs: [N, 3] f32; table: [L, F, 8*max_size] f32 -> [N, L*F] f32."""
    n_points = inputs.shape[0]
    n_levels = table.shape[0]
    K = 8 * max_size
    n_pad = ((n_points + tile_n - 1) // tile_n) * tile_n

    # points laid out [3, N_pad] so the point axis is the lane axis in-kernel
    xyz_t = jnp.zeros((3, n_pad), jnp.float32).at[:, :n_points].set(inputs.T)

    kernel = _make_kernel(max_size, n_feat, tile_n)

    out = pl.pallas_call(
        kernel,
        grid=(n_levels, n_pad // tile_n),   # level OUTER -> table block stays resident
        in_specs=[
            pl.BlockSpec(memory_space=pltpu.MemorySpace.SMEM),  # scales      [L] f32
            pl.BlockSpec(memory_space=pltpu.MemorySpace.SMEM),  # sizes       [L] i32
            pl.BlockSpec(memory_space=pltpu.MemorySpace.SMEM),  # int_scales  [L] i32
            pl.BlockSpec((3, tile_n), lambda l, t: (0, t)),     # point tile  [3, TN]
            pl.BlockSpec((None, n_feat, K), lambda l, t: (l, 0, 0)),  # level table [F, K]
        ],
        out_specs=pl.BlockSpec((None, n_feat, tile_n), lambda l, t: (l, 0, t)),
        out_shape=jax.ShapeDtypeStruct((n_levels, n_feat, n_pad), jnp.float32),
        compiler_params=pltpu.CompilerParams(
            dimension_semantics=("parallel", "parallel"),
            vmem_limit_bytes=32 * 1024 * 1024),
    )(scales, sizes, int_scales, xyz_t, table)

    # [L, F, N_pad] -> [N, L*F]  (level-major, feature-minor columns, as in torch)
    out = out[:, :, :n_points]
    return jnp.transpose(out, (2, 0, 1)).reshape(n_points, n_levels * n_feat)


def build_hash_encoding_params(encoding_config: dict, key):
    """Mirrors HashEncoding.__init__ / initialize(); deterministic init."""
    n_levels = encoding_config.get('n_levels', 16)
    n_feat = encoding_config.get('n_features_per_level', 2)
    log2_hashmap_size = encoding_config.get('log2_hashmap_size', 19)
    base_resolution = encoding_config.get('base_resolution', 16)
    per_level_scale = encoding_config.get('per_level_scale', 1.38191288)
    threshold = 1 << log2_hashmap_size

    scales, sizes, int_scales = [], [], []
    for i in range(n_levels):
        scale_raw = math.pow(2.0, i * math.log2(per_level_scale)) * base_resolution - 1.0
        resolution = math.ceil(scale_raw) + 1
        num_raw = math.ceil(resolution ** 3 / 8) * 8
        size = min(num_raw, threshold)
        scales.append(scale_raw)
        sizes.append(size)
        # forward(): hashing path (resolution == 0.0) when level overflows hashmap
        isc = 0 if size >= threshold else int(math.ceil(scale_raw) + 1.0)
        if isc:
            # dense-path linear index must stay within int32 (matches torch int32 math)
            assert (resolution - 1) * (1 + isc + isc * isc) < 2 ** 31
        int_scales.append(isc)

    # lane-pad the per-sub-grid column count so in-kernel sub-grid slices are
    # aligned to the 128-lane tile (no relayout copies)
    max_size = ((max(sizes) + 127) // 128) * 128

    # 8 sub-grid tables per level, packed LANE-DENSE: [L, F, 8*max_size];
    # sub-grid j occupies columns [j*max_size, j*max_size + size_level), zero-padded.
    table = np.zeros((n_levels, n_feat, 8 * max_size), np.float32)
    keys = jax.random.split(key, n_levels * 8)
    for i in range(n_levels):
        for j in range(8):
            w = 0.1 * jax.random.normal(keys[i * 8 + j], (sizes[i], n_feat),
                                        dtype=jnp.float32)
            table[i, :, j * max_size: j * max_size + sizes[i]] = np.asarray(w).T

    # TODO(synk): the module's `self.count` buffer is never used in forward(); omitted.
    return (jnp.asarray(table),
            jnp.asarray(scales, jnp.float32),
            jnp.asarray(sizes, jnp.int32),
            jnp.asarray(int_scales, jnp.int32),
            n_feat, max_size)


def reference_forward(inputs, table, scales, sizes, int_scales, n_feat, max_size):
    """Pure numpy mirror of HashEncoding.forward for validation."""
    inputs = np.asarray(inputs)
    table = np.asarray(table)             # [L, F, 8*max_size]
    n = inputs.shape[0]
    n_levels = table.shape[0]
    out = np.zeros((n, n_levels * n_feat), np.float32)
    for lvl in range(n_levels):
        scale = np.float32(np.asarray(scales)[lvl])
        size = int(np.asarray(sizes)[lvl])
        isc = int(np.asarray(int_scales)[lvl])
        xs = inputs * scale + np.float32(0.5)
        g = np.floor(xs)
        d = (xs - g).astype(np.float32)
        gi = g.astype(np.int32)
        feat = np.zeros((n, n_feat), np.float32)
        for ox in (0, 1):
            for oy in (0, 1):
                for oz in (0, 1):
                    x = gi[:, 0] + np.int32(ox)
                    y = gi[:, 1] + np.int32(oy)
                    z = gi[:, 2] + np.int32(oz)
                    gidx = (x % 2) * 4 + (y % 2) * 2 + (z % 2)
                    if isc == 0:
                        h = x ^ (y * np.int32(HASH_Y)) ^ (z * np.int32(HASH_Z))
                        idx = np.mod(h, size)
                    else:
                        idx = np.mod(x + y * isc + z * isc * isc, size)
                    wx = d[:, 0] if ox else (1.0 - d[:, 0])
                    wy = d[:, 1] if oy else (1.0 - d[:, 1])
                    wz = d[:, 2] if oz else (1.0 - d[:, 2])
                    w = (wx * wy * wz).astype(np.float32)
                    feat += table[lvl][:, gidx * max_size + idx].T * w[:, None]
        out[:, lvl * n_feat:(lvl + 1) * n_feat] = feat
    return out


if __name__ == "__main__":
    key = jax.random.PRNGKey(0)
    k_in, k_par = jax.random.split(key)

    # Small, forward-consistent config (inputs are [N, 3] coordinates in [0, 1))
    encoding_config = dict(n_levels=4, n_features_per_level=2,
                           log2_hashmap_size=8, base_resolution=4,
                           per_level_scale=1.5)
    table, scales, sizes, int_scales, n_feat, max_size = \
        build_hash_encoding_params(encoding_config, k_par)

    n_points = 200   # not a multiple of the 128-point tile -> exercises padding + 2 tiles
    inputs = jax.random.uniform(k_in, (n_points, 3), dtype=jnp.float32)

    out = hash_encoding_forward(inputs, table, scales, sizes, int_scales,
                                n_feat, max_size)
    out = jax.block_until_ready(out)

    ref = reference_forward(inputs, table, scales, sizes, int_scales,
                            n_feat, max_size)
    np.testing.assert_allclose(np.asarray(out), ref, rtol=1e-5, atol=1e-5)

    print("KERNEL_OK")
</pallas_src>

<mosaic_0001>
module attributes {stable_mosaic.version = 11 : i64} {
  func.func @kernel(%arg0: i32, %arg1: i32, %arg2: memref<4xf32, #tpu.memory_space<smem>>, %arg3: memref<4xi32, #tpu.memory_space<smem>>, %arg4: memref<4xi32, #tpu.memory_space<smem>>, %arg5: memref<3x128xf32, #tpu.memory_space<vmem>>, %arg6: memref<1x2x2048xf32, #tpu.memory_space<vmem>>, %arg7: memref<1x2x128xf32, #tpu.memory_space<vmem>>) attributes {dimension_semantics = [#tpu.dimension_semantics<parallel>, #tpu.dimension_semantics<parallel>], iteration_bounds = array<i64: 4, 2>, scalar_prefetch = 0 : i64, scratch_operands = 0 : i64, tpu.core_type = #tpu.core_type<tc>, window_params = [{transform_indices = @transform_0, window_bounds = array<i64: 4>}, {transform_indices = @transform_1, window_bounds = array<i64: 4>}, {transform_indices = @transform_2, window_bounds = array<i64: 4>}, {transform_indices = @transform_3, window_bounds = array<i64: 3, 128>}, {transform_indices = @transform_4, window_bounds = array<i64: 1, 2, 2048>}, {transform_indices = @transform_5, window_bounds = array<i64: 1, 2, 128>}]} {
    %0 = arith.index_cast %arg0 : i32 to index
    %1 = memref.load %arg2[%0] : memref<4xf32, #tpu.memory_space<smem>>
    %2 = arith.index_cast %arg0 : i32 to index
    %3 = memref.load %arg3[%2] : memref<4xi32, #tpu.memory_space<smem>>
    %4 = arith.index_cast %arg0 : i32 to index
    %5 = memref.load %arg4[%4] : memref<4xi32, #tpu.memory_space<smem>>
    %6 = arith.muli %5, %5 : i32
    %c1_i32 = arith.constant 1 : i32
    %7 = arith.subi %3, %c1_i32 : i32
    %c0_i32 = arith.constant 0 : i32
    %8 = arith.cmpi eq, %5, %c0_i32 : i32
    %c0 = arith.constant 0 : index
    %c0_0 = arith.constant 0 : index
    %9 = vector.load %arg5[%c0, %c0_0] : memref<3x128xf32, #tpu.memory_space<vmem>>, vector<3x128xf32>
    %10 = vector.broadcast %1 : f32 to vector<3x128xf32>
    %11 = arith.mulf %9, %10 : vector<3x128xf32>
    %cst = arith.constant 5.000000e-01 : f32
    %12 = vector.broadcast %cst : f32 to vector<3x128xf32>
    %13 = arith.addf %11, %12 : vector<3x128xf32>
    %14 = math.floor %13 : vector<3x128xf32>
    %15 = arith.subf %13, %14 : vector<3x128xf32>
    %16 = arith.fptosi %14 : vector<3x128xf32> to vector<3x128xi32>
    %17 = vector.extract_strided_slice %16 {offsets = [0, 0], sizes = [1, 128], strides = [1, 1]} : vector<3x128xi32> to vector<1x128xi32>
    %18 = vector.extract_strided_slice %16 {offsets = [1, 0], sizes = [1, 128], strides = [1, 1]} : vector<3x128xi32> to vector<1x128xi32>
    %19 = vector.extract_strided_slice %16 {offsets = [2, 0], sizes = [1, 128], strides = [1, 1]} : vector<3x128xi32> to vector<1x128xi32>
    %20 = vector.extract_strided_slice %15 {offsets = [0, 0], sizes = [1, 128], strides = [1, 1]} : vector<3x128xf32> to vector<1x128xf32>
    %21 = vector.extract_strided_slice %15 {offsets = [1, 0], sizes = [1, 128], strides = [1, 1]} : vector<3x128xf32> to vector<1x128xf32>
    %22 = vector.extract_strided_slice %15 {offsets = [2, 0], sizes = [1, 128], strides = [1, 1]} : vector<3x128xf32> to vector<1x128xf32>
    %cst_1 = arith.constant 1.000000e+00 : f32
    %23 = vector.broadcast %cst_1 : f32 to vector<1x128xf32>
    %24 = arith.subf %23, %20 : vector<1x128xf32>
    %cst_2 = arith.constant 1.000000e+00 : f32
    %25 = vector.broadcast %cst_2 : f32 to vector<1x128xf32>
    %26 = arith.subf %25, %21 : vector<1x128xf32>
    %cst_3 = arith.constant 1.000000e+00 : f32
    %27 = vector.broadcast %cst_3 : f32 to vector<1x128xf32>
    %28 = arith.subf %27, %22 : vector<1x128xf32>
    %c1_i32_4 = arith.constant 1 : i32
    %29 = vector.broadcast %c1_i32_4 : i32 to vector<1x128xi32>
    %30 = arith.andi %17, %29 : vector<1x128xi32>
    %c1_i32_5 = arith.constant 1 : i32
    %31 = vector.broadcast %c1_i32_5 : i32 to vector<1x128xi32>
    %32 = arith.andi %18, %31 : vector<1x128xi32>
    %c1_i32_6 = arith.constant 1 : i32
    %33 = vector.broadcast %c1_i32_6 : i32 to vector<1x128xi32>
    %34 = arith.andi %19, %33 : vector<1x128xi32>
    %c0_7 = arith.constant 0 : index
    %c0_8 = arith.constant 0 : index
    %c0_9 = arith.constant 0 : index
    %35 = vector.load %arg6[%c0_7, %c0_8, %c0_9] : memref<1x2x2048xf32, #tpu.memory_space<vmem>>, vector<1x2x2048xf32>
    %36 = vector.shape_cast %35 : vector<1x2x2048xf32> to vector<2x2048xf32>
    %37 = tpu.iota {dimensions = array<i32: 0>} : vector<256x128xi32>
    %cst_10 = arith.constant 0.000000e+00 : f32
    %38 = vector.broadcast %cst_10 : f32 to vector<2x128xf32>
    %c0_i32_11 = arith.constant 0 : i32
    %39 = vector.broadcast %c0_i32_11 : i32 to vector<1x128xi32>
    %40 = arith.xori %30, %39 : vector<1x128xi32>
    %c0_i32_12 = arith.constant 0 : i32
    %41 = vector.broadcast %c0_i32_12 : i32 to vector<1x128xi32>
    %42 = arith.xori %32, %41 : vector<1x128xi32>
    %c0_i32_13 = arith.constant 0 : i32
    %43 = vector.broadcast %c0_i32_13 : i32 to vector<1x128xi32>
    %44 = arith.xori %34, %43 : vector<1x128xi32>
    %45 = arith.addi %17, %40 : vector<1x128xi32>
    %46 = arith.addi %18, %42 : vector<1x128xi32>
    %47 = arith.addi %19, %44 : vector<1x128xi32>
    %c-1640531535_i32 = arith.constant -1640531535 : i32
    %48 = vector.broadcast %c-1640531535_i32 : i32 to vector<1x128xi32>
    %49 = arith.muli %46, %48 : vector<1x128xi32>
    %50 = arith.xori %45, %49 : vector<1x128xi32>
    %c805459861_i32 = arith.constant 805459861 : i32
    %51 = vector.broadcast %c805459861_i32 : i32 to vector<1x128xi32>
    %52 = arith.muli %47, %51 : vector<1x128xi32>
    %53 = arith.xori %50, %52 : vector<1x128xi32>
    %54 = vector.broadcast %7 : i32 to vector<1x128xi32>
    %55 = arith.andi %53, %54 : vector<1x128xi32>
    %56 = vector.broadcast %5 : i32 to vector<1x128xi32>
    %57 = arith.muli %46, %56 : vector<1x128xi32>
    %58 = arith.addi %45, %57 : vector<1x128xi32>
    %59 = vector.broadcast %6 : i32 to vector<1x128xi32>
    %60 = arith.muli %47, %59 : vector<1x128xi32>
    %61 = arith.addi %58, %60 : vector<1x128xi32>
    %c0_i32_14 = arith.constant 0 : i32
    %62 = arith.cmpi eq, %3, %c0_i32_14 : i32
    %c1_i32_15 = arith.constant 1 : i32
    %63 = arith.select %62, %c1_i32_15, %3 : i32
    %64 = vector.broadcast %63 : i32 to vector<1x128xi32>
    %65 = arith.remsi %61, %64 : vector<1x128xi32>
    %c0_i32_16 = arith.constant 0 : i32
    %66 = vector.broadcast %c0_i32_16 : i32 to vector<1x128xi32>
    %67 = arith.cmpi ne, %65, %66 : vector<1x128xi32>
    %c0_i32_17 = arith.constant 0 : i32
    %68 = vector.broadcast %c0_i32_17 : i32 to vector<1x128xi32>
    %69 = arith.cmpi slt, %65, %68 : vector<1x128xi32>
    %c0_i32_18 = arith.constant 0 : i32
    %70 = arith.cmpi slt, %63, %c0_i32_18 : i32
    %71 = vector.broadcast %70 : i1 to vector<1x128xi1>
    %72 = vector.broadcast %71 : vector<1x128xi1> to vector<1x128xi1>
    %73 = arith.xori %69, %72 : vector<1x128xi1>
    %74 = arith.andi %73, %67 : vector<1x128xi1>
    %75 = vector.broadcast %63 : i32 to vector<1x128xi32>
    %76 = arith.addi %65, %75 : vector<1x128xi32>
    %77 = arith.select %74, %76, %65 : vector<1x128xi1>, vector<1x128xi32>
    %78 = arith.select %8, %55, %77 : vector<1x128xi32>
    %79 = vector.broadcast %78 : vector<1x128xi32> to vector<256x128xi32>
    %80 = arith.cmpi eq, %37, %79 : vector<256x128xi32>
    %cst_19 = arith.constant 1.000000e+00 : f32
    %cst_20 = arith.constant 0.000000e+00 : f32
    %81 = vector.broadcast %cst_19 : f32 to vector<256x128xf32>
    %82 = vector.broadcast %cst_20 : f32 to vector<256x128xf32>
    %83 = arith.select %80, %81, %82 : vector<256x128xi1>, vector<256x128xf32>
    %84 = vector.extract_strided_slice %36 {offsets = [0, 0], sizes = [2, 256], strides = [1, 1]} : vector<2x2048xf32> to vector<2x256xf32>
    %cst_21 = arith.constant dense<0.000000e+00> : vector<2x128xf32>
    %85 = tpu.matmul %84, %83, %cst_21 {dimension_numbers = #tpu.dot_dimension_numbers<[1], [0], [0], [1], [0, 0, 1, 1], [], []>} : vector<2x256xf32>, vector<256x128xf32>, vector<2x128xf32> -> vector<2x128xf32>
    %c0_i32_22 = arith.constant 0 : i32
    %86 = vector.broadcast %c0_i32_22 : i32 to vector<1x128xi32>
    %87 = arith.cmpi ne, %40, %86 : vector<1x128xi32>
    %88 = arith.select %87, %20, %24 : vector<1x128xi1>, vector<1x128xf32>
    %c0_i32_23 = arith.constant 0 : i32
    %89 = vector.broadcast %c0_i32_23 : i32 to vector<1x128xi32>
    %90 = arith.cmpi ne, %42, %89 : vector<1x128xi32>
    %91 = arith.select %90, %21, %26 : vector<1x128xi1>, vector<1x128xf32>
    %c0_i32_24 = arith.constant 0 : i32
    %92 = vector.broadcast %c0_i32_24 : i32 to vector<1x128xi32>
    %93 = arith.cmpi ne, %44, %92 : vector<1x128xi32>
    %94 = arith.select %93, %22, %28 : vector<1x128xi1>, vector<1x128xf32>
    %95 = arith.mulf %88, %91 : vector<1x128xf32>
    %96 = arith.mulf %95, %94 : vector<1x128xf32>
    %97 = vector.broadcast %96 : vector<1x128xf32> to vector<2x128xf32>
    %98 = arith.mulf %85, %97 : vector<2x128xf32>
    %99 = arith.addf %38, %98 : vector<2x128xf32>
    %c0_i32_25 = arith.constant 0 : i32
    %100 = vector.broadcast %c0_i32_25 : i32 to vector<1x128xi32>
    %101 = arith.xori %30, %100 : vector<1x128xi32>
    %c0_i32_26 = arith.constant 0 : i32
    %102 = vector.broadcast %c0_i32_26 : i32 to vector<1x128xi32>
    %103 = arith.xori %32, %102 : vector<1x128xi32>
    %c1_i32_27 = arith.constant 1 : i32
    %104 = vector.broadcast %c1_i32_27 : i32 to vector<1x128xi32>
    %105 = arith.xori %34, %104 : vector<1x128xi32>
    %106 = arith.addi %17, %101 : vector<1x128xi32>
    %107 = arith.addi %18, %103 : vector<1x128xi32>
    %108 = arith.addi %19, %105 : vector<1x128xi32>
    %c-1640531535_i32_28 = arith.constant -1640531535 : i32
    %109 = vector.broadcast %c-1640531535_i32_28 : i32 to vector<1x128xi32>
    %110 = arith.muli %107, %109 : vector<1x128xi32>
    %111 = arith.xori %106, %110 : vector<1x128xi32>
    %c805459861_i32_29 = arith.constant 805459861 : i32
    %112 = vector.broadcast %c805459861_i32_29 : i32 to vector<1x128xi32>
    %113 = arith.muli %108, %112 : vector<1x128xi32>
    %114 = arith.xori %111, %113 : vector<1x128xi32>
    %115 = vector.broadcast %7 : i32 to vector<1x128xi32>
    %116 = arith.andi %114, %115 : vector<1x128xi32>
    %117 = vector.broadcast %5 : i32 to vector<1x128xi32>
    %118 = arith.muli %107, %117 : vector<1x128xi32>
    %119 = arith.addi %106, %118 : vector<1x128xi32>
    %120 = vector.broadcast %6 : i32 to vector<1x128xi32>
    %121 = arith.muli %108, %120 : vector<1x128xi32>
    %122 = arith.addi %119, %121 : vector<1x128xi32>
    %c0_i32_30 = arith.constant 0 : i32
    %123 = arith.cmpi eq, %3, %c0_i32_30 : i32
    %c1_i32_31 = arith.constant 1 : i32
    %124 = arith.select %123, %c1_i32_31, %3 : i32
    %125 = vector.broadcast %124 : i32 to vector<1x128xi32>
    %126 = arith.remsi %122, %125 : vector<1x128xi32>
    %c0_i32_32 = arith.constant 0 : i32
    %127 = vector.broadcast %c0_i32_32 : i32 to vector<1x128xi32>
    %128 = arith.cmpi ne, %126, %127 : vector<1x128xi32>
    %c0_i32_33 = arith.constant 0 : i32
    %129 = vector.broadcast %c0_i32_33 : i32 to vector<1x128xi32>
    %130 = arith.cmpi slt, %126, %129 : vector<1x128xi32>
    %c0_i32_34 = arith.constant 0 : i32
    %131 = arith.cmpi slt, %124, %c0_i32_34 : i32
    %132 = vector.broadcast %131 : i1 to vector<1x128xi1>
    %133 = vector.broadcast %132 : vector<1x128xi1> to vector<1x128xi1>
    %134 = arith.xori %130, %133 : vector<1x128xi1>
    %135 = arith.andi %134, %128 : vector<1x128xi1>
    %136 = vector.broadcast %124 : i32 to vector<1x128xi32>
    %137 = arith.addi %126, %136 : vector<1x128xi32>
    %138 = arith.select %135, %137, %126 : vector<1x128xi1>, vector<1x128xi32>
    %139 = arith.select %8, %116, %138 : vector<1x128xi32>
    %140 = vector.broadcast %139 : vector<1x128xi32> to vector<256x128xi32>
    %141 = arith.cmpi eq, %37, %140 : vector<256x128xi32>
    %cst_35 = arith.constant 1.000000e+00 : f32
    %cst_36 = arith.constant 0.000000e+00 : f32
    %142 = vector.broadcast %cst_35 : f32 to vector<256x128xf32>
    %143 = vector.broadcast %cst_36 : f32 to vector<256x128xf32>
    %144 = arith.select %141, %142, %143 : vector<256x128xi1>, vector<256x128xf32>
    %145 = vector.extract_strided_slice %36 {offsets = [0, 256], sizes = [2, 256], strides = [1, 1]} : vector<2x2048xf32> to vector<2x256xf32>
    %cst_37 = arith.constant dense<0.000000e+00> : vector<2x128xf32>
    %146 = tpu.matmul %145, %144, %cst_37 {dimension_numbers = #tpu.dot_dimension_numbers<[1], [0], [0], [1], [0, 0, 1, 1], [], []>} : vector<2x256xf32>, vector<256x128xf32>, vector<2x128xf32> -> vector<2x128xf32>
    %c0_i32_38 = arith.constant 0 : i32
    %147 = vector.broadcast %c0_i32_38 : i32 to vector<1x128xi32>
    %148 = arith.cmpi ne, %101, %147 : vector<1x128xi32>
    %149 = arith.select %148, %20, %24 : vector<1x128xi1>, vector<1x128xf32>
    %c0_i32_39 = arith.constant 0 : i32
    %150 = vector.broadcast %c0_i32_39 : i32 to vector<1x128xi32>
    %151 = arith.cmpi ne, %103, %150 : vector<1x128xi32>
    %152 = arith.select %151, %21, %26 : vector<1x128xi1>, vector<1x128xf32>
    %c0_i32_40 = arith.constant 0 : i32
    %153 = vector.broadcast %c0_i32_40 : i32 to vector<1x128xi32>
    %154 = arith.cmpi ne, %105, %153 : vector<1x128xi32>
    %155 = arith.select %154, %22, %28 : vector<1x128xi1>, vector<1x128xf32>
    %156 = arith.mulf %149, %152 : vector<1x128xf32>
    %157 = arith.mulf %156, %155 : vector<1x128xf32>
    %158 = vector.broadcast %157 : vector<1x128xf32> to vector<2x128xf32>
    %159 = arith.mulf %146, %158 : vector<2x128xf32>
    %160 = arith.addf %99, %159 : vector<2x128xf32>
    %c0_i32_41 = arith.constant 0 : i32
    %161 = vector.broadcast %c0_i32_41 : i32 to vector<1x128xi32>
    %162 = arith.xori %30, %161 : vector<1x128xi32>
    %c1_i32_42 = arith.constant 1 : i32
    %163 = vector.broadcast %c1_i32_42 : i32 to vector<1x128xi32>
    %164 = arith.xori %32, %163 : vector<1x128xi32>
    %c0_i32_43 = arith.constant 0 : i32
    %165 = vector.broadcast %c0_i32_43 : i32 to vector<1x128xi32>
    %166 = arith.xori %34, %165 : vector<1x128xi32>
    %167 = arith.addi %17, %162 : vector<1x128xi32>
    %168 = arith.addi %18, %164 : vector<1x128xi32>
    %169 = arith.addi %19, %166 : vector<1x128xi32>
    %c-1640531535_i32_44 = arith.constant -1640531535 : i32
    %170 = vector.broadcast %c-1640531535_i32_44 : i32 to vector<1x128xi32>
    %171 = arith.muli %168, %170 : vector<1x128xi32>
    %172 = arith.xori %167, %171 : vector<1x128xi32>
    %c805459861_i32_45 = arith.constant 805459861 : i32
    %173 = vector.broadcast %c805459861_i32_45 : i32 to vector<1x128xi32>
    %174 = arith.muli %169, %173 : vector<1x128xi32>
    %175 = arith.xori %172, %174 : vector<1x128xi32>
    %176 = vector.broadcast %7 : i32 to vector<1x128xi32>
    %177 = arith.andi %175, %176 : vector<1x128xi32>
    %178 = vector.broadcast %5 : i32 to vector<1x128xi32>
    %179 = arith.muli %168, %178 : vector<1x128xi32>
    %180 = arith.addi %167, %179 : vector<1x128xi32>
    %181 = vector.broadcast %6 : i32 to vector<1x128xi32>
    %182 = arith.muli %169, %181 : vector<1x128xi32>
    %183 = arith.addi %180, %182 : vector<1x128xi32>
    %c0_i32_46 = arith.constant 0 : i32
    %184 = arith.cmpi eq, %3, %c0_i32_46 : i32
    %c1_i32_47 = arith.constant 1 : i32
    %185 = arith.select %184, %c1_i32_47, %3 : i32
    %186 = vector.broadcast %185 : i32 to vector<1x128xi32>
    %187 = arith.remsi %183, %186 : vector<1x128xi32>
    %c0_i32_48 = arith.constant 0 : i32
    %188 = vector.broadcast %c0_i32_48 : i32 to vector<1x128xi32>
    %189 = arith.cmpi ne, %187, %188 : vector<1x128xi32>
    %c0_i32_49 = arith.constant 0 : i32
    %190 = vector.broadcast %c0_i32_49 : i32 to vector<1x128xi32>
    %191 = arith.cmpi slt, %187, %190 : vector<1x128xi32>
    %c0_i32_50 = arith.constant 0 : i32
    %192 = arith.cmpi slt, %185, %c0_i32_50 : i32
    %193 = vector.broadcast %192 : i1 to vector<1x128xi1>
    %194 = vector.broadcast %193 : vector<1x128xi1> to vector<1x128xi1>
    %195 = arith.xori %191, %194 : vector<1x128xi1>
    %196 = arith.andi %195, %189 : vector<1x128xi1>
    %197 = vector.broadcast %185 : i32 to vector<1x128xi32>
    %198 = arith.addi %187, %197 : vector<1x128xi32>
    %199 = arith.select %196, %198, %187 : vector<1x128xi1>, vector<1x128xi32>
    %200 = arith.select %8, %177, %199 : vector<1x128xi32>
    %201 = vector.broadcast %200 : vector<1x128xi32> to vector<256x128xi32>
    %202 = arith.cmpi eq, %37, %201 : vector<256x128xi32>
    %cst_51 = arith.constant 1.000000e+00 : f32
    %cst_52 = arith.constant 0.000000e+00 : f32
    %203 = vector.broadcast %cst_51 : f32 to vector<256x128xf32>
    %204 = vector.broadcast %cst_52 : f32 to vector<256x128xf32>
    %205 = arith.select %202, %203, %204 : vector<256x128xi1>, vector<256x128xf32>
    %206 = vector.extract_strided_slice %36 {offsets = [0, 512], sizes = [2, 256], strides = [1, 1]} : vector<2x2048xf32> to vector<2x256xf32>
    %cst_53 = arith.constant dense<0.000000e+00> : vector<2x128xf32>
    %207 = tpu.matmul %206, %205, %cst_53 {dimension_numbers = #tpu.dot_dimension_numbers<[1], [0], [0], [1], [0, 0, 1, 1], [], []>} : vector<2x256xf32>, vector<256x128xf32>, vector<2x128xf32> -> vector<2x128xf32>
    %c0_i32_54 = arith.constant 0 : i32
    %208 = vector.broadcast %c0_i32_54 : i32 to vector<1x128xi32>
    %209 = arith.cmpi ne, %162, %208 : vector<1x128xi32>
    %210 = arith.select %209, %20, %24 : vector<1x128xi1>, vector<1x128xf32>
    %c0_i32_55 = arith.constant 0 : i32
    %211 = vector.broadcast %c0_i32_55 : i32 to vector<1x128xi32>
    %212 = arith.cmpi ne, %164, %211 : vector<1x128xi32>
    %213 = arith.select %212, %21, %26 : vector<1x128xi1>, vector<1x128xf32>
    %c0_i32_56 = arith.constant 0 : i32
    %214 = vector.broadcast %c0_i32_56 : i32 to vector<1x128xi32>
    %215 = arith.cmpi ne, %166, %214 : vector<1x128xi32>
    %216 = arith.select %215, %22, %28 : vector<1x128xi1>, vector<1x128xf32>
    %217 = arith.mulf %210, %213 : vector<1x128xf32>
    %218 = arith.mulf %217, %216 : vector<1x128xf32>
    %219 = vector.broadcast %218 : vector<1x128xf32> to vector<2x128xf32>
    %220 = arith.mulf %207, %219 : vector<2x128xf32>
    %221 = arith.addf %160, %220 : vector<2x128xf32>
    %c0_i32_57 = arith.constant 0 : i32
    %222 = vector.broadcast %c0_i32_57 : i32 to vector<1x128xi32>
    %223 = arith.xori %30, %222 : vector<1x128xi32>
    %c1_i32_58 = arith.constant 1 : i32
    %224 = vector.broadcast %c1_i32_58 : i32 to vector<1x128xi32>
    %225 = arith.xori %32, %224 : vector<1x128xi32>
    %c1_i32_59 = arith.constant 1 : i32
    %226 = vector.broadcast %c1_i32_59 : i32 to vector<1x128xi32>
    %227 = arith.xori %34, %226 : vector<1x128xi32>
    %228 = arith.addi %17, %223 : vector<1x128xi32>
    %229 = arith.addi %18, %225 : vector<1x128xi32>
    %230 = arith.addi %19, %227 : vector<1x128xi32>
    %c-1640531535_i32_60 = arith.constant -1640531535 : i32
    %231 = vector.broadcast %c-1640531535_i32_60 : i32 to vector<1x128xi32>
    %232 = arith.muli %229, %231 : vector<1x128xi32>
    %233 = arith.xori %228, %232 : vector<1x128xi32>
    %c805459861_i32_61 = arith.constant 805459861 : i32
    %234 = vector.broadcast %c805459861_i32_61 : i32 to vector<1x128xi32>
    %235 = arith.muli %230, %234 : vector<1x128xi32>
    %236 = arith.xori %233, %235 : vector<1x128xi32>
    %237 = vector.broadcast %7 : i32 to vector<1x128xi32>
    %238 = arith.andi %236, %237 : vector<1x128xi32>
    %239 = vector.broadcast %5 : i32 to vector<1x128xi32>
    %240 = arith.muli %229, %239 : vector<1x128xi32>
    %241 = arith.addi %228, %240 : vector<1x128xi32>
    %242 = vector.broadcast %6 : i32 to vector<1x128xi32>
    %243 = arith.muli %230, %242 : vector<1x128xi32>
    %244 = arith.addi %241, %243 : vector<1x128xi32>
    %c0_i32_62 = arith.constant 0 : i32
    %245 = arith.cmpi eq, %3, %c0_i32_62 : i32
    %c1_i32_63 = arith.constant 1 : i32
    %246 = arith.select %245, %c1_i32_63, %3 : i32
    %247 = vector.broadcast %246 : i32 to vector<1x128xi32>
    %248 = arith.remsi %244, %247 : vector<1x128xi32>
    %c0_i32_64 = arith.constant 0 : i32
    %249 = vector.broadcast %c0_i32_64 : i32 to vector<1x128xi32>
    %250 = arith.cmpi ne, %248, %249 : vector<1x128xi32>
    %c0_i32_65 = arith.constant 0 : i32
    %251 = vector.broadcast %c0_i32_65 : i32 to vector<1x128xi32>
    %252 = arith.cmpi slt, %248, %251 : vector<1x128xi32>
    %c0_i32_66 = arith.constant 0 : i32
    %253 = arith.cmpi slt, %246, %c0_i32_66 : i32
    %254 = vector.broadcast %253 : i1 to vector<1x128xi1>
    %255 = vector.broadcast %254 : vector<1x128xi1> to vector<1x128xi1>
    %256 = arith.xori %252, %255 : vector<1x128xi1>
    %257 = arith.andi %256, %250 : vector<1x128xi1>
    %258 = vector.broadcast %246 : i32 to vector<1x128xi32>
    %259 = arith.addi %248, %258 : vector<1x128xi32>
    %260 = arith.select %257, %259, %248 : vector<1x128xi1>, vector<1x128xi32>
    %261 = arith.select %8, %238, %260 : vector<1x128xi32>
    %262 = vector.broadcast %261 : vector<1x128xi32> to vector<256x128xi32>
    %263 = arith.cmpi eq, %37, %262 : vector<256x128xi32>
    %cst_67 = arith.constant 1.000000e+00 : f32
    %cst_68 = arith.constant 0.000000e+00 : f32
    %264 = vector.broadcast %cst_67 : f32 to vector<256x128xf32>
    %265 = vector.broadcast %cst_68 : f32 to vector<256x128xf32>
    %266 = arith.select %263, %264, %265 : vector<256x128xi1>, vector<256x128xf32>
    %267 = vector.extract_strided_slice %36 {offsets = [0, 768], sizes = [2, 256], strides = [1, 1]} : vector<2x2048xf32> to vector<2x256xf32>
    %cst_69 = arith.constant dense<0.000000e+00> : vector<2x128xf32>
    %268 = tpu.matmul %267, %266, %cst_69 {dimension_numbers = #tpu.dot_dimension_numbers<[1], [0], [0], [1], [0, 0, 1, 1], [], []>} : vector<2x256xf32>, vector<256x128xf32>, vector<2x128xf32> -> vector<2x128xf32>
    %c0_i32_70 = arith.constant 0 : i32
    %269 = vector.broadcast %c0_i32_70 : i32 to vector<1x128xi32>
    %270 = arith.cmpi ne, %223, %269 : vector<1x128xi32>
    %271 = arith.select %270, %20, %24 : vector<1x128xi1>, vector<1x128xf32>
    %c0_i32_71 = arith.constant 0 : i32
    %272 = vector.broadcast %c0_i32_71 : i32 to vector<1x128xi32>
    %273 = arith.cmpi ne, %225, %272 : vector<1x128xi32>
    %274 = arith.select %273, %21, %26 : vector<1x128xi1>, vector<1x128xf32>
    %c0_i32_72 = arith.constant 0 : i32
    %275 = vector.broadcast %c0_i32_72 : i32 to vector<1x128xi32>
    %276 = arith.cmpi ne, %227, %275 : vector<1x128xi32>
    %277 = arith.select %276, %22, %28 : vector<1x128xi1>, vector<1x128xf32>
    %278 = arith.mulf %271, %274 : vector<1x128xf32>
    %279 = arith.mulf %278, %277 : vector<1x128xf32>
    %280 = vector.broadcast %279 : vector<1x128xf32> to vector<2x128xf32>
    %281 = arith.mulf %268, %280 : vector<2x128xf32>
    %282 = arith.addf %221, %281 : vector<2x128xf32>
    %c1_i32_73 = arith.constant 1 : i32
    %283 = vector.broadcast %c1_i32_73 : i32 to vector<1x128xi32>
    %284 = arith.xori %30, %283 : vector<1x128xi32>
    %c0_i32_74 = arith.constant 0 : i32
    %285 = vector.broadcast %c0_i32_74 : i32 to vector<1x128xi32>
    %286 = arith.xori %32, %285 : vector<1x128xi32>
    %c0_i32_75 = arith.constant 0 : i32
    %287 = vector.broadcast %c0_i32_75 : i32 to vector<1x128xi32>
    %288 = arith.xori %34, %287 : vector<1x128xi32>
    %289 = arith.addi %17, %284 : vector<1x128xi32>
    %290 = arith.addi %18, %286 : vector<1x128xi32>
    %291 = arith.addi %19, %288 : vector<1x128xi32>
    %c-1640531535_i32_76 = arith.constant -1640531535 : i32
    %292 = vector.broadcast %c-1640531535_i32_76 : i32 to vector<1x128xi32>
    %293 = arith.muli %290, %292 : vector<1x128xi32>
    %294 = arith.xori %289, %293 : vector<1x128xi32>
    %c805459861_i32_77 = arith.constant 805459861 : i32
    %295 = vector.broadcast %c805459861_i32_77 : i32 to vector<1x128xi32>
    %296 = arith.muli %291, %295 : vector<1x128xi32>
    %297 = arith.xori %294, %296 : vector<1x128xi32>
    %298 = vector.broadcast %7 : i32 to vector<1x128xi32>
    %299 = arith.andi %297, %298 : vector<1x128xi32>
    %300 = vector.broadcast %5 : i32 to vector<1x128xi32>
    %301 = arith.muli %290, %300 : vector<1x128xi32>
    %302 = arith.addi %289, %301 : vector<1x128xi32>
    %303 = vector.broadcast %6 : i32 to vector<1x128xi32>
    %304 = arith.muli %291, %303 : vector<1x128xi32>
    %305 = arith.addi %302, %304 : vector<1x128xi32>
    %c0_i32_78 = arith.constant 0 : i32
    %306 = arith.cmpi eq, %3, %c0_i32_78 : i32
    %c1_i32_79 = arith.constant 1 : i32
    %307 = arith.select %306, %c1_i32_79, %3 : i32
    %308 = vector.broadcast %307 : i32 to vector<1x128xi32>
    %309 = arith.remsi %305, %308 : vector<1x128xi32>
    %c0_i32_80 = arith.constant 0 : i32
    %310 = vector.broadcast %c0_i32_80 : i32 to vector<1x128xi32>
    %311 = arith.cmpi ne, %309, %310 : vector<1x128xi32>
    %c0_i32_81 = arith.constant 0 : i32
    %312 = vector.broadcast %c0_i32_81 : i32 to vector<1x128xi32>
    %313 = arith.cmpi slt, %309, %312 : vector<1x128xi32>
    %c0_i32_82 = arith.constant 0 : i32
    %314 = arith.cmpi slt, %307, %c0_i32_82 : i32
    %315 = vector.broadcast %314 : i1 to vector<1x128xi1>
    %316 = vector.broadcast %315 : vector<1x128xi1> to vector<1x128xi1>
    %317 = arith.xori %313, %316 : vector<1x128xi1>
    %318 = arith.andi %317, %311 : vector<1x128xi1>
    %319 = vector.broadcast %307 : i32 to vector<1x128xi32>
    %320 = arith.addi %309, %319 : vector<1x128xi32>
    %321 = arith.select %318, %320, %309 : vector<1x128xi1>, vector<1x128xi32>
    %322 = arith.select %8, %299, %321 : vector<1x128xi32>
    %323 = vector.broadcast %322 : vector<1x128xi32> to vector<256x128xi32>
    %324 = arith.cmpi eq, %37, %323 : vector<256x128xi32>
    %cst_83 = arith.constant 1.000000e+00 : f32
    %cst_84 = arith.constant 0.000000e+00 : f32
    %325 = vector.broadcast %cst_83 : f32 to vector<256x128xf32>
    %326 = vector.broadcast %cst_84 : f32 to vector<256x128xf32>
    %327 = arith.select %324, %325, %326 : vector<256x128xi1>, vector<256x128xf32>
    %328 = vector.extract_strided_slice %36 {offsets = [0, 1024], sizes = [2, 256], strides = [1, 1]} : vector<2x2048xf32> to vector<2x256xf32>
    %cst_85 = arith.constant dense<0.000000e+00> : vector<2x128xf32>
    %329 = tpu.matmul %328, %327, %cst_85 {dimension_numbers = #tpu.dot_dimension_numbers<[1], [0], [0], [1], [0, 0, 1, 1], [], []>} : vector<2x256xf32>, vector<256x128xf32>, vector<2x128xf32> -> vector<2x128xf32>
    %c0_i32_86 = arith.constant 0 : i32
    %330 = vector.broadcast %c0_i32_86 : i32 to vector<1x128xi32>
    %331 = arith.cmpi ne, %284, %330 : vector<1x128xi32>
    %332 = arith.select %331, %20, %24 : vector<1x128xi1>, vector<1x128xf32>
    %c0_i32_87 = arith.constant 0 : i32
    %333 = vector.broadcast %c0_i32_87 : i32 to vector<1x128xi32>
    %334 = arith.cmpi ne, %286, %333 : vector<1x128xi32>
    %335 = arith.select %334, %21, %26 : vector<1x128xi1>, vector<1x128xf32>
    %c0_i32_88 = arith.constant 0 : i32
    %336 = vector.broadcast %c0_i32_88 : i32 to vector<1x128xi32>
    %337 = arith.cmpi ne, %288, %336 : vector<1x128xi32>
    %338 = arith.select %337, %22, %28 : vector<1x128xi1>, vector<1x128xf32>
    %339 = arith.mulf %332, %335 : vector<1x128xf32>
    %340 = arith.mulf %339, %338 : vector<1x128xf32>
    %341 = vector.broadcast %340 : vector<1x128xf32> to vector<2x128xf32>
    %342 = arith.mulf %329, %341 : vector<2x128xf32>
    %343 = arith.addf %282, %342 : vector<2x128xf32>
    %c1_i32_89 = arith.constant 1 : i32
    %344 = vector.broadcast %c1_i32_89 : i32 to vector<1x128xi32>
    %345 = arith.xori %30, %344 : vector<1x128xi32>
    %c0_i32_90 = arith.constant 0 : i32
    %346 = vector.broadcast %c0_i32_90 : i32 to vector<1x128xi32>
    %347 = arith.xori %32, %346 : vector<1x128xi32>
    %c1_i32_91 = arith.constant 1 : i32
    %348 = vector.broadcast %c1_i32_91 : i32 to vector<1x128xi32>
    %349 = arith.xori %34, %348 : vector<1x128xi32>
    %350 = arith.addi %17, %345 : vector<1x128xi32>
    %351 = arith.addi %18, %347 : vector<1x128xi32>
    %352 = arith.addi %19, %349 : vector<1x128xi32>
    %c-1640531535_i32_92 = arith.constant -1640531535 : i32
    %353 = vector.broadcast %c-1640531535_i32_92 : i32 to vector<1x128xi32>
    %354 = arith.muli %351, %353 : vector<1x128xi32>
    %355 = arith.xori %350, %354 : vector<1x128xi32>
    %c805459861_i32_93 = arith.constant 805459861 : i32
    %356 = vector.broadcast %c805459861_i32_93 : i32 to vector<1x128xi32>
    %357 = arith.muli %352, %356 : vector<1x128xi32>
    %358 = arith.xori %355, %357 : vector<1x128xi32>
    %359 = vector.broadcast %7 : i32 to vector<1x128xi32>
    %360 = arith.andi %358, %359 : vector<1x128xi32>
    %361 = vector.broadcast %5 : i32 to vector<1x128xi32>
    %362 = arith.muli %351, %361 : vector<1x128xi32>
    %363 = arith.addi %350, %362 : vector<1x128xi32>
    %364 = vector.broadcast %6 : i32 to vector<1x128xi32>
    %365 = arith.muli %352, %364 : vector<1x128xi32>
    %366 = arith.addi %363, %365 : vector<1x128xi32>
    %c0_i32_94 = arith.constant 0 : i32
    %367 = arith.cmpi eq, %3, %c0_i32_94 : i32
    %c1_i32_95 = arith.constant 1 : i32
    %368 = arith.select %367, %c1_i32_95, %3 : i32
    %369 = vector.broadcast %368 : i32 to vector<1x128xi32>
    %370 = arith.remsi %366, %369 : vector<1x128xi32>
    %c0_i32_96 = arith.constant 0 : i32
    %371 = vector.broadcast %c0_i32_96 : i32 to vector<1x128xi32>
    %372 = arith.cmpi ne, %370, %371 : vector<1x128xi32>
    %c0_i32_97 = arith.constant 0 : i32
    %373 = vector.broadcast %c0_i32_97 : i32 to vector<1x128xi32>
    %374 = arith.cmpi slt, %370, %373 : vector<1x128xi32>
    %c0_i32_98 = arith.constant 0 : i32
    %375 = arith.cmpi slt, %368, %c0_i32_98 : i32
    %376 = vector.broadcast %375 : i1 to vector<1x128xi1>
    %377 = vector.broadcast %376 : vector<1x128xi1> to vector<1x128xi1>
    %378 = arith.xori %374, %377 : vector<1x128xi1>
    %379 = arith.andi %378, %372 : vector<1x128xi1>
    %380 = vector.broadcast %368 : i32 to vector<1x128xi32>
    %381 = arith.addi %370, %380 : vector<1x128xi32>
    %382 = arith.select %379, %381, %370 : vector<1x128xi1>, vector<1x128xi32>
    %383 = arith.select %8, %360, %382 : vector<1x128xi32>
    %384 = vector.broadcast %383 : vector<1x128xi32> to vector<256x128xi32>
    %385 = arith.cmpi eq, %37, %384 : vector<256x128xi32>
    %cst_99 = arith.constant 1.000000e+00 : f32
    %cst_100 = arith.constant 0.000000e+00 : f32
    %386 = vector.broadcast %cst_99 : f32 to vector<256x128xf32>
    %387 = vector.broadcast %cst_100 : f32 to vector<256x128xf32>
    %388 = arith.select %385, %386, %387 : vector<256x128xi1>, vector<256x128xf32>
    %389 = vector.extract_strided_slice %36 {offsets = [0, 1280], sizes = [2, 256], strides = [1, 1]} : vector<2x2048xf32> to vector<2x256xf32>
    %cst_101 = arith.constant dense<0.000000e+00> : vector<2x128xf32>
    %390 = tpu.matmul %389, %388, %cst_101 {dimension_numbers = #tpu.dot_dimension_numbers<[1], [0], [0], [1], [0, 0, 1, 1], [], []>} : vector<2x256xf32>, vector<256x128xf32>, vector<2x128xf32> -> vector<2x128xf32>
    %c0_i32_102 = arith.constant 0 : i32
    %391 = vector.broadcast %c0_i32_102 : i32 to vector<1x128xi32>
    %392 = arith.cmpi ne, %345, %391 : vector<1x128xi32>
    %393 = arith.select %392, %20, %24 : vector<1x128xi1>, vector<1x128xf32>
    %c0_i32_103 = arith.constant 0 : i32
    %394 = vector.broadcast %c0_i32_103 : i32 to vector<1x128xi32>
    %395 = arith.cmpi ne, %347, %394 : vector<1x128xi32>
    %396 = arith.select %395, %21, %26 : vector<1x128xi1>, vector<1x128xf32>
    %c0_i32_104 = arith.constant 0 : i32
    %397 = vector.broadcast %c0_i32_104 : i32 to vector<1x128xi32>
    %398 = arith.cmpi ne, %349, %397 : vector<1x128xi32>
    %399 = arith.select %398, %22, %28 : vector<1x128xi1>, vector<1x128xf32>
    %400 = arith.mulf %393, %396 : vector<1x128xf32>
    %401 = arith.mulf %400, %399 : vector<1x128xf32>
    %402 = vector.broadcast %401 : vector<1x128xf32> to vector<2x128xf32>
    %403 = arith.mulf %390, %402 : vector<2x128xf32>
    %404 = arith.addf %343, %403 : vector<2x128xf32>
    %c1_i32_105 = arith.constant 1 : i32
    %405 = vector.broadcast %c1_i32_105 : i32 to vector<1x128xi32>
    %406 = arith.xori %30, %405 : vector<1x128xi32>
    %c1_i32_106 = arith.constant 1 : i32
    %407 = vector.broadcast %c1_i32_106 : i32 to vector<1x128xi32>
    %408 = arith.xori %32, %407 : vector<1x128xi32>
    %c0_i32_107 = arith.constant 0 : i32
    %409 = vector.broadcast %c0_i32_107 : i32 to vector<1x128xi32>
    %410 = arith.xori %34, %409 : vector<1x128xi32>
    %411 = arith.addi %17, %406 : vector<1x128xi32>
    %412 = arith.addi %18, %408 : vector<1x128xi32>
    %413 = arith.addi %19, %410 : vector<1x128xi32>
    %c-1640531535_i32_108 = arith.constant -1640531535 : i32
    %414 = vector.broadcast %c-1640531535_i32_108 : i32 to vector<1x128xi32>
    %415 = arith.muli %412, %414 : vector<1x128xi32>
    %416 = arith.xori %411, %415 : vector<1x128xi32>
    %c805459861_i32_109 = arith.constant 805459861 : i32
    %417 = vector.broadcast %c805459861_i32_109 : i32 to vector<1x128xi32>
    %418 = arith.muli %413, %417 : vector<1x128xi32>
    %419 = arith.xori %416, %418 : vector<1x128xi32>
    %420 = vector.broadcast %7 : i32 to vector<1x128xi32>
    %421 = arith.andi %419, %420 : vector<1x128xi32>
    %422 = vector.broadcast %5 : i32 to vector<1x128xi32>
    %423 = arith.muli %412, %422 : vector<1x128xi32>
    %424 = arith.addi %411, %423 : vector<1x128xi32>
    %425 = vector.broadcast %6 : i32 to vector<1x128xi32>
    %426 = arith.muli %413, %425 : vector<1x128xi32>
    %427 = arith.addi %424, %426 : vector<1x128xi32>
    %c0_i32_110 = arith.constant 0 : i32
    %428 = arith.cmpi eq, %3, %c0_i32_110 : i32
    %c1_i32_111 = arith.constant 1 : i32
    %429 = arith.select %428, %c1_i32_111, %3 : i32
    %430 = vector.broadcast %429 : i32 to vector<1x128xi32>
    %431 = arith.remsi %427, %430 : vector<1x128xi32>
    %c0_i32_112 = arith.constant 0 : i32
    %432 = vector.broadcast %c0_i32_112 : i32 to vector<1x128xi32>
    %433 = arith.cmpi ne, %431, %432 : vector<1x128xi32>
    %c0_i32_113 = arith.constant 0 : i32
    %434 = vector.broadcast %c0_i32_113 : i32 to vector<1x128xi32>
    %435 = arith.cmpi slt, %431, %434 : vector<1x128xi32>
    %c0_i32_114 = arith.constant 0 : i32
    %436 = arith.cmpi slt, %429, %c0_i32_114 : i32
    %437 = vector.broadcast %436 : i1 to vector<1x128xi1>
    %438 = vector.broadcast %437 : vector<1x128xi1> to vector<1x128xi1>
    %439 = arith.xori %435, %438 : vector<1x128xi1>
    %440 = arith.andi %439, %433 : vector<1x128xi1>
    %441 = vector.broadcast %429 : i32 to vector<1x128xi32>
    %442 = arith.addi %431, %441 : vector<1x128xi32>
    %443 = arith.select %440, %442, %431 : vector<1x128xi1>, vector<1x128xi32>
    %444 = arith.select %8, %421, %443 : vector<1x128xi32>
    %445 = vector.broadcast %444 : vector<1x128xi32> to vector<256x128xi32>
    %446 = arith.cmpi eq, %37, %445 : vector<256x128xi32>
    %cst_115 = arith.constant 1.000000e+00 : f32
    %cst_116 = arith.constant 0.000000e+00 : f32
    %447 = vector.broadcast %cst_115 : f32 to vector<256x128xf32>
    %448 = vector.broadcast %cst_116 : f32 to vector<256x128xf32>
    %449 = arith.select %446, %447, %448 : vector<256x128xi1>, vector<256x128xf32>
    %450 = vector.extract_strided_slice %36 {offsets = [0, 1536], sizes = [2, 256], strides = [1, 1]} : vector<2x2048xf32> to vector<2x256xf32>
    %cst_117 = arith.constant dense<0.000000e+00> : vector<2x128xf32>
    %451 = tpu.matmul %450, %449, %cst_117 {dimension_numbers = #tpu.dot_dimension_numbers<[1], [0], [0], [1], [0, 0, 1, 1], [], []>} : vector<2x256xf32>, vector<256x128xf32>, vector<2x128xf32> -> vector<2x128xf32>
    %c0_i32_118 = arith.constant 0 : i32
    %452 = vector.broadcast %c0_i32_118 : i32 to vector<1x128xi32>
    %453 = arith.cmpi ne, %406, %452 : vector<1x128xi32>
    %454 = arith.select %453, %20, %24 : vector<1x128xi1>, vector<1x128xf32>
    %c0_i32_119 = arith.constant 0 : i32
    %455 = vector.broadcast %c0_i32_119 : i32 to vector<1x128xi32>
    %456 = arith.cmpi ne, %408, %455 : vector<1x128xi32>
    %457 = arith.select %456, %21, %26 : vector<1x128xi1>, vector<1x128xf32>
    %c0_i32_120 = arith.constant 0 : i32
    %458 = vector.broadcast %c0_i32_120 : i32 to vector<1x128xi32>
    %459 = arith.cmpi ne, %410, %458 : vector<1x128xi32>
    %460 = arith.select %459, %22, %28 : vector<1x128xi1>, vector<1x128xf32>
    %461 = arith.mulf %454, %457 : vector<1x128xf32>
    %462 = arith.mulf %461, %460 : vector<1x128xf32>
    %463 = vector.broadcast %462 : vector<1x128xf32> to vector<2x128xf32>
    %464 = arith.mulf %451, %463 : vector<2x128xf32>
    %465 = arith.addf %404, %464 : vector<2x128xf32>
    %c1_i32_121 = arith.constant 1 : i32
    %466 = vector.broadcast %c1_i32_121 : i32 to vector<1x128xi32>
    %467 = arith.xori %30, %466 : vector<1x128xi32>
    %c1_i32_122 = arith.constant 1 : i32
    %468 = vector.broadcast %c1_i32_122 : i32 to vector<1x128xi32>
    %469 = arith.xori %32, %468 : vector<1x128xi32>
    %c1_i32_123 = arith.constant 1 : i32
    %470 = vector.broadcast %c1_i32_123 : i32 to vector<1x128xi32>
    %471 = arith.xori %34, %470 : vector<1x128xi32>
    %472 = arith.addi %17, %467 : vector<1x128xi32>
    %473 = arith.addi %18, %469 : vector<1x128xi32>
    %474 = arith.addi %19, %471 : vector<1x128xi32>
    %c-1640531535_i32_124 = arith.constant -1640531535 : i32
    %475 = vector.broadcast %c-1640531535_i32_124 : i32 to vector<1x128xi32>
    %476 = arith.muli %473, %475 : vector<1x128xi32>
    %477 = arith.xori %472, %476 : vector<1x128xi32>
    %c805459861_i32_125 = arith.constant 805459861 : i32
    %478 = vector.broadcast %c805459861_i32_125 : i32 to vector<1x128xi32>
    %479 = arith.muli %474, %478 : vector<1x128xi32>
    %480 = arith.xori %477, %479 : vector<1x128xi32>
    %481 = vector.broadcast %7 : i32 to vector<1x128xi32>
    %482 = arith.andi %480, %481 : vector<1x128xi32>
    %483 = vector.broadcast %5 : i32 to vector<1x128xi32>
    %484 = arith.muli %473, %483 : vector<1x128xi32>
    %485 = arith.addi %472, %484 : vector<1x128xi32>
    %486 = vector.broadcast %6 : i32 to vector<1x128xi32>
    %487 = arith.muli %474, %486 : vector<1x128xi32>
    %488 = arith.addi %485, %487 : vector<1x128xi32>
    %c0_i32_126 = arith.constant 0 : i32
    %489 = arith.cmpi eq, %3, %c0_i32_126 : i32
    %c1_i32_127 = arith.constant 1 : i32
    %490 = arith.select %489, %c1_i32_127, %3 : i32
    %491 = vector.broadcast %490 : i32 to vector<1x128xi32>
    %492 = arith.remsi %488, %491 : vector<1x128xi32>
    %c0_i32_128 = arith.constant 0 : i32
    %493 = vector.broadcast %c0_i32_128 : i32 to vector<1x128xi32>
    %494 = arith.cmpi ne, %492, %493 : vector<1x128xi32>
    %c0_i32_129 = arith.constant 0 : i32
    %495 = vector.broadcast %c0_i32_129 : i32 to vector<1x128xi32>
    %496 = arith.cmpi slt, %492, %495 : vector<1x128xi32>
    %c0_i32_130 = arith.constant 0 : i32
    %497 = arith.cmpi slt, %490, %c0_i32_130 : i32
    %498 = vector.broadcast %497 : i1 to vector<1x128xi1>
    %499 = vector.broadcast %498 : vector<1x128xi1> to vector<1x128xi1>
    %500 = arith.xori %496, %499 : vector<1x128xi1>
    %501 = arith.andi %500, %494 : vector<1x128xi1>
    %502 = vector.broadcast %490 : i32 to vector<1x128xi32>
    %503 = arith.addi %492, %502 : vector<1x128xi32>
    %504 = arith.select %501, %503, %492 : vector<1x128xi1>, vector<1x128xi32>
    %505 = arith.select %8, %482, %504 : vector<1x128xi32>
    %506 = vector.broadcast %505 : vector<1x128xi32> to vector<256x128xi32>
    %507 = arith.cmpi eq, %37, %506 : vector<256x128xi32>
    %cst_131 = arith.constant 1.000000e+00 : f32
    %cst_132 = arith.constant 0.000000e+00 : f32
    %508 = vector.broadcast %cst_131 : f32 to vector<256x128xf32>
    %509 = vector.broadcast %cst_132 : f32 to vector<256x128xf32>
    %510 = arith.select %507, %508, %509 : vector<256x128xi1>, vector<256x128xf32>
    %511 = vector.extract_strided_slice %36 {offsets = [0, 1792], sizes = [2, 256], strides = [1, 1]} : vector<2x2048xf32> to vector<2x256xf32>
    %cst_133 = arith.constant dense<0.000000e+00> : vector<2x128xf32>
    %512 = tpu.matmul %511, %510, %cst_133 {dimension_numbers = #tpu.dot_dimension_numbers<[1], [0], [0], [1], [0, 0, 1, 1], [], []>} : vector<2x256xf32>, vector<256x128xf32>, vector<2x128xf32> -> vector<2x128xf32>
    %c0_i32_134 = arith.constant 0 : i32
    %513 = vector.broadcast %c0_i32_134 : i32 to vector<1x128xi32>
    %514 = arith.cmpi ne, %467, %513 : vector<1x128xi32>
    %515 = arith.select %514, %20, %24 : vector<1x128xi1>, vector<1x128xf32>
    %c0_i32_135 = arith.constant 0 : i32
    %516 = vector.broadcast %c0_i32_135 : i32 to vector<1x128xi32>
    %517 = arith.cmpi ne, %469, %516 : vector<1x128xi32>
    %518 = arith.select %517, %21, %26 : vector<1x128xi1>, vector<1x128xf32>
    %c0_i32_136 = arith.constant 0 : i32
    %519 = vector.broadcast %c0_i32_136 : i32 to vector<1x128xi32>
    %520 = arith.cmpi ne, %471, %519 : vector<1x128xi32>
    %521 = arith.select %520, %22, %28 : vector<1x128xi1>, vector<1x128xf32>
    %522 = arith.mulf %515, %518 : vector<1x128xf32>
    %523 = arith.mulf %522, %521 : vector<1x128xf32>
    %524 = vector.broadcast %523 : vector<1x128xf32> to vector<2x128xf32>
    %525 = arith.mulf %512, %524 : vector<2x128xf32>
    %526 = arith.addf %465, %525 : vector<2x128xf32>
    %c0_137 = arith.constant 0 : index
    %c0_138 = arith.constant 0 : index
    %c0_139 = arith.constant 0 : index
    %527 = vector.load %arg7[%c0_137, %c0_138, %c0_139] : memref<1x2x128xf32, #tpu.memory_space<vmem>>, vector<1x2x128xf32>
    %528 = vector.shape_cast %527 : vector<1x2x128xf32> to vector<2x128xf32>
    %529 = vector.shape_cast %526 : vector<2x128xf32> to vector<1x2x128xf32>
    tpu.vector_store %arg7[%c0_137, %c0_138, %c0_139], %529 {strides = array<i32>} : memref<1x2x128xf32, #tpu.memory_space<vmem>>, vector<1x2x128xf32>,
    return
  }
  func.func @transform_0(%arg0: i32, %arg1: i32) -> i32 {
    %c0_i32 = arith.constant 0 : i32
    %c0_i32_0 = arith.constant 0 : i32
    return %c0_i32 : i32
  }
  func.func @transform_1(%arg0: i32, %arg1: i32) -> i32 {
    %c0_i32 = arith.constant 0 : i32
    %c0_i32_0 = arith.constant 0 : i32
    return %c0_i32 : i32
  }
  func.func @transform_2(%arg0: i32, %arg1: i32) -> i32 {
    %c0_i32 = arith.constant 0 : i32
    %c0_i32_0 = arith.constant 0 : i32
    return %c0_i32 : i32
  }
  func.func @transform_3(%arg0: i32, %arg1: i32) -> (i32, i32) {
    %c0_i32 = arith.constant 0 : i32
    %c0_i32_0 = arith.constant 0 : i32
    return %c0_i32, %arg1 : i32, i32
  }
  func.func @transform_4(%arg0: i32, %arg1: i32) -> (i32, i32, i32) {
    %c0_i32 = arith.constant 0 : i32
    %c0_i32_0 = arith.constant 0 : i32
    %c0_i32_1 = arith.constant 0 : i32
    return %arg0, %c0_i32, %c0_i32_0 : i32, i32, i32
  }
  func.func @transform_5(%arg0: i32, %arg1: i32) -> (i32, i32, i32) {
    %c0_i32 = arith.constant 0 : i32
    %c0_i32_0 = arith.constant 0 : i32
    return %arg0, %c0_i32, %arg1 : i32, i32, i32
  }
}

</mosaic_0001>

<llo_original>
// kernel: tpu_custom_call.1
$region0: #{tpu_custom_call.1}
  #allocation0 [shape = 'u32[]', space=smem, size = 0x4, offset = 0x4, fixed_abs, tag = 'smem constant byte address 0x4 - core index']
  #allocation1 [shape = 'u32[72,128]{1,0:T(1,128)}', space=vmem, size = 0x9000, scoped, tag = 'internal scratch']
  %s0 = inlined_call_operand.hbm [shape: f32[4], index: 0, kind: input, shape index: {}]
  %s1 = inlined_call_operand.hbm [shape: s32[4], index: 1, kind: input, shape index: {}]
  %s2 = inlined_call_operand.vmem [shape: s32[4], index: 2, kind: input, shape index: {}]
  %s3 = inlined_call_operand.hbm [shape: f32[3,256], index: 3, kind: input, shape index: {}]
  %s4 = inlined_call_operand.hbm [shape: f32[4,2,2048], index: 4, kind: input, shape index: {}]
  %s5 = inlined_call_operand.hbm [shape: f32[4,2,256], index: 5, kind: output, shape index: {}]
  %s6 = sld [smem:[#allocation0]]
  $region73: #{tpu_custom_call.1} parent=0
    _
  %s8 = ssub.s32 1, %s6
  %s9 = scalar_select 0, %s8, %s6
  $region1: #{tpu_custom_call.1} parent=0
    #allocation2 [shape = 'u8[512]{0}', space=smem, size = 0x200, scoped, tag = 'input window, operand 0, single buffered']
    #allocation3 [shape = 's32[2]{0}', space=sflag, size = 0x8, scoped, tag = 'scoped memory for tpu_custom_call.1']
    #allocation4 [shape = 's32[2]{0}', space=sflag, size = 0x8, scoped, tag = 'scoped memory for tpu_custom_call.1']
    #allocation5 [shape = 's32[2]{0}', space=sflag, size = 0x8, scoped, tag = 'scoped memory for tpu_custom_call.1']
    #allocation6 [shape = 's32[2]{0}', space=sflag, size = 0x8, scoped, tag = 'scoped memory for tpu_custom_call.1']
    #allocation7 [shape = 'u8[512]{0}', space=smem, size = 0x200, scoped, tag = 'input window, operand 1, single buffered']
    #allocation8 [shape = 's32[1]{0}', space=sflag, size = 0x4, scoped, tag = 'scoped memory for tpu_custom_call.1']
    #allocation9 [shape = 'u8[512]{0}', space=smem, size = 0x200, scoped, tag = 'input window, operand 2, single buffered']
    #allocation10 [shape = 'u8[4096]{0}', space=vmem, size = 0x1000, scoped, tag = 'input window, operand 3']
    #allocation11 [shape = 'u8[32768]{0}', space=vmem, size = 0x8000, scoped, tag = 'input window, operand 4']
    #allocation12 [shape = 's32[2]{0}', space=sflag, size = 0x8, scoped, tag = 'scoped memory for tpu_custom_call.1']
    #allocation13 [shape = 'u8[2048]{0}', space=vmem, size = 0x800, scoped, tag = 'output window, operand 0']
    %10 = vsyncpa [#allocation5], 0
    %11 = vsyncpa [#allocation8], 0
    %12 = vsyncpa [#allocation6], 0
    %13 = vsyncpa [#allocation3], 0
    %s14 = scalar_lea.sflag [#allocation3], 1
    %15 = vsyncpa %s14, 0
    %16 = vsyncpa [#allocation12], 0
    %s17 = scalar_lea.sflag [#allocation12], 1
    %18 = vsyncpa %s17, 0
    %19 = vsyncpa [#allocation4], 0
    %s20 = scalar_lea.sflag [#allocation4], 1
    %21 = vsyncpa %s20, 0
    loop: start=0, step=1, limit=10
    $region2: #{tpu_custom_call.1} parent=1 // loop_pre_header
      _
    $region3: #{tpu_custom_call.1} parent=1 // loop_header
      %s23 = sphi 0, %s27
      %p24 = scmp.ge.s32.totalorder %s23, 10
      %s30 = sphi 0, %s42
      %s31 = sphi 0, %s38
      %s32 = sphi 0, %s30
      %s33 = sphi 0, %s31
      %s34 = sphi 0, %s32
      %s35 = sphi 0, %s33
      %s43 = sphi 0, %s43
      %s45 = sphi 0, %s43
      %s46 = sphi 0, %s45
      %s60 = sphi 0, %s46
      %s64 = sphi 0, %s64
      %s66 = sphi 0, %s64
      %s67 = sphi 0, %s66
      %s81 = sphi 0, %s67
      %s85 = sphi 0, %s85
      %s87 = sphi 0, %s85
      %s88 = sphi 0, %s87
      %s102 = sphi 0, %s88
      %s108 = sphi 0, %s110
      %s111 = sphi 0, %s108
      %s112 = sphi 0, %s111
      %s128 = sphi 0, %s112
      %s134 = sphi 0, %s136
      %s137 = sphi 0, %s134
      %s138 = sphi 0, %s137
      %s154 = sphi 0, %s138
      %s162 = sphi 0, %s164
      %s165 = sphi 0, %s162
      %s166 = sphi 0, %s165
      %s182 = sphi 0, %s166
    $region4: #{tpu_custom_call.1} parent=1 // loop_header_branch
      %26 = sbr.rel (%p24) target = $region8
    $region5: #{tpu_custom_call.1} parent=1 // loop_body
      %s28 = ssub.s32 %s23, 1
      %s29 = ssub.s32 %s23, 2
      %s36 = sadd.s32 1, %s31
      %p37 = scmp.ge.s32.totalorder %s36, 2
      %s38 = scalar_select %p37, 0, %s36
      %s39 = sadd.s32 1, %s30
      %s40 = scalar_select %p37, %s39, %s30
      %p41 = scmp.ge.s32.totalorder %s40, 4
      %s42 = scalar_select %p41, 0, %s40
      %s44 = sadd.s32 %s43, 1
      %p47 = scmp.eq.s32.totalorder %s23, 7
      %p48 = scmp.ne.s32.totalorder %s43, %s45
      %p49 = scmp.eq.s32.totalorder %s23, 0
      %p50 = por %p48, %p49
      %p51 = scmp.ne.s32.totalorder %s43, %s45
      %p52 = scmp.eq.s32.totalorder %s28, 7
      %p53 = por %p51, %p52
      %p54 = scmp.ne.s32.totalorder %s45, %s46
      %p55 = scmp.eq.s32.totalorder %s28, 0
      %p56 = por %p54, %p55
      %p57 = scmp.ne.s32.totalorder %s45, %s46
      %p58 = scmp.eq.s32.totalorder %s29, 7
      %p59 = por %p57, %p58
      %p61 = scmp.ne.s32.totalorder %s46, %s60
      %p62 = scmp.eq.s32.totalorder %s29, 0
      %p63 = por %p61, %p62
      %s65 = sadd.s32 %s64, 1
      %p68 = scmp.eq.s32.totalorder %s23, 7
      %p69 = scmp.ne.s32.totalorder %s64, %s66
      %p70 = scmp.eq.s32.totalorder %s23, 0
      %p71 = por %p69, %p70
      %p72 = scmp.ne.s32.totalorder %s64, %s66
      %p73 = scmp.eq.s32.totalorder %s28, 7
      %p74 = por %p72, %p73
      %p75 = scmp.ne.s32.totalorder %s66, %s67
      %p76 = scmp.eq.s32.totalorder %s28, 0
      %p77 = por %p75, %p76
      %p78 = scmp.ne.s32.totalorder %s66, %s67
      %p79 = scmp.eq.s32.totalorder %s29, 7
      %p80 = por %p78, %p79
      %p82 = scmp.ne.s32.totalorder %s67, %s81
      %p83 = scmp.eq.s32.totalorder %s29, 0
      %p84 = por %p82, %p83
      %s86 = sadd.s32 %s85, 1
      %p89 = scmp.eq.s32.totalorder %s23, 7
      %p90 = scmp.ne.s32.totalorder %s85, %s87
      %p91 = scmp.eq.s32.totalorder %s23, 0
      %p92 = por %p90, %p91
      %p93 = scmp.ne.s32.totalorder %s85, %s87
      %p94 = scmp.eq.s32.totalorder %s28, 7
      %p95 = por %p93, %p94
      %p96 = scmp.ne.s32.totalorder %s87, %s88
      %p97 = scmp.eq.s32.totalorder %s28, 0
      %p98 = por %p96, %p97
      %p99 = scmp.ne.s32.totalorder %s87, %s88
      %p100 = scmp.eq.s32.totalorder %s29, 7
      %p101 = por %p99, %p100
      %p103 = scmp.ne.s32.totalorder %s88, %s102
      %p104 = scmp.eq.s32.totalorder %s29, 0
      %p105 = por %p103, %p104
      %s106 = ssub.s32 %s31, %s38
      %p107 = scmp.eq.s32.totalorder %s106, 0
      %s109 = sadd.s32 %s108, 1
      %s110 = scalar_select %p107, %s108, %s109
      %p113 = pneg %p107
      %p114 = scmp.eq.s32.totalorder %s23, 7
      %p115 = por %p113, %p114
      %p116 = scmp.ne.s32.totalorder %s108, %s111
      %p117 = scmp.eq.s32.totalorder %s23, 0
      %p118 = por %p116, %p117
      %p119 = scmp.ne.s32.totalorder %s108, %s111
      %p120 = scmp.eq.s32.totalorder %s28, 7
      %p121 = por %p119, %p120
      %p122 = scmp.ne.s32.totalorder %s111, %s112
      %p123 = scmp.eq.s32.totalorder %s28, 0
      %p124 = por %p122, %p123
      %p125 = scmp.ne.s32.totalorder %s111, %s112
      %p126 = scmp.eq.s32.totalorder %s29, 7
      %p127 = por %p125, %p126
      %p129 = scmp.ne.s32.totalorder %s112, %s128
      %p130 = scmp.eq.s32.totalorder %s29, 0
      %p131 = por %p129, %p130
      %s132 = ssub.s32 %s30, %s42
      %p133 = scmp.eq.s32.totalorder %s132, 0
      %s135 = sadd.s32 %s134, 1
      %s136 = scalar_select %p133, %s134, %s135
      %p139 = pneg %p133
      %p140 = scmp.eq.s32.totalorder %s23, 7
      %p141 = por %p139, %p140
      %p142 = scmp.ne.s32.totalorder %s134, %s137
      %p143 = scmp.eq.s32.totalorder %s23, 0
      %p144 = por %p142, %p143
      %p145 = scmp.ne.s32.totalorder %s134, %s137
      %p146 = scmp.eq.s32.totalorder %s28, 7
      %p147 = por %p145, %p146
      %p148 = scmp.ne.s32.totalorder %s137, %s138
      %p149 = scmp.eq.s32.totalorder %s28, 0
      %p150 = por %p148, %p149
      %p151 = scmp.ne.s32.totalorder %s137, %s138
      %p152 = scmp.eq.s32.totalorder %s29, 7
      %p153 = por %p151, %p152
      %p155 = scmp.ne.s32.totalorder %s138, %s154
      %p156 = scmp.eq.s32.totalorder %s29, 0
      %p157 = por %p155, %p156
      %s158 = ssub.s32 %s30, %s42
      %s159 = ssub.s32 %s31, %s38
      %s160 = sor.u32 %s158, %s159
      %p161 = scmp.eq.s32.totalorder %s160, 0
      %s163 = sadd.s32 %s162, 1
      %s164 = scalar_select %p161, %s162, %s163
      %p167 = pneg %p161
      %p168 = scmp.eq.s32.totalorder %s23, 7
      %p169 = por %p167, %p168
      %p170 = scmp.ne.s32.totalorder %s162, %s165
      %p171 = scmp.eq.s32.totalorder %s23, 0
      %p172 = por %p170, %p171
      %p173 = scmp.ne.s32.totalorder %s162, %s165
      %p174 = scmp.eq.s32.totalorder %s28, 7
      %p175 = por %p173, %p174
      %p176 = scmp.ne.s32.totalorder %s165, %s166
      %p177 = scmp.eq.s32.totalorder %s28, 0
      %p178 = por %p176, %p177
      %p179 = scmp.ne.s32.totalorder %s165, %s166
      %p180 = scmp.eq.s32.totalorder %s29, 7
      %p181 = por %p179, %p180
      %p183 = scmp.ne.s32.totalorder %s166, %s182
      %p184 = scmp.eq.s32.totalorder %s29, 0
      %p185 = por %p183, %p184
      %p186 = scmp.le.s32.totalorder 1, %s23
      %p187 = scmp.lt.s32.totalorder %s23, 9
      %p188 = pnand %p186, %p187
      %p189 = pneg %p188
      // Predicated region
      $region9: #{tpu_custom_call.1} parent=5 // pred_check
        _
      $region10: #{tpu_custom_call.1} parent=5 // pred_check_branch
        %191 = sbr.rel (%p188) target = $region12
      $region11: #{tpu_custom_call.1} parent=5 // pred_region
        %s192 = ssub.s32 %s23, 1
        // Predicated region
        $region13: #{tpu_custom_call.1} parent=11 // pred_check
          %p193 = pneg %p56
        $region14: #{tpu_custom_call.1} parent=11 // pred_check_branch
          %195 = sbr.rel (%p193) target = $region16
        $region15: #{tpu_custom_call.1} parent=11 // pred_region
          %197 = vsyncadd [#allocation5], 0
          %s199 = sshll.u32 %s0, 4
          %s200 = int_to_ptr.hbm [resolvable:$true] %s199
          %202 = dma.hbm_to_smem %s200, 16, [#allocation2], [#allocation5]
        $region16: #{tpu_custom_call.1} parent=11 // pred_fallthru
          _
        // Predicated region
        $region17: #{tpu_custom_call.1} parent=11 // pred_check
          %p203 = pneg %p77
        $region18: #{tpu_custom_call.1} parent=11 // pred_check_branch
          %205 = sbr.rel (%p203) target = $region20
        $region19: #{tpu_custom_call.1} parent=11 // pred_region
          %207 = vsyncadd [#allocation8], 0
          %s209 = sshll.u32 %s1, 4
          %s210 = int_to_ptr.hbm [resolvable:$true] %s209
          %212 = dma.hbm_to_smem %s210, 16, [#allocation7], [#allocation8]
        $region20: #{tpu_custom_call.1} parent=11 // pred_fallthru
          _
        // Predicated region
        $region21: #{tpu_custom_call.1} parent=11 // pred_check
          %p213 = pneg %p98
        $region22: #{tpu_custom_call.1} parent=11 // pred_check_branch
          %215 = sbr.rel (%p213) target = $region24
        $region23: #{tpu_custom_call.1} parent=11 // pred_region
          %217 = vsyncadd [#allocation6], 0
          %s219 = sshll.u32 %s2, 4
          %s220 = int_to_ptr.vmem [resolvable:$true] %s219
          %222 = dma.vmem_to_smem %s220, 16, [#allocation9], [#allocation6]
        $region24: #{tpu_custom_call.1} parent=11 // pred_fallthru
          _
      $region12: #{tpu_custom_call.1} parent=5 // pred_fallthru
        _
      %p223 = scmp.lt.s32.totalorder %s23, 8
      // Predicated region
      $region25: #{tpu_custom_call.1} parent=5 // pred_check
        %p224 = pneg %p223
      $region26: #{tpu_custom_call.1} parent=5 // pred_check_branch
        %226 = sbr.rel (%p224) target = $region28
      $region27: #{tpu_custom_call.1} parent=5 // pred_region
        // Predicated region
        $region29: #{tpu_custom_call.1} parent=27 // pred_check
          %p227 = pneg %p118
        $region30: #{tpu_custom_call.1} parent=27 // pred_check_branch
          %229 = sbr.rel (%p227) target = $region32
        $region31: #{tpu_custom_call.1} parent=27 // pred_region
          %s230 = sand.u32 %s108, 1
          %s231 = scalar_lea.sflag [#allocation3], %s230
          %s232 = sand.u32 %s108, 1
          %s233 = smul.addr %s232, 4
          %s234 = scalar_lea.vmem [#allocation10], %s233
          %236 = vsyncadd %s231, 0
          %s237 = smul.addr %s31, 4
          %s238 = scalar_lea.hbm %s3, %s237
          %s240 = sshll.u32 %s238, 4
          %s241 = int_to_ptr.hbm [resolvable:$true] %s240
          %s242 = sshll.u32 %s234, 4
          %s243 = int_to_ptr.vmem [resolvable:$true] %s242
          %245 = dma.hbm_to_vmem [thread:$0]  %s241, 64, %s243, %s231
        $region32: #{tpu_custom_call.1} parent=27 // pred_fallthru
          _
        // Predicated region
        $region33: #{tpu_custom_call.1} parent=27 // pred_check
          %p246 = pneg %p144
        $region34: #{tpu_custom_call.1} parent=27 // pred_check_branch
          %248 = sbr.rel (%p246) target = $region36
        $region35: #{tpu_custom_call.1} parent=27 // pred_region
          %s249 = sand.u32 %s134, 1
          %s250 = scalar_lea.sflag [#allocation12], %s249
          %s251 = sand.u32 %s134, 1
          %s252 = smul.addr %s251, 32
          %s253 = scalar_lea.vmem [#allocation11], %s252
          %255 = vsyncadd %s250, 0
          %s256 = smul.addr %s30, 16
          %s257 = smul.addr %s256, 2
          %s258 = scalar_lea.hbm %s4, %s257
          %s260 = sshll.u32 %s258, 4
          %s261 = int_to_ptr.hbm [resolvable:$true] %s260
          %s262 = sshll.u32 %s253, 4
          %s263 = int_to_ptr.vmem [resolvable:$true] %s262
          %265 = dma.hbm_to_vmem [thread:$0]  %s261, 512, %s263, %s250
        $region36: #{tpu_custom_call.1} parent=27 // pred_fallthru
          _
      $region28: #{tpu_custom_call.1} parent=5 // pred_fallthru
        _
      %p266 = scmp.le.s32.totalorder 1, %s23
      %p267 = scmp.lt.s32.totalorder %s23, 9
      %p268 = pnand %p266, %p267
      %p269 = pneg %p268
      // Predicated region
      $region37: #{tpu_custom_call.1} parent=5 // pred_check
        _
      $region38: #{tpu_custom_call.1} parent=5 // pred_check_branch
        %271 = sbr.rel (%p268) target = $region40
      $region39: #{tpu_custom_call.1} parent=5 // pred_region
        %s272 = ssub.s32 %s23, 1
        // Predicated region
        $region41: #{tpu_custom_call.1} parent=39 // pred_check
          %p273 = pneg %p56
        $region42: #{tpu_custom_call.1} parent=39 // pred_check_branch
          %275 = sbr.rel (%p273) target = $region44
        $region43: #{tpu_custom_call.1} parent=39 // pred_region
          %277 = dma.done [#allocation5], 16
        $region44: #{tpu_custom_call.1} parent=39 // pred_fallthru
          _
        // Predicated region
        $region45: #{tpu_custom_call.1} parent=39 // pred_check
          %p278 = pneg %p77
        $region46: #{tpu_custom_call.1} parent=39 // pred_check_branch
          %280 = sbr.rel (%p278) target = $region48
        $region47: #{tpu_custom_call.1} parent=39 // pred_region
          %282 = dma.done [#allocation8], 16
        $region48: #{tpu_custom_call.1} parent=39 // pred_fallthru
          _
        // Predicated region
        $region49: #{tpu_custom_call.1} parent=39 // pred_check
          %p283 = pneg %p98
        $region50: #{tpu_custom_call.1} parent=39 // pred_check_branch
          %285 = sbr.rel (%p283) target = $region52
        $region51: #{tpu_custom_call.1} parent=39 // pred_region
          %287 = dma.done [#allocation6], 16
        $region52: #{tpu_custom_call.1} parent=39 // pred_fallthru
          _
        %s288 = sand.u32 %s111, 1
        %s289 = scalar_lea.sflag [#allocation3], %s288
        %s290 = sand.u32 %s111, 1
        %s291 = smul.addr %s290, 4
        %s292 = scalar_lea.vmem [#allocation10], %s291
        // Predicated region
        $region53: #{tpu_custom_call.1} parent=39 // pred_check
          %p293 = pneg %p124
        $region54: #{tpu_custom_call.1} parent=39 // pred_check_branch
          %295 = sbr.rel (%p293) target = $region56
        $region55: #{tpu_custom_call.1} parent=39 // pred_region
          %297 = dma.done %s289, 64
        $region56: #{tpu_custom_call.1} parent=39 // pred_fallthru
          _
        %s298 = sand.u32 %s137, 1
        %s299 = scalar_lea.sflag [#allocation12], %s298
        %s300 = sand.u32 %s137, 1
        %s301 = smul.addr %s300, 32
        %s302 = scalar_lea.vmem [#allocation11], %s301
        // Predicated region
        $region57: #{tpu_custom_call.1} parent=39 // pred_check
          %p303 = pneg %p150
        $region58: #{tpu_custom_call.1} parent=39 // pred_check_branch
          %305 = sbr.rel (%p303) target = $region60
        $region59: #{tpu_custom_call.1} parent=39 // pred_region
          %307 = dma.done %s299, 512
        $region60: #{tpu_custom_call.1} parent=39 // pred_fallthru
          _
        %308 = sfence
        %p309 = pneg %p56
        %p310 = pneg %p53
        %p311 = pneg %p77
        %p312 = pneg %p74
        %p313 = pneg %p98
        %p314 = pneg %p95
        %s315 = sand.u32 %s111, 1
        %s316 = scalar_lea.sflag [#allocation3], %s315
        %s317 = sand.u32 %s111, 1
        %s318 = smul.addr %s317, 4
        %s319 = scalar_lea.vmem [#allocation10], %s318
        %p320 = pneg %p124
        %p321 = pneg %p121
        %s322 = sand.u32 %s137, 1
        %s323 = scalar_lea.sflag [#allocation12], %s322
        %s324 = sand.u32 %s137, 1
        %s325 = smul.addr %s324, 32
        %s326 = scalar_lea.vmem [#allocation11], %s325
        %p327 = pneg %p150
        %p328 = pneg %p147
        %p329 = pneg %p178
        %p330 = pneg %p175
        %s331 = sand.u32 %s165, 1
        %s332 = scalar_lea.sflag [#allocation4], %s331
        %s333 = sand.u32 %s165, 1
        %s334 = smul.addr %s333, 2
        %s335 = scalar_lea.vmem [#allocation13], %s334
        %s336 = sld [smem:[#allocation2 + %s32]]
        %s337 = sld [smem:[#allocation7 + %s32]]
        %s338 = sld [smem:[#allocation9 + %s32]]
        %s339 = smul.u32 %s338, %s338
        %s340 = ssub.s32 %s337, 1
        %p341 = scmp.eq.s32.totalorder %s338, 0
        %v342 = vld [vmem:[%s292] sm:$0x7]
        %v343 = vstv %s336
        %v344 = vmul.f32 %v342, %v343
        %v345 = vadd.f32 %v344, 0.5
        %v346 = vfloor.f32 %v345
        %v347 = vsub.f32 %v345, %v346
        %v348 = vcvt.f32.s32.to.zero.pseudo %v346
        %v349 = vsub.f32 1.0, %v347
        %v350 = vand.u32 %v348, 1
        %v351 = vld [vmem:[%s302] sm:$0xff]
        %v352 = vld [vmem:[%s302 + $0x8] sm:$0xff]
        %v353 = vld [vmem:[%s302 + $0x10] sm:$0xff]
        %v354 = vld [vmem:[%s302 + $0x18] sm:$0xff]
        %v355 = vlaneseq
        %v356 = vshrl.u32 %v355, 7
        %v357 = vadd.s32 %v356, 8
        %v358 = vadd.s32 %v356, 16
        %v359 = vadd.s32 %v356, 24
        %v360 = vadd.s32 %v356, 32
        %v361 = vadd.s32 %v356, 40
        %v362 = vadd.s32 %v356, 48
        %v363 = vadd.s32 %v356, 56
        %v364 = vadd.s32 %v356, 64
        %v365 = vadd.s32 %v356, 72
        %v366 = vadd.s32 %v356, 80
        %v367 = vadd.s32 %v356, 88
        %v368 = vadd.s32 %v356, 96
        %v369 = vadd.s32 %v356, 104
        %v370 = vadd.s32 %v356, 112
        %v371 = vadd.s32 %v356, 120
        %v372 = vadd.s32 %v356, 128
        %v373 = vadd.s32 %v356, 136
        %v374 = vadd.s32 %v356, 144
        %v375 = vadd.s32 %v356, 152
        %v376 = vadd.s32 %v356, 160
        %v377 = vadd.s32 %v356, 168
        %v378 = vadd.s32 %v356, 176
        %v379 = vadd.s32 %v356, 184
        %v380 = vadd.s32 %v356, 192
        %v381 = vadd.s32 %v356, 200
        %v382 = vadd.s32 %v356, 208
        %v383 = vadd.s32 %v356, 216
        %v384 = vadd.s32 %v356, 224
        %v385 = vadd.s32 %v356, 232
        %v386 = vadd.s32 %v356, 240
        %v387 = vadd.s32 %v356, 248
        %v388 = vadd.s32 %v348, %v350
        %v389 = vmul.u32 %v388, 2654435761
        %v390 = vrot.slane %v389, 1
        %v391 = vxor.u32 %v388, %v390
        %v392 = vmul.u32 %v388, 805459861
        %v393 = vrot.slane %v392, 2
        %v394 = vxor.u32 %v391, %v393
        %v395 = vstv %s340
        %v396 = vand.u32 %v394, %v395
        %v397 = vstv %s338
        %v398 = vmul.u32 %v388, %v397
        %v399 = vrot.slane %v398, 1
        %v400 = vadd.s32 %v388, %v399
        %v401 = vstv %s339
        %v402 = vmul.u32 %v388, %v401
        %v403 = vrot.slane %v402, 2
        %v404 = vadd.s32 %v400, %v403
        %p405 = scmp.eq.s32.totalorder %s337, 0
        %s406 = scalar_select %p405, 1, %s337
        %v407 = vstv %s406
        %vm408 = vcmp.lt.s32.totalorder %v404, 0
        %v409 = vsub.s32 0, %v404
        %v410 = vsel %vm408, %v409, %v404
        %vm411 = vcmp.lt.s32.totalorder %v407, 0
        %v412 = vsub.s32 0, %v407
        %v413 = vsel %vm411, %v412, %v407
        %v414 = vshrl.u32 %v410, 31
        %v416 = vor.u32 0, %v414
        %v417 = vshll.u32 %v410, 1
        %v418 = vadd.s32 %v416, 2147483648
        %v419 = vadd.s32 %v413, 2147483648
        %vm420 = vcmp.ge.s32.totalorder %v418, %v419
        %v421 = vsub.s32 %v416, %v413
        %v422 = vsel %vm420, %v421, %v416
        %v423 = vadd.s32 %v417, 1
        %v424 = vsel %vm420, %v423, %v417
        %v425 = vshrl.u32 %v424, 31
        %v426 = vshll.u32 %v422, 1
        %v427 = vor.u32 %v426, %v425
        %v428 = vshll.u32 %v424, 1
        %v429 = vadd.s32 %v427, 2147483648
        %v430 = vadd.s32 %v413, 2147483648
        %vm431 = vcmp.ge.s32.totalorder %v429, %v430
        %v432 = vsub.s32 %v427, %v413
        %v433 = vsel %vm431, %v432, %v427
        %v434 = vadd.s32 %v428, 1
        %v435 = vsel %vm431, %v434, %v428
        %v436 = vshrl.u32 %v435, 31
        %v437 = vshll.u32 %v433, 1
        %v438 = vor.u32 %v437, %v436
        %v439 = vshll.u32 %v435, 1
        %v440 = vadd.s32 %v438, 2147483648
        %v441 = vadd.s32 %v413, 2147483648
        %vm442 = vcmp.ge.s32.totalorder %v440, %v441
        %v443 = vsub.s32 %v438, %v413
        %v444 = vsel %vm442, %v443, %v438
        %v445 = vadd.s32 %v439, 1
        %v446 = vsel %vm442, %v445, %v439
        %v447 = vshrl.u32 %v446, 31
        %v448 = vshll.u32 %v444, 1
        %v449 = vor.u32 %v448, %v447
        %v450 = vshll.u32 %v446, 1
        %v451 = vadd.s32 %v449, 2147483648
        %v452 = vadd.s32 %v413, 2147483648
        %vm453 = vcmp.ge.s32.totalorder %v451, %v452
        %v454 = vsub.s32 %v449, %v413
        %v455 = vsel %vm453, %v454, %v449
        %v456 = vadd.s32 %v450, 1
        %v457 = vsel %vm453, %v456, %v450
        %v458 = vshrl.u32 %v457, 31
        %v459 = vshll.u32 %v455, 1
        %v460 = vor.u32 %v459, %v458
        %v461 = vshll.u32 %v457, 1
        %v462 = vadd.s32 %v460, 2147483648
        %v463 = vadd.s32 %v413, 2147483648
        %vm464 = vcmp.ge.s32.totalorder %v462, %v463
        %v465 = vsub.s32 %v460, %v413
        %v466 = vsel %vm464, %v465, %v460
        %v467 = vadd.s32 %v461, 1
        %v468 = vsel %vm464, %v467, %v461
        %v469 = vshrl.u32 %v468, 31
        %v470 = vshll.u32 %v466, 1
        %v471 = vor.u32 %v470, %v469
        %v472 = vshll.u32 %v468, 1
        %v473 = vadd.s32 %v471, 2147483648
        %v474 = vadd.s32 %v413, 2147483648
        %vm475 = vcmp.ge.s32.totalorder %v473, %v474
        %v476 = vsub.s32 %v471, %v413
        %v477 = vsel %vm475, %v476, %v471
        %v478 = vadd.s32 %v472, 1
        %v479 = vsel %vm475, %v478, %v472
        %v480 = vshrl.u32 %v479, 31
        %v481 = vshll.u32 %v477, 1
        %v482 = vor.u32 %v481, %v480
        %v483 = vshll.u32 %v479, 1
        %v484 = vadd.s32 %v482, 2147483648
        %v485 = vadd.s32 %v413, 2147483648
        %vm486 = vcmp.ge.s32.totalorder %v484, %v485
        %v487 = vsub.s32 %v482, %v413
        %v488 = vsel %vm486, %v487, %v482
        %v489 = vadd.s32 %v483, 1
        %v490 = vsel %vm486, %v489, %v483
        %v491 = vshrl.u32 %v490, 31
        %v492 = vshll.u32 %v488, 1
        %v493 = vor.u32 %v492, %v491
        %v494 = vshll.u32 %v490, 1
        %v495 = vadd.s32 %v493, 2147483648
        %v496 = vadd.s32 %v413, 2147483648
        %vm497 = vcmp.ge.s32.totalorder %v495, %v496
        %v498 = vsub.s32 %v493, %v413
        %v499 = vsel %vm497, %v498, %v493
        %v500 = vadd.s32 %v494, 1
        %v501 = vsel %vm497, %v500, %v494
        %v502 = vshrl.u32 %v501, 31
        %v503 = vshll.u32 %v499, 1
        %v504 = vor.u32 %v503, %v502
        %v505 = vshll.u32 %v501, 1
        %v506 = vadd.s32 %v504, 2147483648
        %v507 = vadd.s32 %v413, 2147483648
        %vm508 = vcmp.ge.s32.totalorder %v506, %v507
        %v509 = vsub.s32 %v504, %v413
        %v510 = vsel %vm508, %v509, %v504
        %v511 = vadd.s32 %v505, 1
        %v512 = vsel %vm508, %v511, %v505
        %v513 = vshrl.u32 %v512, 31
        %v514 = vshll.u32 %v510, 1
        %v515 = vor.u32 %v514, %v513
        %v516 = vshll.u32 %v512, 1
        %v517 = vadd.s32 %v515, 2147483648
        %v518 = vadd.s32 %v413, 2147483648
        %vm519 = vcmp.ge.s32.totalorder %v517, %v518
        %v520 = vsub.s32 %v515, %v413
        %v521 = vsel %vm519, %v520, %v515
        %v522 = vadd.s32 %v516, 1
        %v523 = vsel %vm519, %v522, %v516
        %v524 = vshrl.u32 %v523, 31
        %v525 = vshll.u32 %v521, 1
        %v526 = vor.u32 %v525, %v524
        %v527 = vshll.u32 %v523, 1
        %v528 = vadd.s32 %v526, 2147483648
        %v529 = vadd.s32 %v413, 2147483648
        %vm530 = vcmp.ge.s32.totalorder %v528, %v529
        %v531 = vsub.s32 %v526, %v413
        %v532 = vsel %vm530, %v531, %v526
        %v533 = vadd.s32 %v527, 1
        %v534 = vsel %vm530, %v533, %v527
        %v535 = vshrl.u32 %v534, 31
        %v536 = vshll.u32 %v532, 1
        %v537 = vor.u32 %v536, %v535
        %v538 = vshll.u32 %v534, 1
        %v539 = vadd.s32 %v537, 2147483648
        %v540 = vadd.s32 %v413, 2147483648
        %vm541 = vcmp.ge.s32.totalorder %v539, %v540
        %v542 = vsub.s32 %v537, %v413
        %v543 = vsel %vm541, %v542, %v537
        %v544 = vadd.s32 %v538, 1
        %v545 = vsel %vm541, %v544, %v538
        %v546 = vshrl.u32 %v545, 31
        %v547 = vshll.u32 %v543, 1
        %v548 = vor.u32 %v547, %v546
        %v549 = vshll.u32 %v545, 1
        %v550 = vadd.s32 %v548, 2147483648
        %v551 = vadd.s32 %v413, 2147483648
        %vm552 = vcmp.ge.s32.totalorder %v550, %v551
        %v553 = vsub.s32 %v548, %v413
        %v554 = vsel %vm552, %v553, %v548
        %v555 = vadd.s32 %v549, 1
        %v556 = vsel %vm552, %v555, %v549
        %v557 = vshrl.u32 %v556, 31
        %v558 = vshll.u32 %v554, 1
        %v559 = vor.u32 %v558, %v557
        %v560 = vshll.u32 %v556, 1
        %v561 = vadd.s32 %v559, 2147483648
        %v562 = vadd.s32 %v413, 2147483648
        %vm563 = vcmp.ge.s32.totalorder %v561, %v562
        %v564 = vsub.s32 %v559, %v413
        %v565 = vsel %vm563, %v564, %v559
        %v566 = vadd.s32 %v560, 1
        %v567 = vsel %vm563, %v566, %v560
        %v568 = vshrl.u32 %v567, 31
        %v569 = vshll.u32 %v565, 1
        %v570 = vor.u32 %v569, %v568
        %v571 = vshll.u32 %v567, 1
        %v572 = vadd.s32 %v570, 2147483648
        %v573 = vadd.s32 %v413, 2147483648
        %vm574 = vcmp.ge.s32.totalorder %v572, %v573
        %v575 = vsub.s32 %v570, %v413
        %v576 = vsel %vm574, %v575, %v570
        %v577 = vadd.s32 %v571, 1
        %v578 = vsel %vm574, %v577, %v571
        %v579 = vshrl.u32 %v578, 31
        %v580 = vshll.u32 %v576, 1
        %v581 = vor.u32 %v580, %v579
        %v582 = vshll.u32 %v578, 1
        %v583 = vadd.s32 %v581, 2147483648
        %v584 = vadd.s32 %v413, 2147483648
        %vm585 = vcmp.ge.s32.totalorder %v583, %v584
        %v586 = vsub.s32 %v581, %v413
        %v587 = vsel %vm585, %v586, %v581
        %v588 = vadd.s32 %v582, 1
        %v589 = vsel %vm585, %v588, %v582
        %v590 = vshrl.u32 %v589, 31
        %v591 = vshll.u32 %v587, 1
        %v592 = vor.u32 %v591, %v590
        %v593 = vshll.u32 %v589, 1
        %v594 = vadd.s32 %v592, 2147483648
        %v595 = vadd.s32 %v413, 2147483648
        %vm596 = vcmp.ge.s32.totalorder %v594, %v595
        %v597 = vsub.s32 %v592, %v413
        %v598 = vsel %vm596, %v597, %v592
        %v599 = vadd.s32 %v593, 1
        %v600 = vsel %vm596, %v599, %v593
        %v601 = vshrl.u32 %v600, 31
        %v602 = vshll.u32 %v598, 1
        %v603 = vor.u32 %v602, %v601
        %v604 = vshll.u32 %v600, 1
        %v605 = vadd.s32 %v603, 2147483648
        %v606 = vadd.s32 %v413, 2147483648
        %vm607 = vcmp.ge.s32.totalorder %v605, %v606
        %v608 = vsub.s32 %v603, %v413
        %v609 = vsel %vm607, %v608, %v603
        %v610 = vadd.s32 %v604, 1
        %v611 = vsel %vm607, %v610, %v604
        %v612 = vshrl.u32 %v611, 31
        %v613 = vshll.u32 %v609, 1
        %v614 = vor.u32 %v613, %v612
        %v615 = vshll.u32 %v611, 1
        %v616 = vadd.s32 %v614, 2147483648
        %v617 = vadd.s32 %v413, 2147483648
        %vm618 = vcmp.ge.s32.totalorder %v616, %v617
        %v619 = vsub.s32 %v614, %v413
        %v620 = vsel %vm618, %v619, %v614
        %v621 = vadd.s32 %v615, 1
        %v622 = vsel %vm618, %v621, %v615
        %v623 = vshrl.u32 %v622, 31
        %v624 = vshll.u32 %v620, 1
        %v625 = vor.u32 %v624, %v623
        %v626 = vshll.u32 %v622, 1
        %v627 = vadd.s32 %v625, 2147483648
        %v628 = vadd.s32 %v413, 2147483648
        %vm629 = vcmp.ge.s32.totalorder %v627, %v628
        %v630 = vsub.s32 %v625, %v413
        %v631 = vsel %vm629, %v630, %v625
        %v632 = vadd.s32 %v626, 1
        %v633 = vsel %vm629, %v632, %v626
        %v634 = vshrl.u32 %v633, 31
        %v635 = vshll.u32 %v631, 1
        %v636 = vor.u32 %v635, %v634
        %v637 = vshll.u32 %v633, 1
        %v638 = vadd.s32 %v636, 2147483648
        %v639 = vadd.s32 %v413, 2147483648
        %vm640 = vcmp.ge.s32.totalorder %v638, %v639
        %v641 = vsub.s32 %v636, %v413
        %v642 = vsel %vm640, %v641, %v636
        %v643 = vadd.s32 %v637, 1
        %v644 = vsel %vm640, %v643, %v637
        %v645 = vshrl.u32 %v644, 31
        %v646 = vshll.u32 %v642, 1
        %v647 = vor.u32 %v646, %v645
        %v648 = vshll.u32 %v644, 1
        %v649 = vadd.s32 %v647, 2147483648
        %v650 = vadd.s32 %v413, 2147483648
        %vm651 = vcmp.ge.s32.totalorder %v649, %v650
        %v652 = vsub.s32 %v647, %v413
        %v653 = vsel %vm651, %v652, %v647
        %v654 = vadd.s32 %v648, 1
        %v655 = vsel %vm651, %v654, %v648
        %v656 = vshrl.u32 %v655, 31
        %v657 = vshll.u32 %v653, 1
        %v658 = vor.u32 %v657, %v656
        %v659 = vshll.u32 %v655, 1
        %v660 = vadd.s32 %v658, 2147483648
        %v661 = vadd.s32 %v413, 2147483648
        %vm662 = vcmp.ge.s32.totalorder %v660, %v661
        %v663 = vsub.s32 %v658, %v413
        %v664 = vsel %vm662, %v663, %v658
        %v665 = vadd.s32 %v659, 1
        %v666 = vsel %vm662, %v665, %v659
        %v667 = vshrl.u32 %v666, 31
        %v668 = vshll.u32 %v664, 1
        %v669 = vor.u32 %v668, %v667
        %v670 = vshll.u32 %v666, 1
        %v671 = vadd.s32 %v669, 2147483648
        %v672 = vadd.s32 %v413, 2147483648
        %vm673 = vcmp.ge.s32.totalorder %v671, %v672
        %v674 = vsub.s32 %v669, %v413
        %v675 = vsel %vm673, %v674, %v669
        %v676 = vadd.s32 %v670, 1
        %v677 = vsel %vm673, %v676, %v670
        %v678 = vshrl.u32 %v677, 31
        %v679 = vshll.u32 %v675, 1
        %v680 = vor.u32 %v679, %v678
        %v681 = vshll.u32 %v677, 1
        %v682 = vadd.s32 %v680, 2147483648
        %v683 = vadd.s32 %v413, 2147483648
        %vm684 = vcmp.ge.s32.totalorder %v682, %v683
        %v685 = vsub.s32 %v680, %v413
        %v686 = vsel %vm684, %v685, %v680
        %v687 = vadd.s32 %v681, 1
        %v688 = vsel %vm684, %v687, %v681
        %v689 = vshrl.u32 %v688, 31
        %v690 = vshll.u32 %v686, 1
        %v691 = vor.u32 %v690, %v689
        %v692 = vshll.u32 %v688, 1
        %v693 = vadd.s32 %v691, 2147483648
        %v694 = vadd.s32 %v413, 2147483648
        %vm695 = vcmp.ge.s32.totalorder %v693, %v694
        %v696 = vsub.s32 %v691, %v413
        %v697 = vsel %vm695, %v696, %v691
        %v698 = vadd.s32 %v692, 1
        %v699 = vsel %vm695, %v698, %v692
        %v700 = vshrl.u32 %v699, 31
        %v701 = vshll.u32 %v697, 1
        %v702 = vor.u32 %v701, %v700
        %v703 = vshll.u32 %v699, 1
        %v704 = vadd.s32 %v702, 2147483648
        %v705 = vadd.s32 %v413, 2147483648
        %vm706 = vcmp.ge.s32.totalorder %v704, %v705
        %v707 = vsub.s32 %v702, %v413
        %v708 = vsel %vm706, %v707, %v702
        %v709 = vadd.s32 %v703, 1
        %v710 = vsel %vm706, %v709, %v703
        %v711 = vshrl.u32 %v710, 31
        %v712 = vshll.u32 %v708, 1
        %v713 = vor.u32 %v712, %v711
        %v714 = vshll.u32 %v710, 1
        %v715 = vadd.s32 %v713, 2147483648
        %v716 = vadd.s32 %v413, 2147483648
        %vm717 = vcmp.ge.s32.totalorder %v715, %v716
        %v718 = vsub.s32 %v713, %v413
        %v719 = vsel %vm717, %v718, %v713
        %v720 = vadd.s32 %v714, 1
        %v721 = vsel %vm717, %v720, %v714
        %v722 = vshrl.u32 %v721, 31
        %v723 = vshll.u32 %v719, 1
        %v724 = vor.u32 %v723, %v722
        %v725 = vshll.u32 %v721, 1
        %v726 = vadd.s32 %v724, 2147483648
        %v727 = vadd.s32 %v413, 2147483648
        %vm728 = vcmp.ge.s32.totalorder %v726, %v727
        %v729 = vsub.s32 %v724, %v413
        %v730 = vsel %vm728, %v729, %v724
        %v731 = vadd.s32 %v725, 1
        %v732 = vsel %vm728, %v731, %v725
        %v733 = vshrl.u32 %v732, 31
        %v734 = vshll.u32 %v730, 1
        %v735 = vor.u32 %v734, %v733
        %v736 = vshll.u32 %v732, 1
        %v737 = vadd.s32 %v735, 2147483648
        %v738 = vadd.s32 %v413, 2147483648
        %vm739 = vcmp.ge.s32.totalorder %v737, %v738
        %v740 = vsub.s32 %v735, %v413
        %v741 = vsel %vm739, %v740, %v735
        %v742 = vadd.s32 %v736, 1
        %v743 = vsel %vm739, %v742, %v736
        %v744 = vshrl.u32 %v743, 31
        %v745 = vshll.u32 %v741, 1
        %v746 = vor.u32 %v745, %v744
        %v747 = vshll.u32 %v743, 1
        %v748 = vadd.s32 %v746, 2147483648
        %v749 = vadd.s32 %v413, 2147483648
        %vm750 = vcmp.ge.s32.totalorder %v748, %v749
        %v751 = vsub.s32 %v746, %v413
        %v752 = vsel %vm750, %v751, %v746
        %v753 = vadd.s32 %v747, 1
        %v754 = vsel %vm750, %v753, %v747
        %v755 = vshrl.u32 %v754, 31
        %v756 = vshll.u32 %v752, 1
        %v757 = vor.u32 %v756, %v755
        %v758 = vshll.u32 %v754, 1
        %v759 = vadd.s32 %v757, 2147483648
        %v760 = vadd.s32 %v413, 2147483648
        %vm761 = vcmp.ge.s32.totalorder %v759, %v760
        %v762 = vsub.s32 %v757, %v413
        %v763 = vsel %vm761, %v762, %v757
        %v764 = vadd.s32 %v758, 1
        %v765 = vsel %vm761, %v764, %v758
        %v766 = vsub.s32 0, %v763
        %v767 = vsel %vm408, %v766, %v763
        %vm768 = vcmp.ne.s32.totalorder %v767, 0
        %vm769 = vcmp.lt.s32.totalorder %v767, 0
        %p770 = scmp.lt.s32.totalorder %s406, 0
        %s771 = scalar_select %p770, 1, 0
        %v772 = vstv %s771
        %vm773 = vcmp.eq.s32.totalorder %v772, 1
        %vm774 = vmxor %vm769, %vm773
        %vm775 = vmand %vm774, %vm768
        %v776 = vadd.s32 %v767, %v407
        %v777 = vsel %vm775, %v776, %v767
        %s778 = scalar_select %p341, 1, 0
        %v779 = vstv %s778
        %vm780 = vcmp.eq.s32.totalorder %v779, 1
        %v781 = vsel %vm780, %v396, %v777
        %v782 = vperm.slane %v781, 0
        %vm783 = vcmp.eq.s32.totalorder %v356, %v782
        %vm784 = vcmp.eq.s32.totalorder %v357, %v782
        %vm785 = vcmp.eq.s32.totalorder %v358, %v782
        %vm786 = vcmp.eq.s32.totalorder %v359, %v782
        %vm787 = vcmp.eq.s32.totalorder %v360, %v782
        %vm788 = vcmp.eq.s32.totalorder %v361, %v782
        %vm789 = vcmp.eq.s32.totalorder %v362, %v782
        %vm790 = vcmp.eq.s32.totalorder %v363, %v782
        %vm791 = vcmp.eq.s32.totalorder %v364, %v782
        %vm792 = vcmp.eq.s32.totalorder %v365, %v782
        %vm793 = vcmp.eq.s32.totalorder %v366, %v782
        %vm794 = vcmp.eq.s32.totalorder %v367, %v782
        %vm795 = vcmp.eq.s32.totalorder %v368, %v782
        %vm796 = vcmp.eq.s32.totalorder %v369, %v782
        %vm797 = vcmp.eq.s32.totalorder %v370, %v782
        %vm798 = vcmp.eq.s32.totalorder %v371, %v782
        %vm799 = vcmp.eq.s32.totalorder %v372, %v782
        %vm800 = vcmp.eq.s32.totalorder %v373, %v782
        %vm801 = vcmp.eq.s32.totalorder %v374, %v782
        %vm802 = vcmp.eq.s32.totalorder %v375, %v782
        %vm803 = vcmp.eq.s32.totalorder %v376, %v782
        %vm804 = vcmp.eq.s32.totalorder %v377, %v782
        %vm805 = vcmp.eq.s32.totalorder %v378, %v782
        %vm806 = vcmp.eq.s32.totalorder %v379, %v782
        %vm807 = vcmp.eq.s32.totalorder %v380, %v782
        %vm808 = vcmp.eq.s32.totalorder %v381, %v782
        %vm809 = vcmp.eq.s32.totalorder %v382, %v782
        %vm810 = vcmp.eq.s32.totalorder %v383, %v782
        %vm811 = vcmp.eq.s32.totalorder %v384, %v782
        %vm812 = vcmp.eq.s32.totalorder %v385, %v782
        %vm813 = vcmp.eq.s32.totalorder %v386, %v782
        %vm814 = vcmp.eq.s32.totalorder %v387, %v782
        %v815 = vsel %vm783, 1.0, 0.0
        %v816 = vsel %vm784, 1.0, 0.0
        %v817 = vsel %vm785, 1.0, 0.0
        %v818 = vsel %vm786, 1.0, 0.0
        %v819 = vsel %vm787, 1.0, 0.0
        %v820 = vsel %vm788, 1.0, 0.0
        %v821 = vsel %vm789, 1.0, 0.0
        %v822 = vsel %vm790, 1.0, 0.0
        %v823 = vsel %vm791, 1.0, 0.0
        %v824 = vsel %vm792, 1.0, 0.0
        %v825 = vsel %vm793, 1.0, 0.0
        %v826 = vsel %vm794, 1.0, 0.0
        %v827 = vsel %vm795, 1.0, 0.0
        %v828 = vsel %vm796, 1.0, 0.0
        %v829 = vsel %vm797, 1.0, 0.0
        %v830 = vsel %vm798, 1.0, 0.0
        %v831 = vsel %vm799, 1.0, 0.0
        %v832 = vsel %vm800, 1.0, 0.0
        %v833 = vsel %vm801, 1.0, 0.0
        %v834 = vsel %vm802, 1.0, 0.0
        %v835 = vsel %vm803, 1.0, 0.0
        %v836 = vsel %vm804, 1.0, 0.0
        %v837 = vsel %vm805, 1.0, 0.0
        %v838 = vsel %vm806, 1.0, 0.0
        %v839 = vsel %vm807, 1.0, 0.0
        %v840 = vsel %vm808, 1.0, 0.0
        %v841 = vsel %vm809, 1.0, 0.0
        %v842 = vsel %vm810, 1.0, 0.0
        %v843 = vsel %vm811, 1.0, 0.0
        %v844 = vsel %vm812, 1.0, 0.0
        %v845 = vsel %vm813, 1.0, 0.0
        %v846 = vsel %vm814, 1.0, 0.0
        %848 = vst [vmem:[#allocation1] ss:$4 sm:$0xff] %v351
        %v849 = vld.sshfl [vmem:[#allocation1] sm:$0xff pattern:$0x73625140]
        %v850 = vld.sshfl [vmem:[#allocation1 + $0x8] sm:$0xff pattern:$0x73625140]
        %853 = vmatpush.msra.mxu0 %v830
        %854 = vmatpush.msra.mxu0 %v829
        %855 = vmatpush.msra.mxu0 %v828
        %856 = vmatpush.msra.mxu0 %v827
        %857 = vmatpush.msra.mxu0 %v826
        %858 = vmatpush.msra.mxu0 %v825
        %859 = vmatpush.msra.mxu0 %v824
        %860 = vmatpush.msra.mxu0 %v823
        %861 = vmatpush.msra.mxu0 %v822
        %862 = vmatpush.msra.mxu0 %v821
        %863 = vmatpush.msra.mxu0 %v820
        %864 = vmatpush.msra.mxu0 %v819
        %865 = vmatpush.msra.mxu0 %v818
        %866 = vmatpush.msra.mxu0 %v817
        %867 = vmatpush.msra.mxu0 %v816
        %868 = vmatpush.msra.mxu0 %v815
        %869 = vmatmul.f32.gmra.mxu0 %v849
        %v870 = vpop.f32.mrf.mxu0
        %v871 = vadd.f32 0.0, %v870
        %872 = vdwg.mxu0
        %873 = vmatpush.msra.mxu0 %v846
        %874 = vmatpush.msra.mxu0 %v845
        %875 = vmatpush.msra.mxu0 %v844
        %876 = vmatpush.msra.mxu0 %v843
        %877 = vmatpush.msra.mxu0 %v842
        %878 = vmatpush.msra.mxu0 %v841
        %879 = vmatpush.msra.mxu0 %v840
        %880 = vmatpush.msra.mxu0 %v839
        %881 = vmatpush.msra.mxu0 %v838
        %882 = vmatpush.msra.mxu0 %v837
        %883 = vmatpush.msra.mxu0 %v836
        %884 = vmatpush.msra.mxu0 %v835
        %885 = vmatpush.msra.mxu0 %v834
        %886 = vmatpush.msra.mxu0 %v833
        %887 = vmatpush.msra.mxu0 %v832
        %888 = vmatpush.msra.mxu0 %v831
        %889 = vmatmul.f32.gmra.mxu0 %v850
        %v890 = vpop.f32.mrf.mxu0
        %v891 = vadd.f32 %v871, %v890
        %892 = vdwg.mxu0
        %vm893 = vcmp.ne.s32.totalorder %v350, 0
        %v894 = vsel %vm893, %v347, %v349
        %v896 = vrot.slane %v894, 1
        %v898 = vmul.f32 %v894, %v896
        %v899 = vrot.slane %v894, 2
        %v901 = vmul.f32 %v898, %v899
        %v902 = vperm.slane %v901, 0
        %v903 = vmul.f32 %v891, %v902
        %v904 = vadd.f32 %v903, 0.0
        %v905 = vxor.u32 %v350, 1
        %v906 = vadd.s32 %v348, %v905
        %v907 = vmul.u32 %v906, 805459861
        %v908 = vrot.slane %v907, 2
        %v909 = vxor.u32 %v391, %v908
        %v910 = vand.u32 %v909, %v395
        %v911 = vmul.u32 %v906, %v401
        %v912 = vrot.slane %v911, 2
        %v913 = vadd.s32 %v400, %v912
        %vm914 = vcmp.lt.s32.totalorder %v913, 0
        %v915 = vsub.s32 0, %v913
        %v916 = vsel %vm914, %v915, %v913
        %vm917 = vcmp.lt.s32.totalorder %v407, 0
        %v918 = vsub.s32 0, %v407
        %v919 = vsel %vm917, %v918, %v407
        %v920 = vshrl.u32 %v916, 31
        %v922 = vor.u32 0, %v920
        %v923 = vshll.u32 %v916, 1
        %v924 = vadd.s32 %v922, 2147483648
        %v925 = vadd.s32 %v919, 2147483648
        %vm926 = vcmp.ge.s32.totalorder %v924, %v925
        %v927 = vsub.s32 %v922, %v919
        %v928 = vsel %vm926, %v927, %v922
        %v929 = vadd.s32 %v923, 1
        %v930 = vsel %vm926, %v929, %v923
        %v931 = vshrl.u32 %v930, 31
        %v932 = vshll.u32 %v928, 1
        %v933 = vor.u32 %v932, %v931
        %v934 = vshll.u32 %v930, 1
        %v935 = vadd.s32 %v933, 2147483648
        %v936 = vadd.s32 %v919, 2147483648
        %vm937 = vcmp.ge.s32.totalorder %v935, %v936
        %v938 = vsub.s32 %v933, %v919
        %v939 = vsel %vm937, %v938, %v933
        %v940 = vadd.s32 %v934, 1
        %v941 = vsel %vm937, %v940, %v934
        %v942 = vshrl.u32 %v941, 31
        %v943 = vshll.u32 %v939, 1
        %v944 = vor.u32 %v943, %v942
        %v945 = vshll.u32 %v941, 1
        %v946 = vadd.s32 %v944, 2147483648
        %v947 = vadd.s32 %v919, 2147483648
        %vm948 = vcmp.ge.s32.totalorder %v946, %v947
        %v949 = vsub.s32 %v944, %v919
        %v950 = vsel %vm948, %v949, %v944
        %v951 = vadd.s32 %v945, 1
        %v952 = vsel %vm948, %v951, %v945
        %v953 = vshrl.u32 %v952, 31
        %v954 = vshll.u32 %v950, 1
        %v955 = vor.u32 %v954, %v953
        %v956 = vshll.u32 %v952, 1
        %v957 = vadd.s32 %v955, 2147483648
        %v958 = vadd.s32 %v919, 2147483648
        %vm959 = vcmp.ge.s32.totalorder %v957, %v958
        %v960 = vsub.s32 %v955, %v919
        %v961 = vsel %vm959, %v960, %v955
        %v962 = vadd.s32 %v956, 1
        %v963 = vsel %vm959, %v962, %v956
        %v964 = vshrl.u32 %v963, 31
        %v965 = vshll.u32 %v961, 1
        %v966 = vor.u32 %v965, %v964
        %v967 = vshll.u32 %v963, 1
        %v968 = vadd.s32 %v966, 2147483648
        %v969 = vadd.s32 %v919, 2147483648
        %vm970 = vcmp.ge.s32.totalorder %v968, %v969
        %v971 = vsub.s32 %v966, %v919
        %v972 = vsel %vm970, %v971, %v966
        %v973 = vadd.s32 %v967, 1
        %v974 = vsel %vm970, %v973, %v967
        %v975 = vshrl.u32 %v974, 31
        %v976 = vshll.u32 %v972, 1
        %v977 = vor.u32 %v976, %v975
        %v978 = vshll.u32 %v974, 1
        %v979 = vadd.s32 %v977, 2147483648
        %v980 = vadd.s32 %v919, 2147483648
        %vm981 = vcmp.ge.s32.totalorder %v979, %v980
        %v982 = vsub.s32 %v977, %v919
        %v983 = vsel %vm981, %v982, %v977
        %v984 = vadd.s32 %v978, 1
        %v985 = vsel %vm981, %v984, %v978
        %v986 = vshrl.u32 %v985, 31
        %v987 = vshll.u32 %v983, 1
        %v988 = vor.u32 %v987, %v986
        %v989 = vshll.u32 %v985, 1
        %v990 = vadd.s32 %v988, 2147483648
        %v991 = vadd.s32 %v919, 2147483648
        %vm992 = vcmp.ge.s32.totalorder %v990, %v991
        %v993 = vsub.s32 %v988, %v919
        %v994 = vsel %vm992, %v993, %v988
        %v995 = vadd.s32 %v989, 1
        %v996 = vsel %vm992, %v995, %v989
        %v997 = vshrl.u32 %v996, 31
        %v998 = vshll.u32 %v994, 1
        %v999 = vor.u32 %v998, %v997
        %v1000 = vshll.u32 %v996, 1
        %v1001 = vadd.s32 %v999, 2147483648
        %v1002 = vadd.s32 %v919, 2147483648
        %vm1003 = vcmp.ge.s32.totalorder %v1001, %v1002
        %v1004 = vsub.s32 %v999, %v919
        %v1005 = vsel %vm1003, %v1004, %v999
        %v1006 = vadd.s32 %v1000, 1
        %v1007 = vsel %vm1003, %v1006, %v1000
        %v1008 = vshrl.u32 %v1007, 31
        %v1009 = vshll.u32 %v1005, 1
        %v1010 = vor.u32 %v1009, %v1008
        %v1011 = vshll.u32 %v1007, 1
        %v1012 = vadd.s32 %v1010, 2147483648
        %v1013 = vadd.s32 %v919, 2147483648
        %vm1014 = vcmp.ge.s32.totalorder %v1012, %v1013
        %v1015 = vsub.s32 %v1010, %v919
        %v1016 = vsel %vm1014, %v1015, %v1010
        %v1017 = vadd.s32 %v1011, 1
        %v1018 = vsel %vm1014, %v1017, %v1011
        %v1019 = vshrl.u32 %v1018, 31
        %v1020 = vshll.u32 %v1016, 1
        %v1021 = vor.u32 %v1020, %v1019
        %v1022 = vshll.u32 %v1018, 1
        %v1023 = vadd.s32 %v1021, 2147483648
        %v1024 = vadd.s32 %v919, 2147483648
        %vm1025 = vcmp.ge.s32.totalorder %v1023, %v1024
        %v1026 = vsub.s32 %v1021, %v919
        %v1027 = vsel %vm1025, %v1026, %v1021
        %v1028 = vadd.s32 %v1022, 1
        %v1029 = vsel %vm1025, %v1028, %v1022
        %v1030 = vshrl.u32 %v1029, 31
        %v1031 = vshll.u32 %v1027, 1
        %v1032 = vor.u32 %v1031, %v1030
        %v1033 = vshll.u32 %v1029, 1
        %v1034 = vadd.s32 %v1032, 2147483648
        %v1035 = vadd.s32 %v919, 2147483648
        %vm1036 = vcmp.ge.s32.totalorder %v1034, %v1035
        %v1037 = vsub.s32 %v1032, %v919
        %v1038 = vsel %vm1036, %v1037, %v1032
        %v1039 = vadd.s32 %v1033, 1
        %v1040 = vsel %vm1036, %v1039, %v1033
        %v1041 = vshrl.u32 %v1040, 31
        %v1042 = vshll.u32 %v1038, 1
        %v1043 = vor.u32 %v1042, %v1041
        %v1044 = vshll.u32 %v1040, 1
        %v1045 = vadd.s32 %v1043, 2147483648
        %v1046 = vadd.s32 %v919, 2147483648
        %vm1047 = vcmp.ge.s32.totalorder %v1045, %v1046
        %v1048 = vsub.s32 %v1043, %v919
        %v1049 = vsel %vm1047, %v1048, %v1043
        %v1050 = vadd.s32 %v1044, 1
        %v1051 = vsel %vm1047, %v1050, %v1044
        %v1052 = vshrl.u32 %v1051, 31
        %v1053 = vshll.u32 %v1049, 1
        %v1054 = vor.u32 %v1053, %v1052
        %v1055 = vshll.u32 %v1051, 1
        %v1056 = vadd.s32 %v1054, 2147483648
        %v1057 = vadd.s32 %v919, 2147483648
        %vm1058 = vcmp.ge.s32.totalorder %v1056, %v1057
        %v1059 = vsub.s32 %v1054, %v919
        %v1060 = vsel %vm1058, %v1059, %v1054
        %v1061 = vadd.s32 %v1055, 1
        %v1062 = vsel %vm1058, %v1061, %v1055
        %v1063 = vshrl.u32 %v1062, 31
        %v1064 = vshll.u32 %v1060, 1
        %v1065 = vor.u32 %v1064, %v1063
        %v1066 = vshll.u32 %v1062, 1
        %v1067 = vadd.s32 %v1065, 2147483648
        %v1068 = vadd.s32 %v919, 2147483648
        %vm1069 = vcmp.ge.s32.totalorder %v1067, %v1068
        %v1070 = vsub.s32 %v1065, %v919
        %v1071 = vsel %vm1069, %v1070, %v1065
        %v1072 = vadd.s32 %v1066, 1
        %v1073 = vsel %vm1069, %v1072, %v1066
        %v1074 = vshrl.u32 %v1073, 31
        %v1075 = vshll.u32 %v1071, 1
        %v1076 = vor.u32 %v1075, %v1074
        %v1077 = vshll.u32 %v1073, 1
        %v1078 = vadd.s32 %v1076, 2147483648
        %v1079 = vadd.s32 %v919, 2147483648
        %vm1080 = vcmp.ge.s32.totalorder %v1078, %v1079
        %v1081 = vsub.s32 %v1076, %v919
        %v1082 = vsel %vm1080, %v1081, %v1076
        %v1083 = vadd.s32 %v1077, 1
        %v1084 = vsel %vm1080, %v1083, %v1077
        %v1085 = vshrl.u32 %v1084, 31
        %v1086 = vshll.u32 %v1082, 1
        %v1087 = vor.u32 %v1086, %v1085
        %v1088 = vshll.u32 %v1084, 1
        %v1089 = vadd.s32 %v1087, 2147483648
        %v1090 = vadd.s32 %v919, 2147483648
        %vm1091 = vcmp.ge.s32.totalorder %v1089, %v1090
        %v1092 = vsub.s32 %v1087, %v919
        %v1093 = vsel %vm1091, %v1092, %v1087
        %v1094 = vadd.s32 %v1088, 1
        %v1095 = vsel %vm1091, %v1094, %v1088
        %v1096 = vshrl.u32 %v1095, 31
        %v1097 = vshll.u32 %v1093, 1
        %v1098 = vor.u32 %v1097, %v1096
        %v1099 = vshll.u32 %v1095, 1
        %v1100 = vadd.s32 %v1098, 2147483648
        %v1101 = vadd.s32 %v919, 2147483648
        %vm1102 = vcmp.ge.s32.totalorder %v1100, %v1101
        %v1103 = vsub.s32 %v1098, %v919
        %v1104 = vsel %vm1102, %v1103, %v1098
        %v1105 = vadd.s32 %v1099, 1
        %v1106 = vsel %vm1102, %v1105, %v1099
        %v1107 = vshrl.u32 %v1106, 31
        %v1108 = vshll.u32 %v1104, 1
        %v1109 = vor.u32 %v1108, %v1107
        %v1110 = vshll.u32 %v1106, 1
        %v1111 = vadd.s32 %v1109, 2147483648
        %v1112 = vadd.s32 %v919, 2147483648
        %vm1113 = vcmp.ge.s32.totalorder %v1111, %v1112
        %v1114 = vsub.s32 %v1109, %v919
        %v1115 = vsel %vm1113, %v1114, %v1109
        %v1116 = vadd.s32 %v1110, 1
        %v1117 = vsel %vm1113, %v1116, %v1110
        %v1118 = vshrl.u32 %v1117, 31
        %v1119 = vshll.u32 %v1115, 1
        %v1120 = vor.u32 %v1119, %v1118
        %v1121 = vshll.u32 %v1117, 1
        %v1122 = vadd.s32 %v1120, 2147483648
        %v1123 = vadd.s32 %v919, 2147483648
        %vm1124 = vcmp.ge.s32.totalorder %v1122, %v1123
        %v1125 = vsub.s32 %v1120, %v919
        %v1126 = vsel %vm1124, %v1125, %v1120
        %v1127 = vadd.s32 %v1121, 1
        %v1128 = vsel %vm1124, %v1127, %v1121
        %v1129 = vshrl.u32 %v1128, 31
        %v1130 = vshll.u32 %v1126, 1
        %v1131 = vor.u32 %v1130, %v1129
        %v1132 = vshll.u32 %v1128, 1
        %v1133 = vadd.s32 %v1131, 2147483648
        %v1134 = vadd.s32 %v919, 2147483648
        %vm1135 = vcmp.ge.s32.totalorder %v1133, %v1134
        %v1136 = vsub.s32 %v1131, %v919
        %v1137 = vsel %vm1135, %v1136, %v1131
        %v1138 = vadd.s32 %v1132, 1
        %v1139 = vsel %vm1135, %v1138, %v1132
        %v1140 = vshrl.u32 %v1139, 31
        %v1141 = vshll.u32 %v1137, 1
        %v1142 = vor.u32 %v1141, %v1140
        %v1143 = vshll.u32 %v1139, 1
        %v1144 = vadd.s32 %v1142, 2147483648
        %v1145 = vadd.s32 %v919, 2147483648
        %vm1146 = vcmp.ge.s32.totalorder %v1144, %v1145
        %v1147 = vsub.s32 %v1142, %v919
        %v1148 = vsel %vm1146, %v1147, %v1142
        %v1149 = vadd.s32 %v1143, 1
        %v1150 = vsel %vm1146, %v1149, %v1143
        %v1151 = vshrl.u32 %v1150, 31
        %v1152 = vshll.u32 %v1148, 1
        %v1153 = vor.u32 %v1152, %v1151
        %v1154 = vshll.u32 %v1150, 1
        %v1155 = vadd.s32 %v1153, 2147483648
        %v1156 = vadd.s32 %v919, 2147483648
        %vm1157 = vcmp.ge.s32.totalorder %v1155, %v1156
        %v1158 = vsub.s32 %v1153, %v919
        %v1159 = vsel %vm1157, %v1158, %v1153
        %v1160 = vadd.s32 %v1154, 1
        %v1161 = vsel %vm1157, %v1160, %v1154
        %v1162 = vshrl.u32 %v1161, 31
        %v1163 = vshll.u32 %v1159, 1
        %v1164 = vor.u32 %v1163, %v1162
        %v1165 = vshll.u32 %v1161, 1
        %v1166 = vadd.s32 %v1164, 2147483648
        %v1167 = vadd.s32 %v919, 2147483648
        %vm1168 = vcmp.ge.s32.totalorder %v1166, %v1167
        %v1169 = vsub.s32 %v1164, %v919
        %v1170 = vsel %vm1168, %v1169, %v1164
        %v1171 = vadd.s32 %v1165, 1
        %v1172 = vsel %vm1168, %v1171, %v1165
        %v1173 = vshrl.u32 %v1172, 31
        %v1174 = vshll.u32 %v1170, 1
        %v1175 = vor.u32 %v1174, %v1173
        %v1176 = vshll.u32 %v1172, 1
        %v1177 = vadd.s32 %v1175, 2147483648
        %v1178 = vadd.s32 %v919, 2147483648
        %vm1179 = vcmp.ge.s32.totalorder %v1177, %v1178
        %v1180 = vsub.s32 %v1175, %v919
        %v1181 = vsel %vm1179, %v1180, %v1175
        %v1182 = vadd.s32 %v1176, 1
        %v1183 = vsel %vm1179, %v1182, %v1176
        %v1184 = vshrl.u32 %v1183, 31
        %v1185 = vshll.u32 %v1181, 1
        %v1186 = vor.u32 %v1185, %v1184
        %v1187 = vshll.u32 %v1183, 1
        %v1188 = vadd.s32 %v1186, 2147483648
        %v1189 = vadd.s32 %v919, 2147483648
        %vm1190 = vcmp.ge.s32.totalorder %v1188, %v1189
        %v1191 = vsub.s32 %v1186, %v919
        %v1192 = vsel %vm1190, %v1191, %v1186
        %v1193 = vadd.s32 %v1187, 1
        %v1194 = vsel %vm1190, %v1193, %v1187
        %v1195 = vshrl.u32 %v1194, 31
        %v1196 = vshll.u32 %v1192, 1
        %v1197 = vor.u32 %v1196, %v1195
        %v1198 = vshll.u32 %v1194, 1
        %v1199 = vadd.s32 %v1197, 2147483648
        %v1200 = vadd.s32 %v919, 2147483648
        %vm1201 = vcmp.ge.s32.totalorder %v1199, %v1200
        %v1202 = vsub.s32 %v1197, %v919
        %v1203 = vsel %vm1201, %v1202, %v1197
        %v1204 = vadd.s32 %v1198, 1
        %v1205 = vsel %vm1201, %v1204, %v1198
        %v1206 = vshrl.u32 %v1205, 31
        %v1207 = vshll.u32 %v1203, 1
        %v1208 = vor.u32 %v1207, %v1206
        %v1209 = vshll.u32 %v1205, 1
        %v1210 = vadd.s32 %v1208, 2147483648
        %v1211 = vadd.s32 %v919, 2147483648
        %vm1212 = vcmp.ge.s32.totalorder %v1210, %v1211
        %v1213 = vsub.s32 %v1208, %v919
        %v1214 = vsel %vm1212, %v1213, %v1208
        %v1215 = vadd.s32 %v1209, 1
        %v1216 = vsel %vm1212, %v1215, %v1209
        %v1217 = vshrl.u32 %v1216, 31
        %v1218 = vshll.u32 %v1214, 1
        %v1219 = vor.u32 %v1218, %v1217
        %v1220 = vshll.u32 %v1216, 1
        %v1221 = vadd.s32 %v1219, 2147483648
        %v1222 = vadd.s32 %v919, 2147483648
        %vm1223 = vcmp.ge.s32.totalorder %v1221, %v1222
        %v1224 = vsub.s32 %v1219, %v919
        %v1225 = vsel %vm1223, %v1224, %v1219
        %v1226 = vadd.s32 %v1220, 1
        %v1227 = vsel %vm1223, %v1226, %v1220
        %v1228 = vshrl.u32 %v1227, 31
        %v1229 = vshll.u32 %v1225, 1
        %v1230 = vor.u32 %v1229, %v1228
        %v1231 = vshll.u32 %v1227, 1
        %v1232 = vadd.s32 %v1230, 2147483648
        %v1233 = vadd.s32 %v919, 2147483648
        %vm1234 = vcmp.ge.s32.totalorder %v1232, %v1233
        %v1235 = vsub.s32 %v1230, %v919
        %v1236 = vsel %vm1234, %v1235, %v1230
        %v1237 = vadd.s32 %v1231, 1
        %v1238 = vsel %vm1234, %v1237, %v1231
        %v1239 = vshrl.u32 %v1238, 31
        %v1240 = vshll.u32 %v1236, 1
        %v1241 = vor.u32 %v1240, %v1239
        %v1242 = vshll.u32 %v1238, 1
        %v1243 = vadd.s32 %v1241, 2147483648
        %v1244 = vadd.s32 %v919, 2147483648
        %vm1245 = vcmp.ge.s32.totalorder %v1243, %v1244
        %v1246 = vsub.s32 %v1241, %v919
        %v1247 = vsel %vm1245, %v1246, %v1241
        %v1248 = vadd.s32 %v1242, 1
        %v1249 = vsel %vm1245, %v1248, %v1242
        %v1250 = vshrl.u32 %v1249, 31
        %v1251 = vshll.u32 %v1247, 1
        %v1252 = vor.u32 %v1251, %v1250
        %v1253 = vshll.u32 %v1249, 1
        %v1254 = vadd.s32 %v1252, 2147483648
        %v1255 = vadd.s32 %v919, 2147483648
        %vm1256 = vcmp.ge.s32.totalorder %v1254, %v1255
        %v1257 = vsub.s32 %v1252, %v919
        %v1258 = vsel %vm1256, %v1257, %v1252
        %v1259 = vadd.s32 %v1253, 1
        %v1260 = vsel %vm1256, %v1259, %v1253
        %v1261 = vshrl.u32 %v1260, 31
        %v1262 = vshll.u32 %v1258, 1
        %v1263 = vor.u32 %v1262, %v1261
        %v1264 = vshll.u32 %v1260, 1
        %v1265 = vadd.s32 %v1263, 2147483648
        %v1266 = vadd.s32 %v919, 2147483648
        %vm1267 = vcmp.ge.s32.totalorder %v1265, %v1266
        %v1268 = vsub.s32 %v1263, %v919
        %v1269 = vsel %vm1267, %v1268, %v1263
        %v1270 = vadd.s32 %v1264, 1
        %v1271 = vsel %vm1267, %v1270, %v1264
        %v1272 = vsub.s32 0, %v1269
        %v1273 = vsel %vm914, %v1272, %v1269
        %vm1274 = vcmp.ne.s32.totalorder %v1273, 0
        %vm1275 = vcmp.lt.s32.totalorder %v1273, 0
        %vm1276 = vmxor %vm1275, %vm773
        %vm1277 = vmand %vm1276, %vm1274
        %v1278 = vadd.s32 %v1273, %v407
        %v1279 = vsel %vm1277, %v1278, %v1273
        %v1280 = vsel %vm780, %v910, %v1279
        %v1281 = vperm.slane %v1280, 0
        %vm1282 = vcmp.eq.s32.totalorder %v356, %v1281
        %vm1283 = vcmp.eq.s32.totalorder %v357, %v1281
        %vm1284 = vcmp.eq.s32.totalorder %v358, %v1281
        %vm1285 = vcmp.eq.s32.totalorder %v359, %v1281
        %vm1286 = vcmp.eq.s32.totalorder %v360, %v1281
        %vm1287 = vcmp.eq.s32.totalorder %v361, %v1281
        %vm1288 = vcmp.eq.s32.totalorder %v362, %v1281
        %vm1289 = vcmp.eq.s32.totalorder %v363, %v1281
        %vm1290 = vcmp.eq.s32.totalorder %v364, %v1281
        %vm1291 = vcmp.eq.s32.totalorder %v365, %v1281
        %vm1292 = vcmp.eq.s32.totalorder %v366, %v1281
        %vm1293 = vcmp.eq.s32.totalorder %v367, %v1281
        %vm1294 = vcmp.eq.s32.totalorder %v368, %v1281
        %vm1295 = vcmp.eq.s32.totalorder %v369, %v1281
        %vm1296 = vcmp.eq.s32.totalorder %v370, %v1281
        %vm1297 = vcmp.eq.s32.totalorder %v371, %v1281
        %vm1298 = vcmp.eq.s32.totalorder %v372, %v1281
        %vm1299 = vcmp.eq.s32.totalorder %v373, %v1281
        %vm1300 = vcmp.eq.s32.totalorder %v374, %v1281
        %vm1301 = vcmp.eq.s32.totalorder %v375, %v1281
        %vm1302 = vcmp.eq.s32.totalorder %v376, %v1281
        %vm1303 = vcmp.eq.s32.totalorder %v377, %v1281
        %vm1304 = vcmp.eq.s32.totalorder %v378, %v1281
        %vm1305 = vcmp.eq.s32.totalorder %v379, %v1281
        %vm1306 = vcmp.eq.s32.totalorder %v380, %v1281
        %vm1307 = vcmp.eq.s32.totalorder %v381, %v1281
        %vm1308 = vcmp.eq.s32.totalorder %v382, %v1281
        %vm1309 = vcmp.eq.s32.totalorder %v383, %v1281
        %vm1310 = vcmp.eq.s32.totalorder %v384, %v1281
        %vm1311 = vcmp.eq.s32.totalorder %v385, %v1281
        %vm1312 = vcmp.eq.s32.totalorder %v386, %v1281
        %vm1313 = vcmp.eq.s32.totalorder %v387, %v1281
        %v1314 = vsel %vm1282, 1.0, 0.0
        %v1315 = vsel %vm1283, 1.0, 0.0
        %v1316 = vsel %vm1284, 1.0, 0.0
        %v1317 = vsel %vm1285, 1.0, 0.0
        %v1318 = vsel %vm1286, 1.0, 0.0
        %v1319 = vsel %vm1287, 1.0, 0.0
        %v1320 = vsel %vm1288, 1.0, 0.0
        %v1321 = vsel %vm1289, 1.0, 0.0
        %v1322 = vsel %vm1290, 1.0, 0.0
        %v1323 = vsel %vm1291, 1.0, 0.0
        %v1324 = vsel %vm1292, 1.0, 0.0
        %v1325 = vsel %vm1293, 1.0, 0.0
        %v1326 = vsel %vm1294, 1.0, 0.0
        %v1327 = vsel %vm1295, 1.0, 0.0
        %v1328 = vsel %vm1296, 1.0, 0.0
        %v1329 = vsel %vm1297, 1.0, 0.0
        %v1330 = vsel %vm1298, 1.0, 0.0
        %v1331 = vsel %vm1299, 1.0, 0.0
        %v1332 = vsel %vm1300, 1.0, 0.0
        %v1333 = vsel %vm1301, 1.0, 0.0
        %v1334 = vsel %vm1302, 1.0, 0.0
        %v1335 = vsel %vm1303, 1.0, 0.0
        %v1336 = vsel %vm1304, 1.0, 0.0
        %v1337 = vsel %vm1305, 1.0, 0.0
        %v1338 = vsel %vm1306, 1.0, 0.0
        %v1339 = vsel %vm1307, 1.0, 0.0
        %v1340 = vsel %vm1308, 1.0, 0.0
        %v1341 = vsel %vm1309, 1.0, 0.0
        %v1342 = vsel %vm1310, 1.0, 0.0
        %v1343 = vsel %vm1311, 1.0, 0.0
        %v1344 = vsel %vm1312, 1.0, 0.0
        %v1345 = vsel %vm1313, 1.0, 0.0
        %1346 = vst [vmem:[#allocation1] ss:$4 sm:$0xff] %v351
        %v1347 = vld.sshfl [vmem:[#allocation1 + $0x10] sm:$0xff pattern:$0x73625140]
        %v1348 = vld.sshfl [vmem:[#allocation1 + $0x18] sm:$0xff pattern:$0x73625140]
        %1351 = vmatpush.msra.mxu0 %v1329
        %1352 = vmatpush.msra.mxu0 %v1328
        %1353 = vmatpush.msra.mxu0 %v1327
        %1354 = vmatpush.msra.mxu0 %v1326
        %1355 = vmatpush.msra.mxu0 %v1325
        %1356 = vmatpush.msra.mxu0 %v1324
        %1357 = vmatpush.msra.mxu0 %v1323
        %1358 = vmatpush.msra.mxu0 %v1322
        %1359 = vmatpush.msra.mxu0 %v1321
        %1360 = vmatpush.msra.mxu0 %v1320
        %1361 = vmatpush.msra.mxu0 %v1319
        %1362 = vmatpush.msra.mxu0 %v1318
        %1363 = vmatpush.msra.mxu0 %v1317
        %1364 = vmatpush.msra.mxu0 %v1316
        %1365 = vmatpush.msra.mxu0 %v1315
        %1366 = vmatpush.msra.mxu0 %v1314
        %1367 = vmatmul.f32.gmra.mxu0 %v1347
        %v1368 = vpop.f32.mrf.mxu0
        %v1369 = vadd.f32 0.0, %v1368
        %1370 = vdwg.mxu0
        %1371 = vmatpush.msra.mxu0 %v1345
        %1372 = vmatpush.msra.mxu0 %v1344
        %1373 = vmatpush.msra.mxu0 %v1343
        %1374 = vmatpush.msra.mxu0 %v1342
        %1375 = vmatpush.msra.mxu0 %v1341
        %1376 = vmatpush.msra.mxu0 %v1340
        %1377 = vmatpush.msra.mxu0 %v1339
        %1378 = vmatpush.msra.mxu0 %v1338
        %1379 = vmatpush.msra.mxu0 %v1337
        %1380 = vmatpush.msra.mxu0 %v1336
        %1381 = vmatpush.msra.mxu0 %v1335
        %1382 = vmatpush.msra.mxu0 %v1334
        %1383 = vmatpush.msra.mxu0 %v1333
        %1384 = vmatpush.msra.mxu0 %v1332
        %1385 = vmatpush.msra.mxu0 %v1331
        %1386 = vmatpush.msra.mxu0 %v1330
        %1387 = vmatmul.f32.gmra.mxu0 %v1348
        %v1388 = vpop.f32.mrf.mxu0
        %v1389 = vadd.f32 %v1369, %v1388
        %1390 = vdwg.mxu0
        %vm1391 = vcmp.ne.s32.totalorder %v905, 0
        %v1392 = vsel %vm1391, %v347, %v349
        %v1394 = vrot.slane %v1392, 2
        %v1396 = vmul.f32 %v898, %v1394
        %v1397 = vperm.slane %v1396, 0
        %v1398 = vmul.f32 %v1389, %v1397
        %v1399 = vadd.f32 %v904, %v1398
        %v1400 = vmul.u32 %v906, 2654435761
        %v1401 = vrot.slane %v1400, 1
        %v1402 = vxor.u32 %v388, %v1401
        %v1403 = vxor.u32 %v1402, %v393
        %v1404 = vand.u32 %v1403, %v395
        %v1405 = vmul.u32 %v906, %v397
        %v1406 = vrot.slane %v1405, 1
        %v1407 = vadd.s32 %v388, %v1406
        %v1408 = vadd.s32 %v1407, %v403
        %vm1409 = vcmp.lt.s32.totalorder %v1408, 0
        %v1410 = vsub.s32 0, %v1408
        %v1411 = vsel %vm1409, %v1410, %v1408
        %vm1412 = vcmp.lt.s32.totalorder %v407, 0
        %v1413 = vsub.s32 0, %v407
        %v1414 = vsel %vm1412, %v1413, %v407
        %v1415 = vshrl.u32 %v1411, 31
        %v1417 = vor.u32 0, %v1415
        %v1418 = vshll.u32 %v1411, 1
        %v1419 = vadd.s32 %v1417, 2147483648
        %v1420 = vadd.s32 %v1414, 2147483648
        %vm1421 = vcmp.ge.s32.totalorder %v1419, %v1420
        %v1422 = vsub.s32 %v1417, %v1414
        %v1423 = vsel %vm1421, %v1422, %v1417
        %v1424 = vadd.s32 %v1418, 1
        %v1425 = vsel %vm1421, %v1424, %v1418
        %v1426 = vshrl.u32 %v1425, 31
        %v1427 = vshll.u32 %v1423, 1
        %v1428 = vor.u32 %v1427, %v1426
        %v1429 = vshll.u32 %v1425, 1
        %v1430 = vadd.s32 %v1428, 2147483648
        %v1431 = vadd.s32 %v1414, 2147483648
        %vm1432 = vcmp.ge.s32.totalorder %v1430, %v1431
        %v1433 = vsub.s32 %v1428, %v1414
        %v1434 = vsel %vm1432, %v1433, %v1428
        %v1435 = vadd.s32 %v1429, 1
        %v1436 = vsel %vm1432, %v1435, %v1429
        %v1437 = vshrl.u32 %v1436, 31
        %v1438 = vshll.u32 %v1434, 1
        %v1439 = vor.u32 %v1438, %v1437
        %v1440 = vshll.u32 %v1436, 1
        %v1441 = vadd.s32 %v1439, 2147483648
        %v1442 = vadd.s32 %v1414, 2147483648
        %vm1443 = vcmp.ge.s32.totalorder %v1441, %v1442
        %v1444 = vsub.s32 %v1439, %v1414
        %v1445 = vsel %vm1443, %v1444, %v1439
        %v1446 = vadd.s32 %v1440, 1
        %v1447 = vsel %vm1443, %v1446, %v1440
        %v1448 = vshrl.u32 %v1447, 31
        %v1449 = vshll.u32 %v1445, 1
        %v1450 = vor.u32 %v1449, %v1448
        %v1451 = vshll.u32 %v1447, 1
        %v1452 = vadd.s32 %v1450, 2147483648
        %v1453 = vadd.s32 %v1414, 2147483648
        %vm1454 = vcmp.ge.s32.totalorder %v1452, %v1453
        %v1455 = vsub.s32 %v1450, %v1414
        %v1456 = vsel %vm1454, %v1455, %v1450
        %v1457 = vadd.s32 %v1451, 1
        %v1458 = vsel %vm1454, %v1457, %v1451
        %v1459 = vshrl.u32 %v1458, 31
        %v1460 = vshll.u32 %v1456, 1
        %v1461 = vor.u32 %v1460, %v1459
        %v1462 = vshll.u32 %v1458, 1
        %v1463 = vadd.s32 %v1461, 2147483648
        %v1464 = vadd.s32 %v1414, 2147483648
        %vm1465 = vcmp.ge.s32.totalorder %v1463, %v1464
        %v1466 = vsub.s32 %v1461, %v1414
        %v1467 = vsel %vm1465, %v1466, %v1461
        %v1468 = vadd.s32 %v1462, 1
        %v1469 = vsel %vm1465, %v1468, %v1462
        %v1470 = vshrl.u32 %v1469, 31
        %v1471 = vshll.u32 %v1467, 1
        %v1472 = vor.u32 %v1471, %v1470
        %v1473 = vshll.u32 %v1469, 1
        %v1474 = vadd.s32 %v1472, 2147483648
        %v1475 = vadd.s32 %v1414, 2147483648
        %vm1476 = vcmp.ge.s32.totalorder %v1474, %v1475
        %v1477 = vsub.s32 %v1472, %v1414
        %v1478 = vsel %vm1476, %v1477, %v1472
        %v1479 = vadd.s32 %v1473, 1
        %v1480 = vsel %vm1476, %v1479, %v1473
        %v1481 = vshrl.u32 %v1480, 31
        %v1482 = vshll.u32 %v1478, 1
        %v1483 = vor.u32 %v1482, %v1481
        %v1484 = vshll.u32 %v1480, 1
        %v1485 = vadd.s32 %v1483, 2147483648
        %v1486 = vadd.s32 %v1414, 2147483648
        %vm1487 = vcmp.ge.s32.totalorder %v1485, %v1486
        %v1488 = vsub.s32 %v1483, %v1414
        %v1489 = vsel %vm1487, %v1488, %v1483
        %v1490 = vadd.s32 %v1484, 1
        %v1491 = vsel %vm1487, %v1490, %v1484
        %v1492 = vshrl.u32 %v1491, 31
        %v1493 = vshll.u32 %v1489, 1
        %v1494 = vor.u32 %v1493, %v1492
        %v1495 = vshll.u32 %v1491, 1
        %v1496 = vadd.s32 %v1494, 2147483648
        %v1497 = vadd.s32 %v1414, 2147483648
        %vm1498 = vcmp.ge.s32.totalorder %v1496, %v1497
        %v1499 = vsub.s32 %v1494, %v1414
        %v1500 = vsel %vm1498, %v1499, %v1494
        %v1501 = vadd.s32 %v1495, 1
        %v1502 = vsel %vm1498, %v1501, %v1495
        %v1503 = vshrl.u32 %v1502, 31
        %v1504 = vshll.u32 %v1500, 1
        %v1505 = vor.u32 %v1504, %v1503
        %v1506 = vshll.u32 %v1502, 1
        %v1507 = vadd.s32 %v1505, 2147483648
        %v1508 = vadd.s32 %v1414, 2147483648
        %vm1509 = vcmp.ge.s32.totalorder %v1507, %v1508
        %v1510 = vsub.s32 %v1505, %v1414
        %v1511 = vsel %vm1509, %v1510, %v1505
        %v1512 = vadd.s32 %v1506, 1
        %v1513 = vsel %vm1509, %v1512, %v1506
        %v1514 = vshrl.u32 %v1513, 31
        %v1515 = vshll.u32 %v1511, 1
        %v1516 = vor.u32 %v1515, %v1514
        %v1517 = vshll.u32 %v1513, 1
        %v1518 = vadd.s32 %v1516, 2147483648
        %v1519 = vadd.s32 %v1414, 2147483648
        %vm1520 = vcmp.ge.s32.totalorder %v1518, %v1519
        %v1521 = vsub.s32 %v1516, %v1414
        %v1522 = vsel %vm1520, %v1521, %v1516
        %v1523 = vadd.s32 %v1517, 1
        %v1524 = vsel %vm1520, %v1523, %v1517
        %v1525 = vshrl.u32 %v1524, 31
        %v1526 = vshll.u32 %v1522, 1
        %v1527 = vor.u32 %v1526, %v1525
        %v1528 = vshll.u32 %v1524, 1
        %v1529 = vadd.s32 %v1527, 2147483648
        %v1530 = vadd.s32 %v1414, 2147483648
        %vm1531 = vcmp.ge.s32.totalorder %v1529, %v1530
        %v1532 = vsub.s32 %v1527, %v1414
        %v1533 = vsel %vm1531, %v1532, %v1527
        %v1534 = vadd.s32 %v1528, 1
        %v1535 = vsel %vm1531, %v1534, %v1528
        %v1536 = vshrl.u32 %v1535, 31
        %v1537 = vshll.u32 %v1533, 1
        %v1538 = vor.u32 %v1537, %v1536
        %v1539 = vshll.u32 %v1535, 1
        %v1540 = vadd.s32 %v1538, 2147483648
        %v1541 = vadd.s32 %v1414, 2147483648
        %vm1542 = vcmp.ge.s32.totalorder %v1540, %v1541
        %v1543 = vsub.s32 %v1538, %v1414
        %v1544 = vsel %vm1542, %v1543, %v1538
        %v1545 = vadd.s32 %v1539, 1
        %v1546 = vsel %vm1542, %v1545, %v1539
        %v1547 = vshrl.u32 %v1546, 31
        %v1548 = vshll.u32 %v1544, 1
        %v1549 = vor.u32 %v1548, %v1547
        %v1550 = vshll.u32 %v1546, 1
        %v1551 = vadd.s32 %v1549, 2147483648
        %v1552 = vadd.s32 %v1414, 2147483648
        %vm1553 = vcmp.ge.s32.totalorder %v1551, %v1552
        %v1554 = vsub.s32 %v1549, %v1414
        %v1555 = vsel %vm1553, %v1554, %v1549
        %v1556 = vadd.s32 %v1550, 1
        %v1557 = vsel %vm1553, %v1556, %v1550
        %v1558 = vshrl.u32 %v1557, 31
        %v1559 = vshll.u32 %v1555, 1
        %v1560 = vor.u32 %v1559, %v1558
        %v1561 = vshll.u32 %v1557, 1
        %v1562 = vadd.s32 %v1560, 2147483648
        %v1563 = vadd.s32 %v1414, 2147483648
        %vm1564 = vcmp.ge.s32.totalorder %v1562, %v1563
        %v1565 = vsub.s32 %v1560, %v1414
        %v1566 = vsel %vm1564, %v1565, %v1560
        %v1567 = vadd.s32 %v1561, 1
        %v1568 = vsel %vm1564, %v1567, %v1561
        %v1569 = vshrl.u32 %v1568, 31
        %v1570 = vshll.u32 %v1566, 1
        %v1571 = vor.u32 %v1570, %v1569
        %v1572 = vshll.u32 %v1568, 1
        %v1573 = vadd.s32 %v1571, 2147483648
        %v1574 = vadd.s32 %v1414, 2147483648
        %vm1575 = vcmp.ge.s32.totalorder %v1573, %v1574
        %v1576 = vsub.s32 %v1571, %v1414
        %v1577 = vsel %vm1575, %v1576, %v1571
        %v1578 = vadd.s32 %v1572, 1
        %v1579 = vsel %vm1575, %v1578, %v1572
        %v1580 = vshrl.u32 %v1579, 31
        %v1581 = vshll.u32 %v1577, 1
        %v1582 = vor.u32 %v1581, %v1580
        %v1583 = vshll.u32 %v1579, 1
        %v1584 = vadd.s32 %v1582, 2147483648
        %v1585 = vadd.s32 %v1414, 2147483648
        %vm1586 = vcmp.ge.s32.totalorder %v1584, %v1585
        %v1587 = vsub.s32 %v1582, %v1414
        %v1588 = vsel %vm1586, %v1587, %v1582
        %v1589 = vadd.s32 %v1583, 1
        %v1590 = vsel %vm1586, %v1589, %v1583
        %v1591 = vshrl.u32 %v1590, 31
        %v1592 = vshll.u32 %v1588, 1
        %v1593 = vor.u32 %v1592, %v1591
        %v1594 = vshll.u32 %v1590, 1
        %v1595 = vadd.s32 %v1593, 2147483648
        %v1596 = vadd.s32 %v1414, 2147483648
        %vm1597 = vcmp.ge.s32.totalorder %v1595, %v1596
        %v1598 = vsub.s32 %v1593, %v1414
        %v1599 = vsel %vm1597, %v1598, %v1593
        %v1600 = vadd.s32 %v1594, 1
        %v1601 = vsel %vm1597, %v1600, %v1594
        %v1602 = vshrl.u32 %v1601, 31
        %v1603 = vshll.u32 %v1599, 1
        %v1604 = vor.u32 %v1603, %v1602
        %v1605 = vshll.u32 %v1601, 1
        %v1606 = vadd.s32 %v1604, 2147483648
        %v1607 = vadd.s32 %v1414, 2147483648
        %vm1608 = vcmp.ge.s32.totalorder %v1606, %v1607
        %v1609 = vsub.s32 %v1604, %v1414
        %v1610 = vsel %vm1608, %v1609, %v1604
        %v1611 = vadd.s32 %v1605, 1
        %v1612 = vsel %vm1608, %v1611, %v1605
        %v1613 = vshrl.u32 %v1612, 31
        %v1614 = vshll.u32 %v1610, 1
        %v1615 = vor.u32 %v1614, %v1613
        %v1616 = vshll.u32 %v1612, 1
        %v1617 = vadd.s32 %v1615, 2147483648
        %v1618 = vadd.s32 %v1414, 2147483648
        %vm1619 = vcmp.ge.s32.totalorder %v1617, %v1618
        %v1620 = vsub.s32 %v1615, %v1414
        %v1621 = vsel %vm1619, %v1620, %v1615
        %v1622 = vadd.s32 %v1616, 1
        %v1623 = vsel %vm1619, %v1622, %v1616
        %v1624 = vshrl.u32 %v1623, 31
        %v1625 = vshll.u32 %v1621, 1
        %v1626 = vor.u32 %v1625, %v1624
        %v1627 = vshll.u32 %v1623, 1
        %v1628 = vadd.s32 %v1626, 2147483648
        %v1629 = vadd.s32 %v1414, 2147483648
        %vm1630 = vcmp.ge.s32.totalorder %v1628, %v1629
        %v1631 = vsub.s32 %v1626, %v1414
        %v1632 = vsel %vm1630, %v1631, %v1626
        %v1633 = vadd.s32 %v1627, 1
        %v1634 = vsel %vm1630, %v1633, %v1627
        %v1635 = vshrl.u32 %v1634, 31
        %v1636 = vshll.u32 %v1632, 1
        %v1637 = vor.u32 %v1636, %v1635
        %v1638 = vshll.u32 %v1634, 1
        %v1639 = vadd.s32 %v1637, 2147483648
        %v1640 = vadd.s32 %v1414, 2147483648
        %vm1641 = vcmp.ge.s32.totalorder %v1639, %v1640
        %v1642 = vsub.s32 %v1637, %v1414
        %v1643 = vsel %vm1641, %v1642, %v1637
        %v1644 = vadd.s32 %v1638, 1
        %v1645 = vsel %vm1641, %v1644, %v1638
        %v1646 = vshrl.u32 %v1645, 31
        %v1647 = vshll.u32 %v1643, 1
        %v1648 = vor.u32 %v1647, %v1646
        %v1649 = vshll.u32 %v1645, 1
        %v1650 = vadd.s32 %v1648, 2147483648
        %v1651 = vadd.s32 %v1414, 2147483648
        %vm1652 = vcmp.ge.s32.totalorder %v1650, %v1651
        %v1653 = vsub.s32 %v1648, %v1414
        %v1654 = vsel %vm1652, %v1653, %v1648
        %v1655 = vadd.s32 %v1649, 1
        %v1656 = vsel %vm1652, %v1655, %v1649
        %v1657 = vshrl.u32 %v1656, 31
        %v1658 = vshll.u32 %v1654, 1
        %v1659 = vor.u32 %v1658, %v1657
        %v1660 = vshll.u32 %v1656, 1
        %v1661 = vadd.s32 %v1659, 2147483648
        %v1662 = vadd.s32 %v1414, 2147483648
        %vm1663 = vcmp.ge.s32.totalorder %v1661, %v1662
        %v1664 = vsub.s32 %v1659, %v1414
        %v1665 = vsel %vm1663, %v1664, %v1659
        %v1666 = vadd.s32 %v1660, 1
        %v1667 = vsel %vm1663, %v1666, %v1660
        %v1668 = vshrl.u32 %v1667, 31
        %v1669 = vshll.u32 %v1665, 1
        %v1670 = vor.u32 %v1669, %v1668
        %v1671 = vshll.u32 %v1667, 1
        %v1672 = vadd.s32 %v1670, 2147483648
        %v1673 = vadd.s32 %v1414, 2147483648
        %vm1674 = vcmp.ge.s32.totalorder %v1672, %v1673
        %v1675 = vsub.s32 %v1670, %v1414
        %v1676 = vsel %vm1674, %v1675, %v1670
        %v1677 = vadd.s32 %v1671, 1
        %v1678 = vsel %vm1674, %v1677, %v1671
        %v1679 = vshrl.u32 %v1678, 31
        %v1680 = vshll.u32 %v1676, 1
        %v1681 = vor.u32 %v1680, %v1679
        %v1682 = vshll.u32 %v1678, 1
        %v1683 = vadd.s32 %v1681, 2147483648
        %v1684 = vadd.s32 %v1414, 2147483648
        %vm1685 = vcmp.ge.s32.totalorder %v1683, %v1684
        %v1686 = vsub.s32 %v1681, %v1414
        %v1687 = vsel %vm1685, %v1686, %v1681
        %v1688 = vadd.s32 %v1682, 1
        %v1689 = vsel %vm1685, %v1688, %v1682
        %v1690 = vshrl.u32 %v1689, 31
        %v1691 = vshll.u32 %v1687, 1
        %v1692 = vor.u32 %v1691, %v1690
        %v1693 = vshll.u32 %v1689, 1
        %v1694 = vadd.s32 %v1692, 2147483648
        %v1695 = vadd.s32 %v1414, 2147483648
        %vm1696 = vcmp.ge.s32.totalorder %v1694, %v1695
        %v1697 = vsub.s32 %v1692, %v1414
        %v1698 = vsel %vm1696, %v1697, %v1692
        %v1699 = vadd.s32 %v1693, 1
        %v1700 = vsel %vm1696, %v1699, %v1693
        %v1701 = vshrl.u32 %v1700, 31
        %v1702 = vshll.u32 %v1698, 1
        %v1703 = vor.u32 %v1702, %v1701
        %v1704 = vshll.u32 %v1700, 1
        %v1705 = vadd.s32 %v1703, 2147483648
        %v1706 = vadd.s32 %v1414, 2147483648
        %vm1707 = vcmp.ge.s32.totalorder %v1705, %v1706
        %v1708 = vsub.s32 %v1703, %v1414
        %v1709 = vsel %vm1707, %v1708, %v1703
        %v1710 = vadd.s32 %v1704, 1
        %v1711 = vsel %vm1707, %v1710, %v1704
        %v1712 = vshrl.u32 %v1711, 31
        %v1713 = vshll.u32 %v1709, 1
        %v1714 = vor.u32 %v1713, %v1712
        %v1715 = vshll.u32 %v1711, 1
        %v1716 = vadd.s32 %v1714, 2147483648
        %v1717 = vadd.s32 %v1414, 2147483648
        %vm1718 = vcmp.ge.s32.totalorder %v1716, %v1717
        %v1719 = vsub.s32 %v1714, %v1414
        %v1720 = vsel %vm1718, %v1719, %v1714
        %v1721 = vadd.s32 %v1715, 1
        %v1722 = vsel %vm1718, %v1721, %v1715
        %v1723 = vshrl.u32 %v1722, 31
        %v1724 = vshll.u32 %v1720, 1
        %v1725 = vor.u32 %v1724, %v1723
        %v1726 = vshll.u32 %v1722, 1
        %v1727 = vadd.s32 %v1725, 2147483648
        %v1728 = vadd.s32 %v1414, 2147483648
        %vm1729 = vcmp.ge.s32.totalorder %v1727, %v1728
        %v1730 = vsub.s32 %v1725, %v1414
        %v1731 = vsel %vm1729, %v1730, %v1725
        %v1732 = vadd.s32 %v1726, 1
        %v1733 = vsel %vm1729, %v1732, %v1726
        %v1734 = vshrl.u32 %v1733, 31
        %v1735 = vshll.u32 %v1731, 1
        %v1736 = vor.u32 %v1735, %v1734
        %v1737 = vshll.u32 %v1733, 1
        %v1738 = vadd.s32 %v1736, 2147483648
        %v1739 = vadd.s32 %v1414, 2147483648
        %vm1740 = vcmp.ge.s32.totalorder %v1738, %v1739
        %v1741 = vsub.s32 %v1736, %v1414
        %v1742 = vsel %vm1740, %v1741, %v1736
        %v1743 = vadd.s32 %v1737, 1
        %v1744 = vsel %vm1740, %v1743, %v1737
        %v1745 = vshrl.u32 %v1744, 31
        %v1746 = vshll.u32 %v1742, 1
        %v1747 = vor.u32 %v1746, %v1745
        %v1748 = vshll.u32 %v1744, 1
        %v1749 = vadd.s32 %v1747, 2147483648
        %v1750 = vadd.s32 %v1414, 2147483648
        %vm1751 = vcmp.ge.s32.totalorder %v1749, %v1750
        %v1752 = vsub.s32 %v1747, %v1414
        %v1753 = vsel %vm1751, %v1752, %v1747
        %v1754 = vadd.s32 %v1748, 1
        %v1755 = vsel %vm1751, %v1754, %v1748
        %v1756 = vshrl.u32 %v1755, 31
        %v1757 = vshll.u32 %v1753, 1
        %v1758 = vor.u32 %v1757, %v1756
        %v1759 = vshll.u32 %v1755, 1
        %v1760 = vadd.s32 %v1758, 2147483648
        %v1761 = vadd.s32 %v1414, 2147483648
        %vm1762 = vcmp.ge.s32.totalorder %v1760, %v1761
        %v1763 = vsub.s32 %v1758, %v1414
        %v1764 = vsel %vm1762, %v1763, %v1758
        %v1765 = vadd.s32 %v1759, 1
        %v1766 = vsel %vm1762, %v1765, %v1759
        %v1767 = vsub.s32 0, %v1764
        %v1768 = vsel %vm1409, %v1767, %v1764
        %vm1769 = vcmp.ne.s32.totalorder %v1768, 0
        %vm1770 = vcmp.lt.s32.totalorder %v1768, 0
        %vm1771 = vmxor %vm1770, %vm773
        %vm1772 = vmand %vm1771, %vm1769
        %v1773 = vadd.s32 %v1768, %v407
        %v1774 = vsel %vm1772, %v1773, %v1768
        %v1775 = vsel %vm780, %v1404, %v1774
        %v1776 = vperm.slane %v1775, 0
        %vm1777 = vcmp.eq.s32.totalorder %v356, %v1776
        %vm1778 = vcmp.eq.s32.totalorder %v357, %v1776
        %vm1779 = vcmp.eq.s32.totalorder %v358, %v1776
        %vm1780 = vcmp.eq.s32.totalorder %v359, %v1776
        %vm1781 = vcmp.eq.s32.totalorder %v360, %v1776
        %vm1782 = vcmp.eq.s32.totalorder %v361, %v1776
        %vm1783 = vcmp.eq.s32.totalorder %v362, %v1776
        %vm1784 = vcmp.eq.s32.totalorder %v363, %v1776
        %vm1785 = vcmp.eq.s32.totalorder %v364, %v1776
        %vm1786 = vcmp.eq.s32.totalorder %v365, %v1776
        %vm1787 = vcmp.eq.s32.totalorder %v366, %v1776
        %vm1788 = vcmp.eq.s32.totalorder %v367, %v1776
        %vm1789 = vcmp.eq.s32.totalorder %v368, %v1776
        %vm1790 = vcmp.eq.s32.totalorder %v369, %v1776
        %vm1791 = vcmp.eq.s32.totalorder %v370, %v1776
        %vm1792 = vcmp.eq.s32.totalorder %v371, %v1776
        %vm1793 = vcmp.eq.s32.totalorder %v372, %v1776
        %vm1794 = vcmp.eq.s32.totalorder %v373, %v1776
        %vm1795 = vcmp.eq.s32.totalorder %v374, %v1776
        %vm1796 = vcmp.eq.s32.totalorder %v375, %v1776
        %vm1797 = vcmp.eq.s32.totalorder %v376, %v1776
        %vm1798 = vcmp.eq.s32.totalorder %v377, %v1776
        %vm1799 = vcmp.eq.s32.totalorder %v378, %v1776
        %vm1800 = vcmp.eq.s32.totalorder %v379, %v1776
        %vm1801 = vcmp.eq.s32.totalorder %v380, %v1776
        %vm1802 = vcmp.eq.s32.totalorder %v381, %v1776
        %vm1803 = vcmp.eq.s32.totalorder %v382, %v1776
        %vm1804 = vcmp.eq.s32.totalorder %v383, %v1776
        %vm1805 = vcmp.eq.s32.totalorder %v384, %v1776
        %vm1806 = vcmp.eq.s32.totalorder %v385, %v1776
        %vm1807 = vcmp.eq.s32.totalorder %v386, %v1776
        %vm1808 = vcmp.eq.s32.totalorder %v387, %v1776
        %v1809 = vsel %vm1777, 1.0, 0.0
        %v1810 = vsel %vm1778, 1.0, 0.0
        %v1811 = vsel %vm1779, 1.0, 0.0
        %v1812 = vsel %vm1780, 1.0, 0.0
        %v1813 = vsel %vm1781, 1.0, 0.0
        %v1814 = vsel %vm1782, 1.0, 0.0
        %v1815 = vsel %vm1783, 1.0, 0.0
        %v1816 = vsel %vm1784, 1.0, 0.0
        %v1817 = vsel %vm1785, 1.0, 0.0
        %v1818 = vsel %vm1786, 1.0, 0.0
        %v1819 = vsel %vm1787, 1.0, 0.0
        %v1820 = vsel %vm1788, 1.0, 0.0
        %v1821 = vsel %vm1789, 1.0, 0.0
        %v1822 = vsel %vm1790, 1.0, 0.0
        %v1823 = vsel %vm1791, 1.0, 0.0
        %v1824 = vsel %vm1792, 1.0, 0.0
        %v1825 = vsel %vm1793, 1.0, 0.0
        %v1826 = vsel %vm1794, 1.0, 0.0
        %v1827 = vsel %vm1795, 1.0, 0.0
        %v1828 = vsel %vm1796, 1.0, 0.0
        %v1829 = vsel %vm1797, 1.0, 0.0
        %v1830 = vsel %vm1798, 1.0, 0.0
        %v1831 = vsel %vm1799, 1.0, 0.0
        %v1832 = vsel %vm1800, 1.0, 0.0
        %v1833 = vsel %vm1801, 1.0, 0.0
        %v1834 = vsel %vm1802, 1.0, 0.0
        %v1835 = vsel %vm1803, 1.0, 0.0
        %v1836 = vsel %vm1804, 1.0, 0.0
        %v1837 = vsel %vm1805, 1.0, 0.0
        %v1838 = vsel %vm1806, 1.0, 0.0
        %v1839 = vsel %vm1807, 1.0, 0.0
        %v1840 = vsel %vm1808, 1.0, 0.0
        %1842 = vst [vmem:[#allocation1] ss:$4 sm:$0xff] %v352
        %v1843 = vld.sshfl [vmem:[#allocation1] sm:$0xff pattern:$0x73625140]
        %v1844 = vld.sshfl [vmem:[#allocation1 + $0x8] sm:$0xff pattern:$0x73625140]
        %1847 = vmatpush.msra.mxu0 %v1824
        %1848 = vmatpush.msra.mxu0 %v1823
        %1849 = vmatpush.msra.mxu0 %v1822
        %1850 = vmatpush.msra.mxu0 %v1821
        %1851 = vmatpush.msra.mxu0 %v1820
        %1852 = vmatpush.msra.mxu0 %v1819
        %1853 = vmatpush.msra.mxu0 %v1818
        %1854 = vmatpush.msra.mxu0 %v1817
        %1855 = vmatpush.msra.mxu0 %v1816
        %1856 = vmatpush.msra.mxu0 %v1815
        %1857 = vmatpush.msra.mxu0 %v1814
        %1858 = vmatpush.msra.mxu0 %v1813
        %1859 = vmatpush.msra.mxu0 %v1812
        %1860 = vmatpush.msra.mxu0 %v1811
        %1861 = vmatpush.msra.mxu0 %v1810
        %1862 = vmatpush.msra.mxu0 %v1809
        %1863 = vmatmul.f32.gmra.mxu0 %v1843
        %v1864 = vpop.f32.mrf.mxu0
        %v1865 = vadd.f32 0.0, %v1864
        %1866 = vdwg.mxu0
        %1867 = vmatpush.msra.mxu0 %v1840
        %1868 = vmatpush.msra.mxu0 %v1839
        %1869 = vmatpush.msra.mxu0 %v1838
        %1870 = vmatpush.msra.mxu0 %v1837
        %1871 = vmatpush.msra.mxu0 %v1836
        %1872 = vmatpush.msra.mxu0 %v1835
        %1873 = vmatpush.msra.mxu0 %v1834
        %1874 = vmatpush.msra.mxu0 %v1833
        %1875 = vmatpush.msra.mxu0 %v1832
        %1876 = vmatpush.msra.mxu0 %v1831
        %1877 = vmatpush.msra.mxu0 %v1830
        %1878 = vmatpush.msra.mxu0 %v1829
        %1879 = vmatpush.msra.mxu0 %v1828
        %1880 = vmatpush.msra.mxu0 %v1827
        %1881 = vmatpush.msra.mxu0 %v1826
        %1882 = vmatpush.msra.mxu0 %v1825
        %1883 = vmatmul.f32.gmra.mxu0 %v1844
        %v1884 = vpop.f32.mrf.mxu0
        %v1885 = vadd.f32 %v1865, %v1884
        %1886 = vdwg.mxu0
        %v1887 = vrot.slane %v1392, 1
        %v1889 = vmul.f32 %v894, %v1887
        %v1890 = vmul.f32 %v1889, %v899
        %v1891 = vperm.slane %v1890, 0
        %v1892 = vmul.f32 %v1885, %v1891
        %v1893 = vadd.f32 %v1399, %v1892
        %v1894 = vxor.u32 %v1402, %v908
        %v1895 = vand.u32 %v1894, %v395
        %v1896 = vadd.s32 %v1407, %v912
        %vm1897 = vcmp.lt.s32.totalorder %v1896, 0
        %v1898 = vsub.s32 0, %v1896
        %v1899 = vsel %vm1897, %v1898, %v1896
        %vm1900 = vcmp.lt.s32.totalorder %v407, 0
        %v1901 = vsub.s32 0, %v407
        %v1902 = vsel %vm1900, %v1901, %v407
        %v1903 = vshrl.u32 %v1899, 31
        %v1905 = vor.u32 0, %v1903
        %v1906 = vshll.u32 %v1899, 1
        %v1907 = vadd.s32 %v1905, 2147483648
        %v1908 = vadd.s32 %v1902, 2147483648
        %vm1909 = vcmp.ge.s32.totalorder %v1907, %v1908
        %v1910 = vsub.s32 %v1905, %v1902
        %v1911 = vsel %vm1909, %v1910, %v1905
        %v1912 = vadd.s32 %v1906, 1
        %v1913 = vsel %vm1909, %v1912, %v1906
        %v1914 = vshrl.u32 %v1913, 31
        %v1915 = vshll.u32 %v1911, 1
        %v1916 = vor.u32 %v1915, %v1914
        %v1917 = vshll.u32 %v1913, 1
        %v1918 = vadd.s32 %v1916, 2147483648
        %v1919 = vadd.s32 %v1902, 2147483648
        %vm1920 = vcmp.ge.s32.totalorder %v1918, %v1919
        %v1921 = vsub.s32 %v1916, %v1902
        %v1922 = vsel %vm1920, %v1921, %v1916
        %v1923 = vadd.s32 %v1917, 1
        %v1924 = vsel %vm1920, %v1923, %v1917
        %v1925 = vshrl.u32 %v1924, 31
        %v1926 = vshll.u32 %v1922, 1
        %v1927 = vor.u32 %v1926, %v1925
        %v1928 = vshll.u32 %v1924, 1
        %v1929 = vadd.s32 %v1927, 2147483648
        %v1930 = vadd.s32 %v1902, 2147483648
        %vm1931 = vcmp.ge.s32.totalorder %v1929, %v1930
        %v1932 = vsub.s32 %v1927, %v1902
        %v1933 = vsel %vm1931, %v1932, %v1927
        %v1934 = vadd.s32 %v1928, 1
        %v1935 = vsel %vm1931, %v1934, %v1928
        %v1936 = vshrl.u32 %v1935, 31
        %v1937 = vshll.u32 %v1933, 1
        %v1938 = vor.u32 %v1937, %v1936
        %v1939 = vshll.u32 %v1935, 1
        %v1940 = vadd.s32 %v1938, 2147483648
        %v1941 = vadd.s32 %v1902, 2147483648
        %vm1942 = vcmp.ge.s32.totalorder %v1940, %v1941
        %v1943 = vsub.s32 %v1938, %v1902
        %v1944 = vsel %vm1942, %v1943, %v1938
        %v1945 = vadd.s32 %v1939, 1
        %v1946 = vsel %vm1942, %v1945, %v1939
        %v1947 = vshrl.u32 %v1946, 31
        %v1948 = vshll.u32 %v1944, 1
        %v1949 = vor.u32 %v1948, %v1947
        %v1950 = vshll.u32 %v1946, 1
        %v1951 = vadd.s32 %v1949, 2147483648
        %v1952 = vadd.s32 %v1902, 2147483648
        %vm1953 = vcmp.ge.s32.totalorder %v1951, %v1952
        %v1954 = vsub.s32 %v1949, %v1902
        %v1955 = vsel %vm1953, %v1954, %v1949
        %v1956 = vadd.s32 %v1950, 1
        %v1957 = vsel %vm1953, %v1956, %v1950
        %v1958 = vshrl.u32 %v1957, 31
        %v1959 = vshll.u32 %v1955, 1
        %v1960 = vor.u32 %v1959, %v1958
        %v1961 = vshll.u32 %v1957, 1
        %v1962 = vadd.s32 %v1960, 2147483648
        %v1963 = vadd.s32 %v1902, 2147483648
        %vm1964 = vcmp.ge.s32.totalorder %v1962, %v1963
        %v1965 = vsub.s32 %v1960, %v1902
        %v1966 = vsel %vm1964, %v1965, %v1960
        %v1967 = vadd.s32 %v1961, 1
        %v1968 = vsel %vm1964, %v1967, %v1961
        %v1969 = vshrl.u32 %v1968, 31
        %v1970 = vshll.u32 %v1966, 1
        %v1971 = vor.u32 %v1970, %v1969
        %v1972 = vshll.u32 %v1968, 1
        %v1973 = vadd.s32 %v1971, 2147483648
        %v1974 = vadd.s32 %v1902, 2147483648
        %vm1975 = vcmp.ge.s32.totalorder %v1973, %v1974
        %v1976 = vsub.s32 %v1971, %v1902
        %v1977 = vsel %vm1975, %v1976, %v1971
        %v1978 = vadd.s32 %v1972, 1
        %v1979 = vsel %vm1975, %v1978, %v1972
        %v1980 = vshrl.u32 %v1979, 31
        %v1981 = vshll.u32 %v1977, 1
        %v1982 = vor.u32 %v1981, %v1980
        %v1983 = vshll.u32 %v1979, 1
        %v1984 = vadd.s32 %v1982, 2147483648
        %v1985 = vadd.s32 %v1902, 2147483648
        %vm1986 = vcmp.ge.s32.totalorder %v1984, %v1985
        %v1987 = vsub.s32 %v1982, %v1902
        %v1988 = vsel %vm1986, %v1987, %v1982
        %v1989 = vadd.s32 %v1983, 1
        %v1990 = vsel %vm1986, %v1989, %v1983
        %v1991 = vshrl.u32 %v1990, 31
        %v1992 = vshll.u32 %v1988, 1
        %v1993 = vor.u32 %v1992, %v1991
        %v1994 = vshll.u32 %v1990, 1
        %v1995 = vadd.s32 %v1993, 2147483648
        %v1996 = vadd.s32 %v1902, 2147483648
        %vm1997 = vcmp.ge.s32.totalorder %v1995, %v1996
        %v1998 = vsub.s32 %v1993, %v1902
        %v1999 = vsel %vm1997, %v1998, %v1993
        %v2000 = vadd.s32 %v1994, 1
        %v2001 = vsel %vm1997, %v2000, %v1994
        %v2002 = vshrl.u32 %v2001, 31
        %v2003 = vshll.u32 %v1999, 1
        %v2004 = vor.u32 %v2003, %v2002
        %v2005 = vshll.u32 %v2001, 1
        %v2006 = vadd.s32 %v2004, 2147483648
        %v2007 = vadd.s32 %v1902, 2147483648
        %vm2008 = vcmp.ge.s32.totalorder %v2006, %v2007
        %v2009 = vsub.s32 %v2004, %v1902
        %v2010 = vsel %vm2008, %v2009, %v2004
        %v2011 = vadd.s32 %v2005, 1
        %v2012 = vsel %vm2008, %v2011, %v2005
        %v2013 = vshrl.u32 %v2012, 31
        %v2014 = vshll.u32 %v2010, 1
        %v2015 = vor.u32 %v2014, %v2013
        %v2016 = vshll.u32 %v2012, 1
        %v2017 = vadd.s32 %v2015, 2147483648
        %v2018 = vadd.s32 %v1902, 2147483648
        %vm2019 = vcmp.ge.s32.totalorder %v2017, %v2018
        %v2020 = vsub.s32 %v2015, %v1902
        %v2021 = vsel %vm2019, %v2020, %v2015
        %v2022 = vadd.s32 %v2016, 1
        %v2023 = vsel %vm2019, %v2022, %v2016
        %v2024 = vshrl.u32 %v2023, 31
        %v2025 = vshll.u32 %v2021, 1
        %v2026 = vor.u32 %v2025, %v2024
        %v2027 = vshll.u32 %v2023, 1
        %v2028 = vadd.s32 %v2026, 2147483648
        %v2029 = vadd.s32 %v1902, 2147483648
        %vm2030 = vcmp.ge.s32.totalorder %v2028, %v2029
        %v2031 = vsub.s32 %v2026, %v1902
        %v2032 = vsel %vm2030, %v2031, %v2026
        %v2033 = vadd.s32 %v2027, 1
        %v2034 = vsel %vm2030, %v2033, %v2027
        %v2035 = vshrl.u32 %v2034, 31
        %v2036 = vshll.u32 %v2032, 1
        %v2037 = vor.u32 %v2036, %v2035
        %v2038 = vshll.u32 %v2034, 1
        %v2039 = vadd.s32 %v2037, 2147483648
        %v2040 = vadd.s32 %v1902, 2147483648
        %vm2041 = vcmp.ge.s32.totalorder %v2039, %v2040
        %v2042 = vsub.s32 %v2037, %v1902
        %v2043 = vsel %vm2041, %v2042, %v2037
        %v2044 = vadd.s32 %v2038, 1
        %v2045 = vsel %vm2041, %v2044, %v2038
        %v2046 = vshrl.u32 %v2045, 31
        %v2047 = vshll.u32 %v2043, 1
        %v2048 = vor.u32 %v2047, %v2046
        %v2049 = vshll.u32 %v2045, 1
        %v2050 = vadd.s32 %v2048, 2147483648
        %v2051 = vadd.s32 %v1902, 2147483648
        %vm2052 = vcmp.ge.s32.totalorder %v2050, %v2051
        %v2053 = vsub.s32 %v2048, %v1902
        %v2054 = vsel %vm2052, %v2053, %v2048
        %v2055 = vadd.s32 %v2049, 1
        %v2056 = vsel %vm2052, %v2055, %v2049
        %v2057 = vshrl.u32 %v2056, 31
        %v2058 = vshll.u32 %v2054, 1
        %v2059 = vor.u32 %v2058, %v2057
        %v2060 = vshll.u32 %v2056, 1
        %v2061 = vadd.s32 %v2059, 2147483648
        %v2062 = vadd.s32 %v1902, 2147483648
        %vm2063 = vcmp.ge.s32.totalorder %v2061, %v2062
        %v2064 = vsub.s32 %v2059, %v1902
        %v2065 = vsel %vm2063, %v2064, %v2059
        %v2066 = vadd.s32 %v2060, 1
        %v2067 = vsel %vm2063, %v2066, %v2060
        %v2068 = vshrl.u32 %v2067, 31
        %v2069 = vshll.u32 %v2065, 1
        %v2070 = vor.u32 %v2069, %v2068
        %v2071 = vshll.u32 %v2067, 1
        %v2072 = vadd.s32 %v2070, 2147483648
        %v2073 = vadd.s32 %v1902, 2147483648
        %vm2074 = vcmp.ge.s32.totalorder %v2072, %v2073
        %v2075 = vsub.s32 %v2070, %v1902
        %v2076 = vsel %vm2074, %v2075, %v2070
        %v2077 = vadd.s32 %v2071, 1
        %v2078 = vsel %vm2074, %v2077, %v2071
        %v2079 = vshrl.u32 %v2078, 31
        %v2080 = vshll.u32 %v2076, 1
        %v2081 = vor.u32 %v2080, %v2079
        %v2082 = vshll.u32 %v2078, 1
        %v2083 = vadd.s32 %v2081, 2147483648
        %v2084 = vadd.s32 %v1902, 2147483648
        %vm2085 = vcmp.ge.s32.totalorder %v2083, %v2084
        %v2086 = vsub.s32 %v2081, %v1902
        %v2087 = vsel %vm2085, %v2086, %v2081
        %v2088 = vadd.s32 %v2082, 1
        %v2089 = vsel %vm2085, %v2088, %v2082
        %v2090 = vshrl.u32 %v2089, 31
        %v2091 = vshll.u32 %v2087, 1
        %v2092 = vor.u32 %v2091, %v2090
        %v2093 = vshll.u32 %v2089, 1
        %v2094 = vadd.s32 %v2092, 2147483648
        %v2095 = vadd.s32 %v1902, 2147483648
        %vm2096 = vcmp.ge.s32.totalorder %v2094, %v2095
        %v2097 = vsub.s32 %v2092, %v1902
        %v2098 = vsel %vm2096, %v2097, %v2092
        %v2099 = vadd.s32 %v2093, 1
        %v2100 = vsel %vm2096, %v2099, %v2093
        %v2101 = vshrl.u32 %v2100, 31
        %v2102 = vshll.u32 %v2098, 1
        %v2103 = vor.u32 %v2102, %v2101
        %v2104 = vshll.u32 %v2100, 1
        %v2105 = vadd.s32 %v2103, 2147483648
        %v2106 = vadd.s32 %v1902, 2147483648
        %vm2107 = vcmp.ge.s32.totalorder %v2105, %v2106
        %v2108 = vsub.s32 %v2103, %v1902
        %v2109 = vsel %vm2107, %v2108, %v2103
        %v2110 = vadd.s32 %v2104, 1
        %v2111 = vsel %vm2107, %v2110, %v2104
        %v2112 = vshrl.u32 %v2111, 31
        %v2113 = vshll.u32 %v2109, 1
        %v2114 = vor.u32 %v2113, %v2112
        %v2115 = vshll.u32 %v2111, 1
        %v2116 = vadd.s32 %v2114, 2147483648
        %v2117 = vadd.s32 %v1902, 2147483648
        %vm2118 = vcmp.ge.s32.totalorder %v2116, %v2117
        %v2119 = vsub.s32 %v2114, %v1902
        %v2120 = vsel %vm2118, %v2119, %v2114
        %v2121 = vadd.s32 %v2115, 1
        %v2122 = vsel %vm2118, %v2121, %v2115
        %v2123 = vshrl.u32 %v2122, 31
        %v2124 = vshll.u32 %v2120, 1
        %v2125 = vor.u32 %v2124, %v2123
        %v2126 = vshll.u32 %v2122, 1
        %v2127 = vadd.s32 %v2125, 2147483648
        %v2128 = vadd.s32 %v1902, 2147483648
        %vm2129 = vcmp.ge.s32.totalorder %v2127, %v2128
        %v2130 = vsub.s32 %v2125, %v1902
        %v2131 = vsel %vm2129, %v2130, %v2125
        %v2132 = vadd.s32 %v2126, 1
        %v2133 = vsel %vm2129, %v2132, %v2126
        %v2134 = vshrl.u32 %v2133, 31
        %v2135 = vshll.u32 %v2131, 1
        %v2136 = vor.u32 %v2135, %v2134
        %v2137 = vshll.u32 %v2133, 1
        %v2138 = vadd.s32 %v2136, 2147483648
        %v2139 = vadd.s32 %v1902, 2147483648
        %vm2140 = vcmp.ge.s32.totalorder %v2138, %v2139
        %v2141 = vsub.s32 %v2136, %v1902
        %v2142 = vsel %vm2140, %v2141, %v2136
        %v2143 = vadd.s32 %v2137, 1
        %v2144 = vsel %vm2140, %v2143, %v2137
        %v2145 = vshrl.u32 %v2144, 31
        %v2146 = vshll.u32 %v2142, 1
        %v2147 = vor.u32 %v2146, %v2145
        %v2148 = vshll.u32 %v2144, 1
        %v2149 = vadd.s32 %v2147, 2147483648
        %v2150 = vadd.s32 %v1902, 2147483648
        %vm2151 = vcmp.ge.s32.totalorder %v2149, %v2150
        %v2152 = vsub.s32 %v2147, %v1902
        %v2153 = vsel %vm2151, %v2152, %v2147
        %v2154 = vadd.s32 %v2148, 1
        %v2155 = vsel %vm2151, %v2154, %v2148
        %v2156 = vshrl.u32 %v2155, 31
        %v2157 = vshll.u32 %v2153, 1
        %v2158 = vor.u32 %v2157, %v2156
        %v2159 = vshll.u32 %v2155, 1
        %v2160 = vadd.s32 %v2158, 2147483648
        %v2161 = vadd.s32 %v1902, 2147483648
        %vm2162 = vcmp.ge.s32.totalorder %v2160, %v2161
        %v2163 = vsub.s32 %v2158, %v1902
        %v2164 = vsel %vm2162, %v2163, %v2158
        %v2165 = vadd.s32 %v2159, 1
        %v2166 = vsel %vm2162, %v2165, %v2159
        %v2167 = vshrl.u32 %v2166, 31
        %v2168 = vshll.u32 %v2164, 1
        %v2169 = vor.u32 %v2168, %v2167
        %v2170 = vshll.u32 %v2166, 1
        %v2171 = vadd.s32 %v2169, 2147483648
        %v2172 = vadd.s32 %v1902, 2147483648
        %vm2173 = vcmp.ge.s32.totalorder %v2171, %v2172
        %v2174 = vsub.s32 %v2169, %v1902
        %v2175 = vsel %vm2173, %v2174, %v2169
        %v2176 = vadd.s32 %v2170, 1
        %v2177 = vsel %vm2173, %v2176, %v2170
        %v2178 = vshrl.u32 %v2177, 31
        %v2179 = vshll.u32 %v2175, 1
        %v2180 = vor.u32 %v2179, %v2178
        %v2181 = vshll.u32 %v2177, 1
        %v2182 = vadd.s32 %v2180, 2147483648
        %v2183 = vadd.s32 %v1902, 2147483648
        %vm2184 = vcmp.ge.s32.totalorder %v2182, %v2183
        %v2185 = vsub.s32 %v2180, %v1902
        %v2186 = vsel %vm2184, %v2185, %v2180
        %v2187 = vadd.s32 %v2181, 1
        %v2188 = vsel %vm2184, %v2187, %v2181
        %v2189 = vshrl.u32 %v2188, 31
        %v2190 = vshll.u32 %v2186, 1
        %v2191 = vor.u32 %v2190, %v2189
        %v2192 = vshll.u32 %v2188, 1
        %v2193 = vadd.s32 %v2191, 2147483648
        %v2194 = vadd.s32 %v1902, 2147483648
        %vm2195 = vcmp.ge.s32.totalorder %v2193, %v2194
        %v2196 = vsub.s32 %v2191, %v1902
        %v2197 = vsel %vm2195, %v2196, %v2191
        %v2198 = vadd.s32 %v2192, 1
        %v2199 = vsel %vm2195, %v2198, %v2192
        %v2200 = vshrl.u32 %v2199, 31
        %v2201 = vshll.u32 %v2197, 1
        %v2202 = vor.u32 %v2201, %v2200
        %v2203 = vshll.u32 %v2199, 1
        %v2204 = vadd.s32 %v2202, 2147483648
        %v2205 = vadd.s32 %v1902, 2147483648
        %vm2206 = vcmp.ge.s32.totalorder %v2204, %v2205
        %v2207 = vsub.s32 %v2202, %v1902
        %v2208 = vsel %vm2206, %v2207, %v2202
        %v2209 = vadd.s32 %v2203, 1
        %v2210 = vsel %vm2206, %v2209, %v2203
        %v2211 = vshrl.u32 %v2210, 31
        %v2212 = vshll.u32 %v2208, 1
        %v2213 = vor.u32 %v2212, %v2211
        %v2214 = vshll.u32 %v2210, 1
        %v2215 = vadd.s32 %v2213, 2147483648
        %v2216 = vadd.s32 %v1902, 2147483648
        %vm2217 = vcmp.ge.s32.totalorder %v2215, %v2216
        %v2218 = vsub.s32 %v2213, %v1902
        %v2219 = vsel %vm2217, %v2218, %v2213
        %v2220 = vadd.s32 %v2214, 1
        %v2221 = vsel %vm2217, %v2220, %v2214
        %v2222 = vshrl.u32 %v2221, 31
        %v2223 = vshll.u32 %v2219, 1
        %v2224 = vor.u32 %v2223, %v2222
        %v2225 = vshll.u32 %v2221, 1
        %v2226 = vadd.s32 %v2224, 2147483648
        %v2227 = vadd.s32 %v1902, 2147483648
        %vm2228 = vcmp.ge.s32.totalorder %v2226, %v2227
        %v2229 = vsub.s32 %v2224, %v1902
        %v2230 = vsel %vm2228, %v2229, %v2224
        %v2231 = vadd.s32 %v2225, 1
        %v2232 = vsel %vm2228, %v2231, %v2225
        %v2233 = vshrl.u32 %v2232, 31
        %v2234 = vshll.u32 %v2230, 1
        %v2235 = vor.u32 %v2234, %v2233
        %v2236 = vshll.u32 %v2232, 1
        %v2237 = vadd.s32 %v2235, 2147483648
        %v2238 = vadd.s32 %v1902, 2147483648
        %vm2239 = vcmp.ge.s32.totalorder %v2237, %v2238
        %v2240 = vsub.s32 %v2235, %v1902
        %v2241 = vsel %vm2239, %v2240, %v2235
        %v2242 = vadd.s32 %v2236, 1
        %v2243 = vsel %vm2239, %v2242, %v2236
        %v2244 = vshrl.u32 %v2243, 31
        %v2245 = vshll.u32 %v2241, 1
        %v2246 = vor.u32 %v2245, %v2244
        %v2247 = vshll.u32 %v2243, 1
        %v2248 = vadd.s32 %v2246, 2147483648
        %v2249 = vadd.s32 %v1902, 2147483648
        %vm2250 = vcmp.ge.s32.totalorder %v2248, %v2249
        %v2251 = vsub.s32 %v2246, %v1902
        %v2252 = vsel %vm2250, %v2251, %v2246
        %v2253 = vadd.s32 %v2247, 1
        %v2254 = vsel %vm2250, %v2253, %v2247
        %v2255 = vsub.s32 0, %v2252
        %v2256 = vsel %vm1897, %v2255, %v2252
        %vm2257 = vcmp.ne.s32.totalorder %v2256, 0
        %vm2258 = vcmp.lt.s32.totalorder %v2256, 0
        %vm2259 = vmxor %vm2258, %vm773
        %vm2260 = vmand %vm2259, %vm2257
        %v2261 = vadd.s32 %v2256, %v407
        %v2262 = vsel %vm2260, %v2261, %v2256
        %v2263 = vsel %vm780, %v1895, %v2262
        %v2264 = vperm.slane %v2263, 0
        %vm2265 = vcmp.eq.s32.totalorder %v356, %v2264
        %vm2266 = vcmp.eq.s32.totalorder %v357, %v2264
        %vm2267 = vcmp.eq.s32.totalorder %v358, %v2264
        %vm2268 = vcmp.eq.s32.totalorder %v359, %v2264
        %vm2269 = vcmp.eq.s32.totalorder %v360, %v2264
        %vm2270 = vcmp.eq.s32.totalorder %v361, %v2264
        %vm2271 = vcmp.eq.s32.totalorder %v362, %v2264
        %vm2272 = vcmp.eq.s32.totalorder %v363, %v2264
        %vm2273 = vcmp.eq.s32.totalorder %v364, %v2264
        %vm2274 = vcmp.eq.s32.totalorder %v365, %v2264
        %vm2275 = vcmp.eq.s32.totalorder %v366, %v2264
        %vm2276 = vcmp.eq.s32.totalorder %v367, %v2264
        %vm2277 = vcmp.eq.s32.totalorder %v368, %v2264
        %vm2278 = vcmp.eq.s32.totalorder %v369, %v2264
        %vm2279 = vcmp.eq.s32.totalorder %v370, %v2264
        %vm2280 = vcmp.eq.s32.totalorder %v371, %v2264
        %vm2281 = vcmp.eq.s32.totalorder %v372, %v2264
        %vm2282 = vcmp.eq.s32.totalorder %v373, %v2264
        %vm2283 = vcmp.eq.s32.totalorder %v374, %v2264
        %vm2284 = vcmp.eq.s32.totalorder %v375, %v2264
        %vm2285 = vcmp.eq.s32.totalorder %v376, %v2264
        %vm2286 = vcmp.eq.s32.totalorder %v377, %v2264
        %vm2287 = vcmp.eq.s32.totalorder %v378, %v2264
        %vm2288 = vcmp.eq.s32.totalorder %v379, %v2264
        %vm2289 = vcmp.eq.s32.totalorder %v380, %v2264
        %vm2290 = vcmp.eq.s32.totalorder %v381, %v2264
        %vm2291 = vcmp.eq.s32.totalorder %v382, %v2264
        %vm2292 = vcmp.eq.s32.totalorder %v383, %v2264
        %vm2293 = vcmp.eq.s32.totalorder %v384, %v2264
        %vm2294 = vcmp.eq.s32.totalorder %v385, %v2264
        %vm2295 = vcmp.eq.s32.totalorder %v386, %v2264
        %vm2296 = vcmp.eq.s32.totalorder %v387, %v2264
        %v2297 = vsel %vm2265, 1.0, 0.0
        %v2298 = vsel %vm2266, 1.0, 0.0
        %v2299 = vsel %vm2267, 1.0, 0.0
        %v2300 = vsel %vm2268, 1.0, 0.0
        %v2301 = vsel %vm2269, 1.0, 0.0
        %v2302 = vsel %vm2270, 1.0, 0.0
        %v2303 = vsel %vm2271, 1.0, 0.0
        %v2304 = vsel %vm2272, 1.0, 0.0
        %v2305 = vsel %vm2273, 1.0, 0.0
        %v2306 = vsel %vm2274, 1.0, 0.0
        %v2307 = vsel %vm2275, 1.0, 0.0
        %v2308 = vsel %vm2276, 1.0, 0.0
        %v2309 = vsel %vm2277, 1.0, 0.0
        %v2310 = vsel %vm2278, 1.0, 0.0
        %v2311 = vsel %vm2279, 1.0, 0.0
        %v2312 = vsel %vm2280, 1.0, 0.0
        %v2313 = vsel %vm2281, 1.0, 0.0
        %v2314 = vsel %vm2282, 1.0, 0.0
        %v2315 = vsel %vm2283, 1.0, 0.0
        %v2316 = vsel %vm2284, 1.0, 0.0
        %v2317 = vsel %vm2285, 1.0, 0.0
        %v2318 = vsel %vm2286, 1.0, 0.0
        %v2319 = vsel %vm2287, 1.0, 0.0
        %v2320 = vsel %vm2288, 1.0, 0.0
        %v2321 = vsel %vm2289, 1.0, 0.0
        %v2322 = vsel %vm2290, 1.0, 0.0
        %v2323 = vsel %vm2291, 1.0, 0.0
        %v2324 = vsel %vm2292, 1.0, 0.0
        %v2325 = vsel %vm2293, 1.0, 0.0
        %v2326 = vsel %vm2294, 1.0, 0.0
        %v2327 = vsel %vm2295, 1.0, 0.0
        %v2328 = vsel %vm2296, 1.0, 0.0
        %2329 = vst [vmem:[#allocation1] ss:$4 sm:$0xff] %v352
        %v2330 = vld.sshfl [vmem:[#allocation1 + $0x10] sm:$0xff pattern:$0x73625140]
        %v2331 = vld.sshfl [vmem:[#allocation1 + $0x18] sm:$0xff pattern:$0x73625140]
        %2334 = vmatpush.msra.mxu0 %v2312
        %2335 = vmatpush.msra.mxu0 %v2311
        %2336 = vmatpush.msra.mxu0 %v2310
        %2337 = vmatpush.msra.mxu0 %v2309
        %2338 = vmatpush.msra.mxu0 %v2308
        %2339 = vmatpush.msra.mxu0 %v2307
        %2340 = vmatpush.msra.mxu0 %v2306
        %2341 = vmatpush.msra.mxu0 %v2305
        %2342 = vmatpush.msra.mxu0 %v2304
        %2343 = vmatpush.msra.mxu0 %v2303
        %2344 = vmatpush.msra.mxu0 %v2302
        %2345 = vmatpush.msra.mxu0 %v2301
        %2346 = vmatpush.msra.mxu0 %v2300
        %2347 = vmatpush.msra.mxu0 %v2299
        %2348 = vmatpush.msra.mxu0 %v2298
        %2349 = vmatpush.msra.mxu0 %v2297
        %2350 = vmatmul.f32.gmra.mxu0 %v2330
        %v2351 = vpop.f32.mrf.mxu0
        %v2352 = vadd.f32 0.0, %v2351
        %2353 = vdwg.mxu0
        %2354 = vmatpush.msra.mxu0 %v2328
        %2355 = vmatpush.msra.mxu0 %v2327
        %2356 = vmatpush.msra.mxu0 %v2326
        %2357 = vmatpush.msra.mxu0 %v2325
        %2358 = vmatpush.msra.mxu0 %v2324
        %2359 = vmatpush.msra.mxu0 %v2323
        %2360 = vmatpush.msra.mxu0 %v2322
        %2361 = vmatpush.msra.mxu0 %v2321
        %2362 = vmatpush.msra.mxu0 %v2320
        %2363 = vmatpush.msra.mxu0 %v2319
        %2364 = vmatpush.msra.mxu0 %v2318
        %2365 = vmatpush.msra.mxu0 %v2317
        %2366 = vmatpush.msra.mxu0 %v2316
        %2367 = vmatpush.msra.mxu0 %v2315
        %2368 = vmatpush.msra.mxu0 %v2314
        %2369 = vmatpush.msra.mxu0 %v2313
        %2370 = vmatmul.f32.gmra.mxu0 %v2331
        %v2371 = vpop.f32.mrf.mxu0
        %v2372 = vadd.f32 %v2352, %v2371
        %2373 = vdwg.mxu0
        %v2374 = vmul.f32 %v1889, %v1394
        %v2375 = vperm.slane %v2374, 0
        %v2376 = vmul.f32 %v2372, %v2375
        %v2377 = vadd.f32 %v1893, %v2376
        %v2378 = vxor.u32 %v906, %v390
        %v2379 = vxor.u32 %v2378, %v393
        %v2380 = vand.u32 %v2379, %v395
        %v2381 = vadd.s32 %v906, %v399
        %v2382 = vadd.s32 %v2381, %v403
        %vm2383 = vcmp.lt.s32.totalorder %v2382, 0
        %v2384 = vsub.s32 0, %v2382
        %v2385 = vsel %vm2383, %v2384, %v2382
        %vm2386 = vcmp.lt.s32.totalorder %v407, 0
        %v2387 = vsub.s32 0, %v407
        %v2388 = vsel %vm2386, %v2387, %v407
        %v2389 = vshrl.u32 %v2385, 31
        %v2391 = vor.u32 0, %v2389
        %v2392 = vshll.u32 %v2385, 1
        %v2393 = vadd.s32 %v2391, 2147483648
        %v2394 = vadd.s32 %v2388, 2147483648
        %vm2395 = vcmp.ge.s32.totalorder %v2393, %v2394
        %v2396 = vsub.s32 %v2391, %v2388
        %v2397 = vsel %vm2395, %v2396, %v2391
        %v2398 = vadd.s32 %v2392, 1
        %v2399 = vsel %vm2395, %v2398, %v2392
        %v2400 = vshrl.u32 %v2399, 31
        %v2401 = vshll.u32 %v2397, 1
        %v2402 = vor.u32 %v2401, %v2400
        %v2403 = vshll.u32 %v2399, 1
        %v2404 = vadd.s32 %v2402, 2147483648
        %v2405 = vadd.s32 %v2388, 2147483648
        %vm2406 = vcmp.ge.s32.totalorder %v2404, %v2405
        %v2407 = vsub.s32 %v2402, %v2388
        %v2408 = vsel %vm2406, %v2407, %v2402
        %v2409 = vadd.s32 %v2403, 1
        %v2410 = vsel %vm2406, %v2409, %v2403
        %v2411 = vshrl.u32 %v2410, 31
        %v2412 = vshll.u32 %v2408, 1
        %v2413 = vor.u32 %v2412, %v2411
        %v2414 = vshll.u32 %v2410, 1
        %v2415 = vadd.s32 %v2413, 2147483648
        %v2416 = vadd.s32 %v2388, 2147483648
        %vm2417 = vcmp.ge.s32.totalorder %v2415, %v2416
        %v2418 = vsub.s32 %v2413, %v2388
        %v2419 = vsel %vm2417, %v2418, %v2413
        %v2420 = vadd.s32 %v2414, 1
        %v2421 = vsel %vm2417, %v2420, %v2414
        %v2422 = vshrl.u32 %v2421, 31
        %v2423 = vshll.u32 %v2419, 1
        %v2424 = vor.u32 %v2423, %v2422
        %v2425 = vshll.u32 %v2421, 1
        %v2426 = vadd.s32 %v2424, 2147483648
        %v2427 = vadd.s32 %v2388, 2147483648
        %vm2428 = vcmp.ge.s32.totalorder %v2426, %v2427
        %v2429 = vsub.s32 %v2424, %v2388
        %v2430 = vsel %vm2428, %v2429, %v2424
        %v2431 = vadd.s32 %v2425, 1
        %v2432 = vsel %vm2428, %v2431, %v2425
        %v2433 = vshrl.u32 %v2432, 31
        %v2434 = vshll.u32 %v2430, 1
        %v2435 = vor.u32 %v2434, %v2433
        %v2436 = vshll.u32 %v2432, 1
        %v2437 = vadd.s32 %v2435, 2147483648
        %v2438 = vadd.s32 %v2388, 2147483648
        %vm2439 = vcmp.ge.s32.totalorder %v2437, %v2438
        %v2440 = vsub.s32 %v2435, %v2388
        %v2441 = vsel %vm2439, %v2440, %v2435
        %v2442 = vadd.s32 %v2436, 1
        %v2443 = vsel %vm2439, %v2442, %v2436
        %v2444 = vshrl.u32 %v2443, 31
        %v2445 = vshll.u32 %v2441, 1
        %v2446 = vor.u32 %v2445, %v2444
        %v2447 = vshll.u32 %v2443, 1
        %v2448 = vadd.s32 %v2446, 2147483648
        %v2449 = vadd.s32 %v2388, 2147483648
        %vm2450 = vcmp.ge.s32.totalorder %v2448, %v2449
        %v2451 = vsub.s32 %v2446, %v2388
        %v2452 = vsel %vm2450, %v2451, %v2446
        %v2453 = vadd.s32 %v2447, 1
        %v2454 = vsel %vm2450, %v2453, %v2447
        %v2455 = vshrl.u32 %v2454, 31
        %v2456 = vshll.u32 %v2452, 1
        %v2457 = vor.u32 %v2456, %v2455
        %v2458 = vshll.u32 %v2454, 1
        %v2459 = vadd.s32 %v2457, 2147483648
        %v2460 = vadd.s32 %v2388, 2147483648
        %vm2461 = vcmp.ge.s32.totalorder %v2459, %v2460
        %v2462 = vsub.s32 %v2457, %v2388
        %v2463 = vsel %vm2461, %v2462, %v2457
        %v2464 = vadd.s32 %v2458, 1
        %v2465 = vsel %vm2461, %v2464, %v2458
        %v2466 = vshrl.u32 %v2465, 31
        %v2467 = vshll.u32 %v2463, 1
        %v2468 = vor.u32 %v2467, %v2466
        %v2469 = vshll.u32 %v2465, 1
        %v2470 = vadd.s32 %v2468, 2147483648
        %v2471 = vadd.s32 %v2388, 2147483648
        %vm2472 = vcmp.ge.s32.totalorder %v2470, %v2471
        %v2473 = vsub.s32 %v2468, %v2388
        %v2474 = vsel %vm2472, %v2473, %v2468
        %v2475 = vadd.s32 %v2469, 1
        %v2476 = vsel %vm2472, %v2475, %v2469
        %v2477 = vshrl.u32 %v2476, 31
        %v2478 = vshll.u32 %v2474, 1
        %v2479 = vor.u32 %v2478, %v2477
        %v2480 = vshll.u32 %v2476, 1
        %v2481 = vadd.s32 %v2479, 2147483648
        %v2482 = vadd.s32 %v2388, 2147483648
        %vm2483 = vcmp.ge.s32.totalorder %v2481, %v2482
        %v2484 = vsub.s32 %v2479, %v2388
        %v2485 = vsel %vm2483, %v2484, %v2479
        %v2486 = vadd.s32 %v2480, 1
        %v2487 = vsel %vm2483, %v2486, %v2480
        %v2488 = vshrl.u32 %v2487, 31
        %v2489 = vshll.u32 %v2485, 1
        %v2490 = vor.u32 %v2489, %v2488
        %v2491 = vshll.u32 %v2487, 1
        %v2492 = vadd.s32 %v2490, 2147483648
        %v2493 = vadd.s32 %v2388, 2147483648
        %vm2494 = vcmp.ge.s32.totalorder %v2492, %v2493
        %v2495 = vsub.s32 %v2490, %v2388
        %v2496 = vsel %vm2494, %v2495, %v2490
        %v2497 = vadd.s32 %v2491, 1
        %v2498 = vsel %vm2494, %v2497, %v2491
        %v2499 = vshrl.u32 %v2498, 31
        %v2500 = vshll.u32 %v2496, 1
        %v2501 = vor.u32 %v2500, %v2499
        %v2502 = vshll.u32 %v2498, 1
        %v2503 = vadd.s32 %v2501, 2147483648
        %v2504 = vadd.s32 %v2388, 2147483648
        %vm2505 = vcmp.ge.s32.totalorder %v2503, %v2504
        %v2506 = vsub.s32 %v2501, %v2388
        %v2507 = vsel %vm2505, %v2506, %v2501
        %v2508 = vadd.s32 %v2502, 1
        %v2509 = vsel %vm2505, %v2508, %v2502
        %v2510 = vshrl.u32 %v2509, 31
        %v2511 = vshll.u32 %v2507, 1
        %v2512 = vor.u32 %v2511, %v2510
        %v2513 = vshll.u32 %v2509, 1
        %v2514 = vadd.s32 %v2512, 2147483648
        %v2515 = vadd.s32 %v2388, 2147483648
        %vm2516 = vcmp.ge.s32.totalorder %v2514, %v2515
        %v2517 = vsub.s32 %v2512, %v2388
        %v2518 = vsel %vm2516, %v2517, %v2512
        %v2519 = vadd.s32 %v2513, 1
        %v2520 = vsel %vm2516, %v2519, %v2513
        %v2521 = vshrl.u32 %v2520, 31
        %v2522 = vshll.u32 %v2518, 1
        %v2523 = vor.u32 %v2522, %v2521
        %v2524 = vshll.u32 %v2520, 1
        %v2525 = vadd.s32 %v2523, 2147483648
        %v2526 = vadd.s32 %v2388, 2147483648
        %vm2527 = vcmp.ge.s32.totalorder %v2525, %v2526
        %v2528 = vsub.s32 %v2523, %v2388
        %v2529 = vsel %vm2527, %v2528, %v2523
        %v2530 = vadd.s32 %v2524, 1
        %v2531 = vsel %vm2527, %v2530, %v2524
        %v2532 = vshrl.u32 %v2531, 31
        %v2533 = vshll.u32 %v2529, 1
        %v2534 = vor.u32 %v2533, %v2532
        %v2535 = vshll.u32 %v2531, 1
        %v2536 = vadd.s32 %v2534, 2147483648
        %v2537 = vadd.s32 %v2388, 2147483648
        %vm2538 = vcmp.ge.s32.totalorder %v2536, %v2537
        %v2539 = vsub.s32 %v2534, %v2388
        %v2540 = vsel %vm2538, %v2539, %v2534
        %v2541 = vadd.s32 %v2535, 1
        %v2542 = vsel %vm2538, %v2541, %v2535
        %v2543 = vshrl.u32 %v2542, 31
        %v2544 = vshll.u32 %v2540, 1
        %v2545 = vor.u32 %v2544, %v2543
        %v2546 = vshll.u32 %v2542, 1
        %v2547 = vadd.s32 %v2545, 2147483648
        %v2548 = vadd.s32 %v2388, 2147483648
        %vm2549 = vcmp.ge.s32.totalorder %v2547, %v2548
        %v2550 = vsub.s32 %v2545, %v2388
        %v2551 = vsel %vm2549, %v2550, %v2545
        %v2552 = vadd.s32 %v2546, 1
        %v2553 = vsel %vm2549, %v2552, %v2546
        %v2554 = vshrl.u32 %v2553, 31
        %v2555 = vshll.u32 %v2551, 1
        %v2556 = vor.u32 %v2555, %v2554
        %v2557 = vshll.u32 %v2553, 1
        %v2558 = vadd.s32 %v2556, 2147483648
        %v2559 = vadd.s32 %v2388, 2147483648
        %vm2560 = vcmp.ge.s32.totalorder %v2558, %v2559
        %v2561 = vsub.s32 %v2556, %v2388
        %v2562 = vsel %vm2560, %v2561, %v2556
        %v2563 = vadd.s32 %v2557, 1
        %v2564 = vsel %vm2560, %v2563, %v2557
        %v2565 = vshrl.u32 %v2564, 31
        %v2566 = vshll.u32 %v2562, 1
        %v2567 = vor.u32 %v2566, %v2565
        %v2568 = vshll.u32 %v2564, 1
        %v2569 = vadd.s32 %v2567, 2147483648
        %v2570 = vadd.s32 %v2388, 2147483648
        %vm2571 = vcmp.ge.s32.totalorder %v2569, %v2570
        %v2572 = vsub.s32 %v2567, %v2388
        %v2573 = vsel %vm2571, %v2572, %v2567
        %v2574 = vadd.s32 %v2568, 1
        %v2575 = vsel %vm2571, %v2574, %v2568
        %v2576 = vshrl.u32 %v2575, 31
        %v2577 = vshll.u32 %v2573, 1
        %v2578 = vor.u32 %v2577, %v2576
        %v2579 = vshll.u32 %v2575, 1
        %v2580 = vadd.s32 %v2578, 2147483648
        %v2581 = vadd.s32 %v2388, 2147483648
        %vm2582 = vcmp.ge.s32.totalorder %v2580, %v2581
        %v2583 = vsub.s32 %v2578, %v2388
        %v2584 = vsel %vm2582, %v2583, %v2578
        %v2585 = vadd.s32 %v2579, 1
        %v2586 = vsel %vm2582, %v2585, %v2579
        %v2587 = vshrl.u32 %v2586, 31
        %v2588 = vshll.u32 %v2584, 1
        %v2589 = vor.u32 %v2588, %v2587
        %v2590 = vshll.u32 %v2586, 1
        %v2591 = vadd.s32 %v2589, 2147483648
        %v2592 = vadd.s32 %v2388, 2147483648
        %vm2593 = vcmp.ge.s32.totalorder %v2591, %v2592
        %v2594 = vsub.s32 %v2589, %v2388
        %v2595 = vsel %vm2593, %v2594, %v2589
        %v2596 = vadd.s32 %v2590, 1
        %v2597 = vsel %vm2593, %v2596, %v2590
        %v2598 = vshrl.u32 %v2597, 31
        %v2599 = vshll.u32 %v2595, 1
        %v2600 = vor.u32 %v2599, %v2598
        %v2601 = vshll.u32 %v2597, 1
        %v2602 = vadd.s32 %v2600, 2147483648
        %v2603 = vadd.s32 %v2388, 2147483648
        %vm2604 = vcmp.ge.s32.totalorder %v2602, %v2603
        %v2605 = vsub.s32 %v2600, %v2388
        %v2606 = vsel %vm2604, %v2605, %v2600
        %v2607 = vadd.s32 %v2601, 1
        %v2608 = vsel %vm2604, %v2607, %v2601
        %v2609 = vshrl.u32 %v2608, 31
        %v2610 = vshll.u32 %v2606, 1
        %v2611 = vor.u32 %v2610, %v2609
        %v2612 = vshll.u32 %v2608, 1
        %v2613 = vadd.s32 %v2611, 2147483648
        %v2614 = vadd.s32 %v2388, 2147483648
        %vm2615 = vcmp.ge.s32.totalorder %v2613, %v2614
        %v2616 = vsub.s32 %v2611, %v2388
        %v2617 = vsel %vm2615, %v2616, %v2611
        %v2618 = vadd.s32 %v2612, 1
        %v2619 = vsel %vm2615, %v2618, %v2612
        %v2620 = vshrl.u32 %v2619, 31
        %v2621 = vshll.u32 %v2617, 1
        %v2622 = vor.u32 %v2621, %v2620
        %v2623 = vshll.u32 %v2619, 1
        %v2624 = vadd.s32 %v2622, 2147483648
        %v2625 = vadd.s32 %v2388, 2147483648
        %vm2626 = vcmp.ge.s32.totalorder %v2624, %v2625
        %v2627 = vsub.s32 %v2622, %v2388
        %v2628 = vsel %vm2626, %v2627, %v2622
        %v2629 = vadd.s32 %v2623, 1
        %v2630 = vsel %vm2626, %v2629, %v2623
        %v2631 = vshrl.u32 %v2630, 31
        %v2632 = vshll.u32 %v2628, 1
        %v2633 = vor.u32 %v2632, %v2631
        %v2634 = vshll.u32 %v2630, 1
        %v2635 = vadd.s32 %v2633, 2147483648
        %v2636 = vadd.s32 %v2388, 2147483648
        %vm2637 = vcmp.ge.s32.totalorder %v2635, %v2636
        %v2638 = vsub.s32 %v2633, %v2388
        %v2639 = vsel %vm2637, %v2638, %v2633
        %v2640 = vadd.s32 %v2634, 1
        %v2641 = vsel %vm2637, %v2640, %v2634
        %v2642 = vshrl.u32 %v2641, 31
        %v2643 = vshll.u32 %v2639, 1
        %v2644 = vor.u32 %v2643, %v2642
        %v2645 = vshll.u32 %v2641, 1
        %v2646 = vadd.s32 %v2644, 2147483648
        %v2647 = vadd.s32 %v2388, 2147483648
        %vm2648 = vcmp.ge.s32.totalorder %v2646, %v2647
        %v2649 = vsub.s32 %v2644, %v2388
        %v2650 = vsel %vm2648, %v2649, %v2644
        %v2651 = vadd.s32 %v2645, 1
        %v2652 = vsel %vm2648, %v2651, %v2645
        %v2653 = vshrl.u32 %v2652, 31
        %v2654 = vshll.u32 %v2650, 1
        %v2655 = vor.u32 %v2654, %v2653
        %v2656 = vshll.u32 %v2652, 1
        %v2657 = vadd.s32 %v2655, 2147483648
        %v2658 = vadd.s32 %v2388, 2147483648
        %vm2659 = vcmp.ge.s32.totalorder %v2657, %v2658
        %v2660 = vsub.s32 %v2655, %v2388
        %v2661 = vsel %vm2659, %v2660, %v2655
        %v2662 = vadd.s32 %v2656, 1
        %v2663 = vsel %vm2659, %v2662, %v2656
        %v2664 = vshrl.u32 %v2663, 31
        %v2665 = vshll.u32 %v2661, 1
        %v2666 = vor.u32 %v2665, %v2664
        %v2667 = vshll.u32 %v2663, 1
        %v2668 = vadd.s32 %v2666, 2147483648
        %v2669 = vadd.s32 %v2388, 2147483648
        %vm2670 = vcmp.ge.s32.totalorder %v2668, %v2669
        %v2671 = vsub.s32 %v2666, %v2388
        %v2672 = vsel %vm2670, %v2671, %v2666
        %v2673 = vadd.s32 %v2667, 1
        %v2674 = vsel %vm2670, %v2673, %v2667
        %v2675 = vshrl.u32 %v2674, 31
        %v2676 = vshll.u32 %v2672, 1
        %v2677 = vor.u32 %v2676, %v2675
        %v2678 = vshll.u32 %v2674, 1
        %v2679 = vadd.s32 %v2677, 2147483648
        %v2680 = vadd.s32 %v2388, 2147483648
        %vm2681 = vcmp.ge.s32.totalorder %v2679, %v2680
        %v2682 = vsub.s32 %v2677, %v2388
        %v2683 = vsel %vm2681, %v2682, %v2677
        %v2684 = vadd.s32 %v2678, 1
        %v2685 = vsel %vm2681, %v2684, %v2678
        %v2686 = vshrl.u32 %v2685, 31
        %v2687 = vshll.u32 %v2683, 1
        %v2688 = vor.u32 %v2687, %v2686
        %v2689 = vshll.u32 %v2685, 1
        %v2690 = vadd.s32 %v2688, 2147483648
        %v2691 = vadd.s32 %v2388, 2147483648
        %vm2692 = vcmp.ge.s32.totalorder %v2690, %v2691
        %v2693 = vsub.s32 %v2688, %v2388
        %v2694 = vsel %vm2692, %v2693, %v2688
        %v2695 = vadd.s32 %v2689, 1
        %v2696 = vsel %vm2692, %v2695, %v2689
        %v2697 = vshrl.u32 %v2696, 31
        %v2698 = vshll.u32 %v2694, 1
        %v2699 = vor.u32 %v2698, %v2697
        %v2700 = vshll.u32 %v2696, 1
        %v2701 = vadd.s32 %v2699, 2147483648
        %v2702 = vadd.s32 %v2388, 2147483648
        %vm2703 = vcmp.ge.s32.totalorder %v2701, %v2702
        %v2704 = vsub.s32 %v2699, %v2388
        %v2705 = vsel %vm2703, %v2704, %v2699
        %v2706 = vadd.s32 %v2700, 1
        %v2707 = vsel %vm2703, %v2706, %v2700
        %v2708 = vshrl.u32 %v2707, 31
        %v2709 = vshll.u32 %v2705, 1
        %v2710 = vor.u32 %v2709, %v2708
        %v2711 = vshll.u32 %v2707, 1
        %v2712 = vadd.s32 %v2710, 2147483648
        %v2713 = vadd.s32 %v2388, 2147483648
        %vm2714 = vcmp.ge.s32.totalorder %v2712, %v2713
        %v2715 = vsub.s32 %v2710, %v2388
        %v2716 = vsel %vm2714, %v2715, %v2710
        %v2717 = vadd.s32 %v2711, 1
        %v2718 = vsel %vm2714, %v2717, %v2711
        %v2719 = vshrl.u32 %v2718, 31
        %v2720 = vshll.u32 %v2716, 1
        %v2721 = vor.u32 %v2720, %v2719
        %v2722 = vshll.u32 %v2718, 1
        %v2723 = vadd.s32 %v2721, 2147483648
        %v2724 = vadd.s32 %v2388, 2147483648
        %vm2725 = vcmp.ge.s32.totalorder %v2723, %v2724
        %v2726 = vsub.s32 %v2721, %v2388
        %v2727 = vsel %vm2725, %v2726, %v2721
        %v2728 = vadd.s32 %v2722, 1
        %v2729 = vsel %vm2725, %v2728, %v2722
        %v2730 = vshrl.u32 %v2729, 31
        %v2731 = vshll.u32 %v2727, 1
        %v2732 = vor.u32 %v2731, %v2730
        %v2733 = vshll.u32 %v2729, 1
        %v2734 = vadd.s32 %v2732, 2147483648
        %v2735 = vadd.s32 %v2388, 2147483648
        %vm2736 = vcmp.ge.s32.totalorder %v2734, %v2735
        %v2737 = vsub.s32 %v2732, %v2388
        %v2738 = vsel %vm2736, %v2737, %v2732
        %v2739 = vadd.s32 %v2733, 1
        %v2740 = vsel %vm2736, %v2739, %v2733
        %v2741 = vsub.s32 0, %v2738
        %v2742 = vsel %vm2383, %v2741, %v2738
        %vm2743 = vcmp.ne.s32.totalorder %v2742, 0
        %vm2744 = vcmp.lt.s32.totalorder %v2742, 0
        %vm2745 = vmxor %vm2744, %vm773
        %vm2746 = vmand %vm2745, %vm2743
        %v2747 = vadd.s32 %v2742, %v407
        %v2748 = vsel %vm2746, %v2747, %v2742
        %v2749 = vsel %vm780, %v2380, %v2748
        %v2750 = vperm.slane %v2749, 0
        %vm2751 = vcmp.eq.s32.totalorder %v356, %v2750
        %vm2752 = vcmp.eq.s32.totalorder %v357, %v2750
        %vm2753 = vcmp.eq.s32.totalorder %v358, %v2750
        %vm2754 = vcmp.eq.s32.totalorder %v359, %v2750
        %vm2755 = vcmp.eq.s32.totalorder %v360, %v2750
        %vm2756 = vcmp.eq.s32.totalorder %v361, %v2750
        %vm2757 = vcmp.eq.s32.totalorder %v362, %v2750
        %vm2758 = vcmp.eq.s32.totalorder %v363, %v2750
        %vm2759 = vcmp.eq.s32.totalorder %v364, %v2750
        %vm2760 = vcmp.eq.s32.totalorder %v365, %v2750
        %vm2761 = vcmp.eq.s32.totalorder %v366, %v2750
        %vm2762 = vcmp.eq.s32.totalorder %v367, %v2750
        %vm2763 = vcmp.eq.s32.totalorder %v368, %v2750
        %vm2764 = vcmp.eq.s32.totalorder %v369, %v2750
        %vm2765 = vcmp.eq.s32.totalorder %v370, %v2750
        %vm2766 = vcmp.eq.s32.totalorder %v371, %v2750
        %vm2767 = vcmp.eq.s32.totalorder %v372, %v2750
        %vm2768 = vcmp.eq.s32.totalorder %v373, %v2750
        %vm2769 = vcmp.eq.s32.totalorder %v374, %v2750
        %vm2770 = vcmp.eq.s32.totalorder %v375, %v2750
        %vm2771 = vcmp.eq.s32.totalorder %v376, %v2750
        %vm2772 = vcmp.eq.s32.totalorder %v377, %v2750
        %vm2773 = vcmp.eq.s32.totalorder %v378, %v2750
        %vm2774 = vcmp.eq.s32.totalorder %v379, %v2750
        %vm2775 = vcmp.eq.s32.totalorder %v380, %v2750
        %vm2776 = vcmp.eq.s32.totalorder %v381, %v2750
        %vm2777 = vcmp.eq.s32.totalorder %v382, %v2750
        %vm2778 = vcmp.eq.s32.totalorder %v383, %v2750
        %vm2779 = vcmp.eq.s32.totalorder %v384, %v2750
        %vm2780 = vcmp.eq.s32.totalorder %v385, %v2750
        %vm2781 = vcmp.eq.s32.totalorder %v386, %v2750
        %vm2782 = vcmp.eq.s32.totalorder %v387, %v2750
        %v2783 = vsel %vm2751, 1.0, 0.0
        %v2784 = vsel %vm2752, 1.0, 0.0
        %v2785 = vsel %vm2753, 1.0, 0.0
        %v2786 = vsel %vm2754, 1.0, 0.0
        %v2787 = vsel %vm2755, 1.0, 0.0
        %v2788 = vsel %vm2756, 1.0, 0.0
        %v2789 = vsel %vm2757, 1.0, 0.0
        %v2790 = vsel %vm2758, 1.0, 0.0
        %v2791 = vsel %vm2759, 1.0, 0.0
        %v2792 = vsel %vm2760, 1.0, 0.0
        %v2793 = vsel %vm2761, 1.0, 0.0
        %v2794 = vsel %vm2762, 1.0, 0.0
        %v2795 = vsel %vm2763, 1.0, 0.0
        %v2796 = vsel %vm2764, 1.0, 0.0
        %v2797 = vsel %vm2765, 1.0, 0.0
        %v2798 = vsel %vm2766, 1.0, 0.0
        %v2799 = vsel %vm2767, 1.0, 0.0
        %v2800 = vsel %vm2768, 1.0, 0.0
        %v2801 = vsel %vm2769, 1.0, 0.0
        %v2802 = vsel %vm2770, 1.0, 0.0
        %v2803 = vsel %vm2771, 1.0, 0.0
        %v2804 = vsel %vm2772, 1.0, 0.0
        %v2805 = vsel %vm2773, 1.0, 0.0
        %v2806 = vsel %vm2774, 1.0, 0.0
        %v2807 = vsel %vm2775, 1.0, 0.0
        %v2808 = vsel %vm2776, 1.0, 0.0
        %v2809 = vsel %vm2777, 1.0, 0.0
        %v2810 = vsel %vm2778, 1.0, 0.0
        %v2811 = vsel %vm2779, 1.0, 0.0
        %v2812 = vsel %vm2780, 1.0, 0.0
        %v2813 = vsel %vm2781, 1.0, 0.0
        %v2814 = vsel %vm2782, 1.0, 0.0
        %2816 = vst [vmem:[#allocation1] ss:$4 sm:$0xff] %v353
        %v2817 = vld.sshfl [vmem:[#allocation1] sm:$0xff pattern:$0x73625140]
        %v2818 = vld.sshfl [vmem:[#allocation1 + $0x8] sm:$0xff pattern:$0x73625140]
        %2821 = vmatpush.msra.mxu0 %v2798
        %2822 = vmatpush.msra.mxu0 %v2797
        %2823 = vmatpush.msra.mxu0 %v2796
        %2824 = vmatpush.msra.mxu0 %v2795
        %2825 = vmatpush.msra.mxu0 %v2794
        %2826 = vmatpush.msra.mxu0 %v2793
        %2827 = vmatpush.msra.mxu0 %v2792
        %2828 = vmatpush.msra.mxu0 %v2791
        %2829 = vmatpush.msra.mxu0 %v2790
        %2830 = vmatpush.msra.mxu0 %v2789
        %2831 = vmatpush.msra.mxu0 %v2788
        %2832 = vmatpush.msra.mxu0 %v2787
        %2833 = vmatpush.msra.mxu0 %v2786
        %2834 = vmatpush.msra.mxu0 %v2785
        %2835 = vmatpush.msra.mxu0 %v2784
        %2836 = vmatpush.msra.mxu0 %v2783
        %2837 = vmatmul.f32.gmra.mxu0 %v2817
        %v2838 = vpop.f32.mrf.mxu0
        %v2839 = vadd.f32 0.0, %v2838
        %2840 = vdwg.mxu0
        %2841 = vmatpush.msra.mxu0 %v2814
        %2842 = vmatpush.msra.mxu0 %v2813
        %2843 = vmatpush.msra.mxu0 %v2812
        %2844 = vmatpush.msra.mxu0 %v2811
        %2845 = vmatpush.msra.mxu0 %v2810
        %2846 = vmatpush.msra.mxu0 %v2809
        %2847 = vmatpush.msra.mxu0 %v2808
        %2848 = vmatpush.msra.mxu0 %v2807
        %2849 = vmatpush.msra.mxu0 %v2806
        %2850 = vmatpush.msra.mxu0 %v2805
        %2851 = vmatpush.msra.mxu0 %v2804
        %2852 = vmatpush.msra.mxu0 %v2803
        %2853 = vmatpush.msra.mxu0 %v2802
        %2854 = vmatpush.msra.mxu0 %v2801
        %2855 = vmatpush.msra.mxu0 %v2800
        %2856 = vmatpush.msra.mxu0 %v2799
        %2857 = vmatmul.f32.gmra.mxu0 %v2818
        %v2858 = vpop.f32.mrf.mxu0
        %v2859 = vadd.f32 %v2839, %v2858
        %2860 = vdwg.mxu0
        %v2861 = vmul.f32 %v1392, %v896
        %v2862 = vmul.f32 %v2861, %v899
        %v2863 = vperm.slane %v2862, 0
        %v2864 = vmul.f32 %v2859, %v2863
        %v2865 = vadd.f32 %v2377, %v2864
        %v2866 = vxor.u32 %v2378, %v908
        %v2867 = vand.u32 %v2866, %v395
        %v2868 = vadd.s32 %v2381, %v912
        %vm2869 = vcmp.lt.s32.totalorder %v2868, 0
        %v2870 = vsub.s32 0, %v2868
        %v2871 = vsel %vm2869, %v2870, %v2868
        %vm2872 = vcmp.lt.s32.totalorder %v407, 0
        %v2873 = vsub.s32 0, %v407
        %v2874 = vsel %vm2872, %v2873, %v407
        %v2875 = vshrl.u32 %v2871, 31
        %v2877 = vor.u32 0, %v2875
        %v2878 = vshll.u32 %v2871, 1
        %v2879 = vadd.s32 %v2877, 2147483648
        %v2880 = vadd.s32 %v2874, 2147483648
        %vm2881 = vcmp.ge.s32.totalorder %v2879, %v2880
        %v2882 = vsub.s32 %v2877, %v2874
        %v2883 = vsel %vm2881, %v2882, %v2877
        %v2884 = vadd.s32 %v2878, 1
        %v2885 = vsel %vm2881, %v2884, %v2878
        %v2886 = vshrl.u32 %v2885, 31
        %v2887 = vshll.u32 %v2883, 1
        %v2888 = vor.u32 %v2887, %v2886
        %v2889 = vshll.u32 %v2885, 1
        %v2890 = vadd.s32 %v2888, 2147483648
        %v2891 = vadd.s32 %v2874, 2147483648
        %vm2892 = vcmp.ge.s32.totalorder %v2890, %v2891
        %v2893 = vsub.s32 %v2888, %v2874
        %v2894 = vsel %vm2892, %v2893, %v2888
        %v2895 = vadd.s32 %v2889, 1
        %v2896 = vsel %vm2892, %v2895, %v2889
        %v2897 = vshrl.u32 %v2896, 31
        %v2898 = vshll.u32 %v2894, 1
        %v2899 = vor.u32 %v2898, %v2897
        %v2900 = vshll.u32 %v2896, 1
        %v2901 = vadd.s32 %v2899, 2147483648
        %v2902 = vadd.s32 %v2874, 2147483648
        %vm2903 = vcmp.ge.s32.totalorder %v2901, %v2902
        %v2904 = vsub.s32 %v2899, %v2874
        %v2905 = vsel %vm2903, %v2904, %v2899
        %v2906 = vadd.s32 %v2900, 1
        %v2907 = vsel %vm2903, %v2906, %v2900
        %v2908 = vshrl.u32 %v2907, 31
        %v2909 = vshll.u32 %v2905, 1
        %v2910 = vor.u32 %v2909, %v2908
        %v2911 = vshll.u32 %v2907, 1
        %v2912 = vadd.s32 %v2910, 2147483648
        %v2913 = vadd.s32 %v2874, 2147483648
        %vm2914 = vcmp.ge.s32.totalorder %v2912, %v2913
        %v2915 = vsub.s32 %v2910, %v2874
        %v2916 = vsel %vm2914, %v2915, %v2910
        %v2917 = vadd.s32 %v2911, 1
        %v2918 = vsel %vm2914, %v2917, %v2911
        %v2919 = vshrl.u32 %v2918, 31
        %v2920 = vshll.u32 %v2916, 1
        %v2921 = vor.u32 %v2920, %v2919
        %v2922 = vshll.u32 %v2918, 1
        %v2923 = vadd.s32 %v2921, 2147483648
        %v2924 = vadd.s32 %v2874, 2147483648
        %vm2925 = vcmp.ge.s32.totalorder %v2923, %v2924
        %v2926 = vsub.s32 %v2921, %v2874
        %v2927 = vsel %vm2925, %v2926, %v2921
        %v2928 = vadd.s32 %v2922, 1
        %v2929 = vsel %vm2925, %v2928, %v2922
        %v2930 = vshrl.u32 %v2929, 31
        %v2931 = vshll.u32 %v2927, 1
        %v2932 = vor.u32 %v2931, %v2930
        %v2933 = vshll.u32 %v2929, 1
        %v2934 = vadd.s32 %v2932, 2147483648
        %v2935 = vadd.s32 %v2874, 2147483648
        %vm2936 = vcmp.ge.s32.totalorder %v2934, %v2935
        %v2937 = vsub.s32 %v2932, %v2874
        %v2938 = vsel %vm2936, %v2937, %v2932
        %v2939 = vadd.s32 %v2933, 1
        %v2940 = vsel %vm2936, %v2939, %v2933
        %v2941 = vshrl.u32 %v2940, 31
        %v2942 = vshll.u32 %v2938, 1
        %v2943 = vor.u32 %v2942, %v2941
        %v2944 = vshll.u32 %v2940, 1
        %v2945 = vadd.s32 %v2943, 2147483648
        %v2946 = vadd.s32 %v2874, 2147483648
        %vm2947 = vcmp.ge.s32.totalorder %v2945, %v2946
        %v2948 = vsub.s32 %v2943, %v2874
        %v2949 = vsel %vm2947, %v2948, %v2943
        %v2950 = vadd.s32 %v2944, 1
        %v2951 = vsel %vm2947, %v2950, %v2944
        %v2952 = vshrl.u32 %v2951, 31
        %v2953 = vshll.u32 %v2949, 1
        %v2954 = vor.u32 %v2953, %v2952
        %v2955 = vshll.u32 %v2951, 1
        %v2956 = vadd.s32 %v2954, 2147483648
        %v2957 = vadd.s32 %v2874, 2147483648
        %vm2958 = vcmp.ge.s32.totalorder %v2956, %v2957
        %v2959 = vsub.s32 %v2954, %v2874
        %v2960 = vsel %vm2958, %v2959, %v2954
        %v2961 = vadd.s32 %v2955, 1
        %v2962 = vsel %vm2958, %v2961, %v2955
        %v2963 = vshrl.u32 %v2962, 31
        %v2964 = vshll.u32 %v2960, 1
        %v2965 = vor.u32 %v2964, %v2963
        %v2966 = vshll.u32 %v2962, 1
        %v2967 = vadd.s32 %v2965, 2147483648
        %v2968 = vadd.s32 %v2874, 2147483648
        %vm2969 = vcmp.ge.s32.totalorder %v2967, %v2968
        %v2970 = vsub.s32 %v2965, %v2874
        %v2971 = vsel %vm2969, %v2970, %v2965
        %v2972 = vadd.s32 %v2966, 1
        %v2973 = vsel %vm2969, %v2972, %v2966
        %v2974 = vshrl.u32 %v2973, 31
        %v2975 = vshll.u32 %v2971, 1
        %v2976 = vor.u32 %v2975, %v2974
        %v2977 = vshll.u32 %v2973, 1
        %v2978 = vadd.s32 %v2976, 2147483648
        %v2979 = vadd.s32 %v2874, 2147483648
        %vm2980 = vcmp.ge.s32.totalorder %v2978, %v2979
        %v2981 = vsub.s32 %v2976, %v2874
        %v2982 = vsel %vm2980, %v2981, %v2976
        %v2983 = vadd.s32 %v2977, 1
        %v2984 = vsel %vm2980, %v2983, %v2977
        %v2985 = vshrl.u32 %v2984, 31
        %v2986 = vshll.u32 %v2982, 1
        %v2987 = vor.u32 %v2986, %v2985
        %v2988 = vshll.u32 %v2984, 1
        %v2989 = vadd.s32 %v2987, 2147483648
        %v2990 = vadd.s32 %v2874, 2147483648
        %vm2991 = vcmp.ge.s32.totalorder %v2989, %v2990
        %v2992 = vsub.s32 %v2987, %v2874
        %v2993 = vsel %vm2991, %v2992, %v2987
        %v2994 = vadd.s32 %v2988, 1
        %v2995 = vsel %vm2991, %v2994, %v2988
        %v2996 = vshrl.u32 %v2995, 31
        %v2997 = vshll.u32 %v2993, 1
        %v2998 = vor.u32 %v2997, %v2996
        %v2999 = vshll.u32 %v2995, 1
        %v3000 = vadd.s32 %v2998, 2147483648
        %v3001 = vadd.s32 %v2874, 2147483648
        %vm3002 = vcmp.ge.s32.totalorder %v3000, %v3001
        %v3003 = vsub.s32 %v2998, %v2874
        %v3004 = vsel %vm3002, %v3003, %v2998
        %v3005 = vadd.s32 %v2999, 1
        %v3006 = vsel %vm3002, %v3005, %v2999
        %v3007 = vshrl.u32 %v3006, 31
        %v3008 = vshll.u32 %v3004, 1
        %v3009 = vor.u32 %v3008, %v3007
        %v3010 = vshll.u32 %v3006, 1
        %v3011 = vadd.s32 %v3009, 2147483648
        %v3012 = vadd.s32 %v2874, 2147483648
        %vm3013 = vcmp.ge.s32.totalorder %v3011, %v3012
        %v3014 = vsub.s32 %v3009, %v2874
        %v3015 = vsel %vm3013, %v3014, %v3009
        %v3016 = vadd.s32 %v3010, 1
        %v3017 = vsel %vm3013, %v3016, %v3010
        %v3018 = vshrl.u32 %v3017, 31
        %v3019 = vshll.u32 %v3015, 1
        %v3020 = vor.u32 %v3019, %v3018
        %v3021 = vshll.u32 %v3017, 1
        %v3022 = vadd.s32 %v3020, 2147483648
        %v3023 = vadd.s32 %v2874, 2147483648
        %vm3024 = vcmp.ge.s32.totalorder %v3022, %v3023
        %v3025 = vsub.s32 %v3020, %v2874
        %v3026 = vsel %vm3024, %v3025, %v3020
        %v3027 = vadd.s32 %v3021, 1
        %v3028 = vsel %vm3024, %v3027, %v3021
        %v3029 = vshrl.u32 %v3028, 31
        %v3030 = vshll.u32 %v3026, 1
        %v3031 = vor.u32 %v3030, %v3029
        %v3032 = vshll.u32 %v3028, 1
        %v3033 = vadd.s32 %v3031, 2147483648
        %v3034 = vadd.s32 %v2874, 2147483648
        %vm3035 = vcmp.ge.s32.totalorder %v3033, %v3034
        %v3036 = vsub.s32 %v3031, %v2874
        %v3037 = vsel %vm3035, %v3036, %v3031
        %v3038 = vadd.s32 %v3032, 1
        %v3039 = vsel %vm3035, %v3038, %v3032
        %v3040 = vshrl.u32 %v3039, 31
        %v3041 = vshll.u32 %v3037, 1
        %v3042 = vor.u32 %v3041, %v3040
        %v3043 = vshll.u32 %v3039, 1
        %v3044 = vadd.s32 %v3042, 2147483648
        %v3045 = vadd.s32 %v2874, 2147483648
        %vm3046 = vcmp.ge.s32.totalorder %v3044, %v3045
        %v3047 = vsub.s32 %v3042, %v2874
        %v3048 = vsel %vm3046, %v3047, %v3042
        %v3049 = vadd.s32 %v3043, 1
        %v3050 = vsel %vm3046, %v3049, %v3043
        %v3051 = vshrl.u32 %v3050, 31
        %v3052 = vshll.u32 %v3048, 1
        %v3053 = vor.u32 %v3052, %v3051
        %v3054 = vshll.u32 %v3050, 1
        %v3055 = vadd.s32 %v3053, 2147483648
        %v3056 = vadd.s32 %v2874, 2147483648
        %vm3057 = vcmp.ge.s32.totalorder %v3055, %v3056
        %v3058 = vsub.s32 %v3053, %v2874
        %v3059 = vsel %vm3057, %v3058, %v3053
        %v3060 = vadd.s32 %v3054, 1
        %v3061 = vsel %vm3057, %v3060, %v3054
        %v3062 = vshrl.u32 %v3061, 31
        %v3063 = vshll.u32 %v3059, 1
        %v3064 = vor.u32 %v3063, %v3062
        %v3065 = vshll.u32 %v3061, 1
        %v3066 = vadd.s32 %v3064, 2147483648
        %v3067 = vadd.s32 %v2874, 2147483648
        %vm3068 = vcmp.ge.s32.totalorder %v3066, %v3067
        %v3069 = vsub.s32 %v3064, %v2874
        %v3070 = vsel %vm3068, %v3069, %v3064
        %v3071 = vadd.s32 %v3065, 1
        %v3072 = vsel %vm3068, %v3071, %v3065
        %v3073 = vshrl.u32 %v3072, 31
        %v3074 = vshll.u32 %v3070, 1
        %v3075 = vor.u32 %v3074, %v3073
        %v3076 = vshll.u32 %v3072, 1
        %v3077 = vadd.s32 %v3075, 2147483648
        %v3078 = vadd.s32 %v2874, 2147483648
        %vm3079 = vcmp.ge.s32.totalorder %v3077, %v3078
        %v3080 = vsub.s32 %v3075, %v2874
        %v3081 = vsel %vm3079, %v3080, %v3075
        %v3082 = vadd.s32 %v3076, 1
        %v3083 = vsel %vm3079, %v3082, %v3076
        %v3084 = vshrl.u32 %v3083, 31
        %v3085 = vshll.u32 %v3081, 1
        %v3086 = vor.u32 %v3085, %v3084
        %v3087 = vshll.u32 %v3083, 1
        %v3088 = vadd.s32 %v3086, 2147483648
        %v3089 = vadd.s32 %v2874, 2147483648
        %vm3090 = vcmp.ge.s32.totalorder %v3088, %v3089
        %v3091 = vsub.s32 %v3086, %v2874
        %v3092 = vsel %vm3090, %v3091, %v3086
        %v3093 = vadd.s32 %v3087, 1
        %v3094 = vsel %vm3090, %v3093, %v3087
        %v3095 = vshrl.u32 %v3094, 31
        %v3096 = vshll.u32 %v3092, 1
        %v3097 = vor.u32 %v3096, %v3095
        %v3098 = vshll.u32 %v3094, 1
        %v3099 = vadd.s32 %v3097, 2147483648
        %v3100 = vadd.s32 %v2874, 2147483648
        %vm3101 = vcmp.ge.s32.totalorder %v3099, %v3100
        %v3102 = vsub.s32 %v3097, %v2874
        %v3103 = vsel %vm3101, %v3102, %v3097
        %v3104 = vadd.s32 %v3098, 1
        %v3105 = vsel %vm3101, %v3104, %v3098
        %v3106 = vshrl.u32 %v3105, 31
        %v3107 = vshll.u32 %v3103, 1
        %v3108 = vor.u32 %v3107, %v3106
        %v3109 = vshll.u32 %v3105, 1
        %v3110 = vadd.s32 %v3108, 2147483648
        %v3111 = vadd.s32 %v2874, 2147483648
        %vm3112 = vcmp.ge.s32.totalorder %v3110, %v3111
        %v3113 = vsub.s32 %v3108, %v2874
        %v3114 = vsel %vm3112, %v3113, %v3108
        %v3115 = vadd.s32 %v3109, 1
        %v3116 = vsel %vm3112, %v3115, %v3109
        %v3117 = vshrl.u32 %v3116, 31
        %v3118 = vshll.u32 %v3114, 1
        %v3119 = vor.u32 %v3118, %v3117
        %v3120 = vshll.u32 %v3116, 1
        %v3121 = vadd.s32 %v3119, 2147483648
        %v3122 = vadd.s32 %v2874, 2147483648
        %vm3123 = vcmp.ge.s32.totalorder %v3121, %v3122
        %v3124 = vsub.s32 %v3119, %v2874
        %v3125 = vsel %vm3123, %v3124, %v3119
        %v3126 = vadd.s32 %v3120, 1
        %v3127 = vsel %vm3123, %v3126, %v3120
        %v3128 = vshrl.u32 %v3127, 31
        %v3129 = vshll.u32 %v3125, 1
        %v3130 = vor.u32 %v3129, %v3128
        %v3131 = vshll.u32 %v3127, 1
        %v3132 = vadd.s32 %v3130, 2147483648
        %v3133 = vadd.s32 %v2874, 2147483648
        %vm3134 = vcmp.ge.s32.totalorder %v3132, %v3133
        %v3135 = vsub.s32 %v3130, %v2874
        %v3136 = vsel %vm3134, %v3135, %v3130
        %v3137 = vadd.s32 %v3131, 1
        %v3138 = vsel %vm3134, %v3137, %v3131
        %v3139 = vshrl.u32 %v3138, 31
        %v3140 = vshll.u32 %v3136, 1
        %v3141 = vor.u32 %v3140, %v3139
        %v3142 = vshll.u32 %v3138, 1
        %v3143 = vadd.s32 %v3141, 2147483648
        %v3144 = vadd.s32 %v2874, 2147483648
        %vm3145 = vcmp.ge.s32.totalorder %v3143, %v3144
        %v3146 = vsub.s32 %v3141, %v2874
        %v3147 = vsel %vm3145, %v3146, %v3141
        %v3148 = vadd.s32 %v3142, 1
        %v3149 = vsel %vm3145, %v3148, %v3142
        %v3150 = vshrl.u32 %v3149, 31
        %v3151 = vshll.u32 %v3147, 1
        %v3152 = vor.u32 %v3151, %v3150
        %v3153 = vshll.u32 %v3149, 1
        %v3154 = vadd.s32 %v3152, 2147483648
        %v3155 = vadd.s32 %v2874, 2147483648
        %vm3156 = vcmp.ge.s32.totalorder %v3154, %v3155
        %v3157 = vsub.s32 %v3152, %v2874
        %v3158 = vsel %vm3156, %v3157, %v3152
        %v3159 = vadd.s32 %v3153, 1
        %v3160 = vsel %vm3156, %v3159, %v3153
        %v3161 = vshrl.u32 %v3160, 31
        %v3162 = vshll.u32 %v3158, 1
        %v3163 = vor.u32 %v3162, %v3161
        %v3164 = vshll.u32 %v3160, 1
        %v3165 = vadd.s32 %v3163, 2147483648
        %v3166 = vadd.s32 %v2874, 2147483648
        %vm3167 = vcmp.ge.s32.totalorder %v3165, %v3166
        %v3168 = vsub.s32 %v3163, %v2874
        %v3169 = vsel %vm3167, %v3168, %v3163
        %v3170 = vadd.s32 %v3164, 1
        %v3171 = vsel %vm3167, %v3170, %v3164
        %v3172 = vshrl.u32 %v3171, 31
        %v3173 = vshll.u32 %v3169, 1
        %v3174 = vor.u32 %v3173, %v3172
        %v3175 = vshll.u32 %v3171, 1
        %v3176 = vadd.s32 %v3174, 2147483648
        %v3177 = vadd.s32 %v2874, 2147483648
        %vm3178 = vcmp.ge.s32.totalorder %v3176, %v3177
        %v3179 = vsub.s32 %v3174, %v2874
        %v3180 = vsel %vm3178, %v3179, %v3174
        %v3181 = vadd.s32 %v3175, 1
        %v3182 = vsel %vm3178, %v3181, %v3175
        %v3183 = vshrl.u32 %v3182, 31
        %v3184 = vshll.u32 %v3180, 1
        %v3185 = vor.u32 %v3184, %v3183
        %v3186 = vshll.u32 %v3182, 1
        %v3187 = vadd.s32 %v3185, 2147483648
        %v3188 = vadd.s32 %v2874, 2147483648
        %vm3189 = vcmp.ge.s32.totalorder %v3187, %v3188
        %v3190 = vsub.s32 %v3185, %v2874
        %v3191 = vsel %vm3189, %v3190, %v3185
        %v3192 = vadd.s32 %v3186, 1
        %v3193 = vsel %vm3189, %v3192, %v3186
        %v3194 = vshrl.u32 %v3193, 31
        %v3195 = vshll.u32 %v3191, 1
        %v3196 = vor.u32 %v3195, %v3194
        %v3197 = vshll.u32 %v3193, 1
        %v3198 = vadd.s32 %v3196, 2147483648
        %v3199 = vadd.s32 %v2874, 2147483648
        %vm3200 = vcmp.ge.s32.totalorder %v3198, %v3199
        %v3201 = vsub.s32 %v3196, %v2874
        %v3202 = vsel %vm3200, %v3201, %v3196
        %v3203 = vadd.s32 %v3197, 1
        %v3204 = vsel %vm3200, %v3203, %v3197
        %v3205 = vshrl.u32 %v3204, 31
        %v3206 = vshll.u32 %v3202, 1
        %v3207 = vor.u32 %v3206, %v3205
        %v3208 = vshll.u32 %v3204, 1
        %v3209 = vadd.s32 %v3207, 2147483648
        %v3210 = vadd.s32 %v2874, 2147483648
        %vm3211 = vcmp.ge.s32.totalorder %v3209, %v3210
        %v3212 = vsub.s32 %v3207, %v2874
        %v3213 = vsel %vm3211, %v3212, %v3207
        %v3214 = vadd.s32 %v3208, 1
        %v3215 = vsel %vm3211, %v3214, %v3208
        %v3216 = vshrl.u32 %v3215, 31
        %v3217 = vshll.u32 %v3213, 1
        %v3218 = vor.u32 %v3217, %v3216
        %v3219 = vshll.u32 %v3215, 1
        %v3220 = vadd.s32 %v3218, 2147483648
        %v3221 = vadd.s32 %v2874, 2147483648
        %vm3222 = vcmp.ge.s32.totalorder %v3220, %v3221
        %v3223 = vsub.s32 %v3218, %v2874
        %v3224 = vsel %vm3222, %v3223, %v3218
        %v3225 = vadd.s32 %v3219, 1
        %v3226 = vsel %vm3222, %v3225, %v3219
        %v3227 = vsub.s32 0, %v3224
        %v3228 = vsel %vm2869, %v3227, %v3224
        %vm3229 = vcmp.ne.s32.totalorder %v3228, 0
        %vm3230 = vcmp.lt.s32.totalorder %v3228, 0
        %vm3231 = vmxor %vm3230, %vm773
        %vm3232 = vmand %vm3231, %vm3229
        %v3233 = vadd.s32 %v3228, %v407
        %v3234 = vsel %vm3232, %v3233, %v3228
        %v3235 = vsel %vm780, %v2867, %v3234
        %v3236 = vperm.slane %v3235, 0
        %vm3237 = vcmp.eq.s32.totalorder %v356, %v3236
        %vm3238 = vcmp.eq.s32.totalorder %v357, %v3236
        %vm3239 = vcmp.eq.s32.totalorder %v358, %v3236
        %vm3240 = vcmp.eq.s32.totalorder %v359, %v3236
        %vm3241 = vcmp.eq.s32.totalorder %v360, %v3236
        %vm3242 = vcmp.eq.s32.totalorder %v361, %v3236
        %vm3243 = vcmp.eq.s32.totalorder %v362, %v3236
        %vm3244 = vcmp.eq.s32.totalorder %v363, %v3236
        %vm3245 = vcmp.eq.s32.totalorder %v364, %v3236
        %vm3246 = vcmp.eq.s32.totalorder %v365, %v3236
        %vm3247 = vcmp.eq.s32.totalorder %v366, %v3236
        %vm3248 = vcmp.eq.s32.totalorder %v367, %v3236
        %vm3249 = vcmp.eq.s32.totalorder %v368, %v3236
        %vm3250 = vcmp.eq.s32.totalorder %v369, %v3236
        %vm3251 = vcmp.eq.s32.totalorder %v370, %v3236
        %vm3252 = vcmp.eq.s32.totalorder %v371, %v3236
        %vm3253 = vcmp.eq.s32.totalorder %v372, %v3236
        %vm3254 = vcmp.eq.s32.totalorder %v373, %v3236
        %vm3255 = vcmp.eq.s32.totalorder %v374, %v3236
        %vm3256 = vcmp.eq.s32.totalorder %v375, %v3236
        %vm3257 = vcmp.eq.s32.totalorder %v376, %v3236
        %vm3258 = vcmp.eq.s32.totalorder %v377, %v3236
        %vm3259 = vcmp.eq.s32.totalorder %v378, %v3236
        %vm3260 = vcmp.eq.s32.totalorder %v379, %v3236
        %vm3261 = vcmp.eq.s32.totalorder %v380, %v3236
        %vm3262 = vcmp.eq.s32.totalorder %v381, %v3236
        %vm3263 = vcmp.eq.s32.totalorder %v382, %v3236
        %vm3264 = vcmp.eq.s32.totalorder %v383, %v3236
        %vm3265 = vcmp.eq.s32.totalorder %v384, %v3236
        %vm3266 = vcmp.eq.s32.totalorder %v385, %v3236
        %vm3267 = vcmp.eq.s32.totalorder %v386, %v3236
        %vm3268 = vcmp.eq.s32.totalorder %v387, %v3236
        %v3269 = vsel %vm3237, 1.0, 0.0
        %v3270 = vsel %vm3238, 1.0, 0.0
        %v3271 = vsel %vm3239, 1.0, 0.0
        %v3272 = vsel %vm3240, 1.0, 0.0
        %v3273 = vsel %vm3241, 1.0, 0.0
        %v3274 = vsel %vm3242, 1.0, 0.0
        %v3275 = vsel %vm3243, 1.0, 0.0
        %v3276 = vsel %vm3244, 1.0, 0.0
        %v3277 = vsel %vm3245, 1.0, 0.0
        %v3278 = vsel %vm3246, 1.0, 0.0
        %v3279 = vsel %vm3247, 1.0, 0.0
        %v3280 = vsel %vm3248, 1.0, 0.0
        %v3281 = vsel %vm3249, 1.0, 0.0
        %v3282 = vsel %vm3250, 1.0, 0.0
        %v3283 = vsel %vm3251, 1.0, 0.0
        %v3284 = vsel %vm3252, 1.0, 0.0
        %v3285 = vsel %vm3253, 1.0, 0.0
        %v3286 = vsel %vm3254, 1.0, 0.0
        %v3287 = vsel %vm3255, 1.0, 0.0
        %v3288 = vsel %vm3256, 1.0, 0.0
        %v3289 = vsel %vm3257, 1.0, 0.0
        %v3290 = vsel %vm3258, 1.0, 0.0
        %v3291 = vsel %vm3259, 1.0, 0.0
        %v3292 = vsel %vm3260, 1.0, 0.0
        %v3293 = vsel %vm3261, 1.0, 0.0
        %v3294 = vsel %vm3262, 1.0, 0.0
        %v3295 = vsel %vm3263, 1.0, 0.0
        %v3296 = vsel %vm3264, 1.0, 0.0
        %v3297 = vsel %vm3265, 1.0, 0.0
        %v3298 = vsel %vm3266, 1.0, 0.0
        %v3299 = vsel %vm3267, 1.0, 0.0
        %v3300 = vsel %vm3268, 1.0, 0.0
        %3301 = vst [vmem:[#allocation1] ss:$4 sm:$0xff] %v353
        %v3302 = vld.sshfl [vmem:[#allocation1 + $0x10] sm:$0xff pattern:$0x73625140]
        %v3303 = vld.sshfl [vmem:[#allocation1 + $0x18] sm:$0xff pattern:$0x73625140]
        %3306 = vmatpush.msra.mxu0 %v3284
        %3307 = vmatpush.msra.mxu0 %v3283
        %3308 = vmatpush.msra.mxu0 %v3282
        %3309 = vmatpush.msra.mxu0 %v3281
        %3310 = vmatpush.msra.mxu0 %v3280
        %3311 = vmatpush.msra.mxu0 %v3279
        %3312 = vmatpush.msra.mxu0 %v3278
        %3313 = vmatpush.msra.mxu0 %v3277
        %3314 = vmatpush.msra.mxu0 %v3276
        %3315 = vmatpush.msra.mxu0 %v3275
        %3316 = vmatpush.msra.mxu0 %v3274
        %3317 = vmatpush.msra.mxu0 %v3273
        %3318 = vmatpush.msra.mxu0 %v3272
        %3319 = vmatpush.msra.mxu0 %v3271
        %3320 = vmatpush.msra.mxu0 %v3270
        %3321 = vmatpush.msra.mxu0 %v3269
        %3322 = vmatmul.f32.gmra.mxu0 %v3302
        %v3323 = vpop.f32.mrf.mxu0
        %v3324 = vadd.f32 0.0, %v3323
        %3325 = vdwg.mxu0
        %3326 = vmatpush.msra.mxu0 %v3300
        %3327 = vmatpush.msra.mxu0 %v3299
        %3328 = vmatpush.msra.mxu0 %v3298
        %3329 = vmatpush.msra.mxu0 %v3297
        %3330 = vmatpush.msra.mxu0 %v3296
        %3331 = vmatpush.msra.mxu0 %v3295
        %3332 = vmatpush.msra.mxu0 %v3294
        %3333 = vmatpush.msra.mxu0 %v3293
        %3334 = vmatpush.msra.mxu0 %v3292
        %3335 = vmatpush.msra.mxu0 %v3291
        %3336 = vmatpush.msra.mxu0 %v3290
        %3337 = vmatpush.msra.mxu0 %v3289
        %3338 = vmatpush.msra.mxu0 %v3288
        %3339 = vmatpush.msra.mxu0 %v3287
        %3340 = vmatpush.msra.mxu0 %v3286
        %3341 = vmatpush.msra.mxu0 %v3285
        %3342 = vmatmul.f32.gmra.mxu0 %v3303
        %v3343 = vpop.f32.mrf.mxu0
        %v3344 = vadd.f32 %v3324, %v3343
        %3345 = vdwg.mxu0
        %v3346 = vmul.f32 %v2861, %v1394
        %v3347 = vperm.slane %v3346, 0
        %v3348 = vmul.f32 %v3344, %v3347
        %v3349 = vadd.f32 %v2865, %v3348
        %v3350 = vxor.u32 %v906, %v1401
        %v3351 = vxor.u32 %v3350, %v393
        %v3352 = vand.u32 %v3351, %v395
        %v3353 = vadd.s32 %v906, %v1406
        %v3354 = vadd.s32 %v3353, %v403
        %vm3355 = vcmp.lt.s32.totalorder %v3354, 0
        %v3356 = vsub.s32 0, %v3354
        %v3357 = vsel %vm3355, %v3356, %v3354
        %vm3358 = vcmp.lt.s32.totalorder %v407, 0
        %v3359 = vsub.s32 0, %v407
        %v3360 = vsel %vm3358, %v3359, %v407
        %v3361 = vshrl.u32 %v3357, 31
        %v3363 = vor.u32 0, %v3361
        %v3364 = vshll.u32 %v3357, 1
        %v3365 = vadd.s32 %v3363, 2147483648
        %v3366 = vadd.s32 %v3360, 2147483648
        %vm3367 = vcmp.ge.s32.totalorder %v3365, %v3366
        %v3368 = vsub.s32 %v3363, %v3360
        %v3369 = vsel %vm3367, %v3368, %v3363
        %v3370 = vadd.s32 %v3364, 1
        %v3371 = vsel %vm3367, %v3370, %v3364
        %v3372 = vshrl.u32 %v3371, 31
        %v3373 = vshll.u32 %v3369, 1
        %v3374 = vor.u32 %v3373, %v3372
        %v3375 = vshll.u32 %v3371, 1
        %v3376 = vadd.s32 %v3374, 2147483648
        %v3377 = vadd.s32 %v3360, 2147483648
        %vm3378 = vcmp.ge.s32.totalorder %v3376, %v3377
        %v3379 = vsub.s32 %v3374, %v3360
        %v3380 = vsel %vm3378, %v3379, %v3374
        %v3381 = vadd.s32 %v3375, 1
        %v3382 = vsel %vm3378, %v3381, %v3375
        %v3383 = vshrl.u32 %v3382, 31
        %v3384 = vshll.u32 %v3380, 1
        %v3385 = vor.u32 %v3384, %v3383
        %v3386 = vshll.u32 %v3382, 1
        %v3387 = vadd.s32 %v3385, 2147483648
        %v3388 = vadd.s32 %v3360, 2147483648
        %vm3389 = vcmp.ge.s32.totalorder %v3387, %v3388
        %v3390 = vsub.s32 %v3385, %v3360
        %v3391 = vsel %vm3389, %v3390, %v3385
        %v3392 = vadd.s32 %v3386, 1
        %v3393 = vsel %vm3389, %v3392, %v3386
        %v3394 = vshrl.u32 %v3393, 31
        %v3395 = vshll.u32 %v3391, 1
        %v3396 = vor.u32 %v3395, %v3394
        %v3397 = vshll.u32 %v3393, 1
        %v3398 = vadd.s32 %v3396, 2147483648
        %v3399 = vadd.s32 %v3360, 2147483648
        %vm3400 = vcmp.ge.s32.totalorder %v3398, %v3399
        %v3401 = vsub.s32 %v3396, %v3360
        %v3402 = vsel %vm3400, %v3401, %v3396
        %v3403 = vadd.s32 %v3397, 1
        %v3404 = vsel %vm3400, %v3403, %v3397
        %v3405 = vshrl.u32 %v3404, 31
        %v3406 = vshll.u32 %v3402, 1
        %v3407 = vor.u32 %v3406, %v3405
        %v3408 = vshll.u32 %v3404, 1
        %v3409 = vadd.s32 %v3407, 2147483648
        %v3410 = vadd.s32 %v3360, 2147483648
        %vm3411 = vcmp.ge.s32.totalorder %v3409, %v3410
        %v3412 = vsub.s32 %v3407, %v3360
        %v3413 = vsel %vm3411, %v3412, %v3407
        %v3414 = vadd.s32 %v3408, 1
        %v3415 = vsel %vm3411, %v3414, %v3408
        %v3416 = vshrl.u32 %v3415, 31
        %v3417 = vshll.u32 %v3413, 1
        %v3418 = vor.u32 %v3417, %v3416
        %v3419 = vshll.u32 %v3415, 1
        %v3420 = vadd.s32 %v3418, 2147483648
        %v3421 = vadd.s32 %v3360, 2147483648
        %vm3422 = vcmp.ge.s32.totalorder %v3420, %v3421
        %v3423 = vsub.s32 %v3418, %v3360
        %v3424 = vsel %vm3422, %v3423, %v3418
        %v3425 = vadd.s32 %v3419, 1
        %v3426 = vsel %vm3422, %v3425, %v3419
        %v3427 = vshrl.u32 %v3426, 31
        %v3428 = vshll.u32 %v3424, 1
        %v3429 = vor.u32 %v3428, %v3427
        %v3430 = vshll.u32 %v3426, 1
        %v3431 = vadd.s32 %v3429, 2147483648
        %v3432 = vadd.s32 %v3360, 2147483648
        %vm3433 = vcmp.ge.s32.totalorder %v3431, %v3432
        %v3434 = vsub.s32 %v3429, %v3360
        %v3435 = vsel %vm3433, %v3434, %v3429
        %v3436 = vadd.s32 %v3430, 1
        %v3437 = vsel %vm3433, %v3436, %v3430
        %v3438 = vshrl.u32 %v3437, 31
        %v3439 = vshll.u32 %v3435, 1
        %v3440 = vor.u32 %v3439, %v3438
        %v3441 = vshll.u32 %v3437, 1
        %v3442 = vadd.s32 %v3440, 2147483648
        %v3443 = vadd.s32 %v3360, 2147483648
        %vm3444 = vcmp.ge.s32.totalorder %v3442, %v3443
        %v3445 = vsub.s32 %v3440, %v3360
        %v3446 = vsel %vm3444, %v3445, %v3440
        %v3447 = vadd.s32 %v3441, 1
        %v3448 = vsel %vm3444, %v3447, %v3441
        %v3449 = vshrl.u32 %v3448, 31
        %v3450 = vshll.u32 %v3446, 1
        %v3451 = vor.u32 %v3450, %v3449
        %v3452 = vshll.u32 %v3448, 1
        %v3453 = vadd.s32 %v3451, 2147483648
        %v3454 = vadd.s32 %v3360, 2147483648
        %vm3455 = vcmp.ge.s32.totalorder %v3453, %v3454
        %v3456 = vsub.s32 %v3451, %v3360
        %v3457 = vsel %vm3455, %v3456, %v3451
        %v3458 = vadd.s32 %v3452, 1
        %v3459 = vsel %vm3455, %v3458, %v3452
        %v3460 = vshrl.u32 %v3459, 31
        %v3461 = vshll.u32 %v3457, 1
        %v3462 = vor.u32 %v3461, %v3460
        %v3463 = vshll.u32 %v3459, 1
        %v3464 = vadd.s32 %v3462, 2147483648
        %v3465 = vadd.s32 %v3360, 2147483648
        %vm3466 = vcmp.ge.s32.totalorder %v3464, %v3465
        %v3467 = vsub.s32 %v3462, %v3360
        %v3468 = vsel %vm3466, %v3467, %v3462
        %v3469 = vadd.s32 %v3463, 1
        %v3470 = vsel %vm3466, %v3469, %v3463
        %v3471 = vshrl.u32 %v3470, 31
        %v3472 = vshll.u32 %v3468, 1
        %v3473 = vor.u32 %v3472, %v3471
        %v3474 = vshll.u32 %v3470, 1
        %v3475 = vadd.s32 %v3473, 2147483648
        %v3476 = vadd.s32 %v3360, 2147483648
        %vm3477 = vcmp.ge.s32.totalorder %v3475, %v3476
        %v3478 = vsub.s32 %v3473, %v3360
        %v3479 = vsel %vm3477, %v3478, %v3473
        %v3480 = vadd.s32 %v3474, 1
        %v3481 = vsel %vm3477, %v3480, %v3474
        %v3482 = vshrl.u32 %v3481, 31
        %v3483 = vshll.u32 %v3479, 1
        %v3484 = vor.u32 %v3483, %v3482
        %v3485 = vshll.u32 %v3481, 1
        %v3486 = vadd.s32 %v3484, 2147483648
        %v3487 = vadd.s32 %v3360, 2147483648
        %vm3488 = vcmp.ge.s32.totalorder %v3486, %v3487
        %v3489 = vsub.s32 %v3484, %v3360
        %v3490 = vsel %vm3488, %v3489, %v3484
        %v3491 = vadd.s32 %v3485, 1
        %v3492 = vsel %vm3488, %v3491, %v3485
        %v3493 = vshrl.u32 %v3492, 31
        %v3494 = vshll.u32 %v3490, 1
        %v3495 = vor.u32 %v3494, %v3493
        %v3496 = vshll.u32 %v3492, 1
        %v3497 = vadd.s32 %v3495, 2147483648
        %v3498 = vadd.s32 %v3360, 2147483648
        %vm3499 = vcmp.ge.s32.totalorder %v3497, %v3498
        %v3500 = vsub.s32 %v3495, %v3360
        %v3501 = vsel %vm3499, %v3500, %v3495
        %v3502 = vadd.s32 %v3496, 1
        %v3503 = vsel %vm3499, %v3502, %v3496
        %v3504 = vshrl.u32 %v3503, 31
        %v3505 = vshll.u32 %v3501, 1
        %v3506 = vor.u32 %v3505, %v3504
        %v3507 = vshll.u32 %v3503, 1
        %v3508 = vadd.s32 %v3506, 2147483648
        %v3509 = vadd.s32 %v3360, 2147483648
        %vm3510 = vcmp.ge.s32.totalorder %v3508, %v3509
        %v3511 = vsub.s32 %v3506, %v3360
        %v3512 = vsel %vm3510, %v3511, %v3506
        %v3513 = vadd.s32 %v3507, 1
        %v3514 = vsel %vm3510, %v3513, %v3507
        %v3515 = vshrl.u32 %v3514, 31
        %v3516 = vshll.u32 %v3512, 1
        %v3517 = vor.u32 %v3516, %v3515
        %v3518 = vshll.u32 %v3514, 1
        %v3519 = vadd.s32 %v3517, 2147483648
        %v3520 = vadd.s32 %v3360, 2147483648
        %vm3521 = vcmp.ge.s32.totalorder %v3519, %v3520
        %v3522 = vsub.s32 %v3517, %v3360
        %v3523 = vsel %vm3521, %v3522, %v3517
        %v3524 = vadd.s32 %v3518, 1
        %v3525 = vsel %vm3521, %v3524, %v3518
        %v3526 = vshrl.u32 %v3525, 31
        %v3527 = vshll.u32 %v3523, 1
        %v3528 = vor.u32 %v3527, %v3526
        %v3529 = vshll.u32 %v3525, 1
        %v3530 = vadd.s32 %v3528, 2147483648
        %v3531 = vadd.s32 %v3360, 2147483648
        %vm3532 = vcmp.ge.s32.totalorder %v3530, %v3531
        %v3533 = vsub.s32 %v3528, %v3360
        %v3534 = vsel %vm3532, %v3533, %v3528
        %v3535 = vadd.s32 %v3529, 1
        %v3536 = vsel %vm3532, %v3535, %v3529
        %v3537 = vshrl.u32 %v3536, 31
        %v3538 = vshll.u32 %v3534, 1
        %v3539 = vor.u32 %v3538, %v3537
        %v3540 = vshll.u32 %v3536, 1
        %v3541 = vadd.s32 %v3539, 2147483648
        %v3542 = vadd.s32 %v3360, 2147483648
        %vm3543 = vcmp.ge.s32.totalorder %v3541, %v3542
        %v3544 = vsub.s32 %v3539, %v3360
        %v3545 = vsel %vm3543, %v3544, %v3539
        %v3546 = vadd.s32 %v3540, 1
        %v3547 = vsel %vm3543, %v3546, %v3540
        %v3548 = vshrl.u32 %v3547, 31
        %v3549 = vshll.u32 %v3545, 1
        %v3550 = vor.u32 %v3549, %v3548
        %v3551 = vshll.u32 %v3547, 1
        %v3552 = vadd.s32 %v3550, 2147483648
        %v3553 = vadd.s32 %v3360, 2147483648
        %vm3554 = vcmp.ge.s32.totalorder %v3552, %v3553
        %v3555 = vsub.s32 %v3550, %v3360
        %v3556 = vsel %vm3554, %v3555, %v3550
        %v3557 = vadd.s32 %v3551, 1
        %v3558 = vsel %vm3554, %v3557, %v3551
        %v3559 = vshrl.u32 %v3558, 31
        %v3560 = vshll.u32 %v3556, 1
        %v3561 = vor.u32 %v3560, %v3559
        %v3562 = vshll.u32 %v3558, 1
        %v3563 = vadd.s32 %v3561, 2147483648
        %v3564 = vadd.s32 %v3360, 2147483648
        %vm3565 = vcmp.ge.s32.totalorder %v3563, %v3564
        %v3566 = vsub.s32 %v3561, %v3360
        %v3567 = vsel %vm3565, %v3566, %v3561
        %v3568 = vadd.s32 %v3562, 1
        %v3569 = vsel %vm3565, %v3568, %v3562
        %v3570 = vshrl.u32 %v3569, 31
        %v3571 = vshll.u32 %v3567, 1
        %v3572 = vor.u32 %v3571, %v3570
        %v3573 = vshll.u32 %v3569, 1
        %v3574 = vadd.s32 %v3572, 2147483648
        %v3575 = vadd.s32 %v3360, 2147483648
        %vm3576 = vcmp.ge.s32.totalorder %v3574, %v3575
        %v3577 = vsub.s32 %v3572, %v3360
        %v3578 = vsel %vm3576, %v3577, %v3572
        %v3579 = vadd.s32 %v3573, 1
        %v3580 = vsel %vm3576, %v3579, %v3573
        %v3581 = vshrl.u32 %v3580, 31
        %v3582 = vshll.u32 %v3578, 1
        %v3583 = vor.u32 %v3582, %v3581
        %v3584 = vshll.u32 %v3580, 1
        %v3585 = vadd.s32 %v3583, 2147483648
        %v3586 = vadd.s32 %v3360, 2147483648
        %vm3587 = vcmp.ge.s32.totalorder %v3585, %v3586
        %v3588 = vsub.s32 %v3583, %v3360
        %v3589 = vsel %vm3587, %v3588, %v3583
        %v3590 = vadd.s32 %v3584, 1
        %v3591 = vsel %vm3587, %v3590, %v3584
        %v3592 = vshrl.u32 %v3591, 31
        %v3593 = vshll.u32 %v3589, 1
        %v3594 = vor.u32 %v3593, %v3592
        %v3595 = vshll.u32 %v3591, 1
        %v3596 = vadd.s32 %v3594, 2147483648
        %v3597 = vadd.s32 %v3360, 2147483648
        %vm3598 = vcmp.ge.s32.totalorder %v3596, %v3597
        %v3599 = vsub.s32 %v3594, %v3360
        %v3600 = vsel %vm3598, %v3599, %v3594
        %v3601 = vadd.s32 %v3595, 1
        %v3602 = vsel %vm3598, %v3601, %v3595
        %v3603 = vshrl.u32 %v3602, 31
        %v3604 = vshll.u32 %v3600, 1
        %v3605 = vor.u32 %v3604, %v3603
        %v3606 = vshll.u32 %v3602, 1
        %v3607 = vadd.s32 %v3605, 2147483648
        %v3608 = vadd.s32 %v3360, 2147483648
        %vm3609 = vcmp.ge.s32.totalorder %v3607, %v3608
        %v3610 = vsub.s32 %v3605, %v3360
        %v3611 = vsel %vm3609, %v3610, %v3605
        %v3612 = vadd.s32 %v3606, 1
        %v3613 = vsel %vm3609, %v3612, %v3606
        %v3614 = vshrl.u32 %v3613, 31
        %v3615 = vshll.u32 %v3611, 1
        %v3616 = vor.u32 %v3615, %v3614
        %v3617 = vshll.u32 %v3613, 1
        %v3618 = vadd.s32 %v3616, 2147483648
        %v3619 = vadd.s32 %v3360, 2147483648
        %vm3620 = vcmp.ge.s32.totalorder %v3618, %v3619
        %v3621 = vsub.s32 %v3616, %v3360
        %v3622 = vsel %vm3620, %v3621, %v3616
        %v3623 = vadd.s32 %v3617, 1
        %v3624 = vsel %vm3620, %v3623, %v3617
        %v3625 = vshrl.u32 %v3624, 31
        %v3626 = vshll.u32 %v3622, 1
        %v3627 = vor.u32 %v3626, %v3625
        %v3628 = vshll.u32 %v3624, 1
        %v3629 = vadd.s32 %v3627, 2147483648
        %v3630 = vadd.s32 %v3360, 2147483648
        %vm3631 = vcmp.ge.s32.totalorder %v3629, %v3630
        %v3632 = vsub.s32 %v3627, %v3360
        %v3633 = vsel %vm3631, %v3632, %v3627
        %v3634 = vadd.s32 %v3628, 1
        %v3635 = vsel %vm3631, %v3634, %v3628
        %v3636 = vshrl.u32 %v3635, 31
        %v3637 = vshll.u32 %v3633, 1
        %v3638 = vor.u32 %v3637, %v3636
        %v3639 = vshll.u32 %v3635, 1
        %v3640 = vadd.s32 %v3638, 2147483648
        %v3641 = vadd.s32 %v3360, 2147483648
        %vm3642 = vcmp.ge.s32.totalorder %v3640, %v3641
        %v3643 = vsub.s32 %v3638, %v3360
        %v3644 = vsel %vm3642, %v3643, %v3638
        %v3645 = vadd.s32 %v3639, 1
        %v3646 = vsel %vm3642, %v3645, %v3639
        %v3647 = vshrl.u32 %v3646, 31
        %v3648 = vshll.u32 %v3644, 1
        %v3649 = vor.u32 %v3648, %v3647
        %v3650 = vshll.u32 %v3646, 1
        %v3651 = vadd.s32 %v3649, 2147483648
        %v3652 = vadd.s32 %v3360, 2147483648
        %vm3653 = vcmp.ge.s32.totalorder %v3651, %v3652
        %v3654 = vsub.s32 %v3649, %v3360
        %v3655 = vsel %vm3653, %v3654, %v3649
        %v3656 = vadd.s32 %v3650, 1
        %v3657 = vsel %vm3653, %v3656, %v3650
        %v3658 = vshrl.u32 %v3657, 31
        %v3659 = vshll.u32 %v3655, 1
        %v3660 = vor.u32 %v3659, %v3658
        %v3661 = vshll.u32 %v3657, 1
        %v3662 = vadd.s32 %v3660, 2147483648
        %v3663 = vadd.s32 %v3360, 2147483648
        %vm3664 = vcmp.ge.s32.totalorder %v3662, %v3663
        %v3665 = vsub.s32 %v3660, %v3360
        %v3666 = vsel %vm3664, %v3665, %v3660
        %v3667 = vadd.s32 %v3661, 1
        %v3668 = vsel %vm3664, %v3667, %v3661
        %v3669 = vshrl.u32 %v3668, 31
        %v3670 = vshll.u32 %v3666, 1
        %v3671 = vor.u32 %v3670, %v3669
        %v3672 = vshll.u32 %v3668, 1
        %v3673 = vadd.s32 %v3671, 2147483648
        %v3674 = vadd.s32 %v3360, 2147483648
        %vm3675 = vcmp.ge.s32.totalorder %v3673, %v3674
        %v3676 = vsub.s32 %v3671, %v3360
        %v3677 = vsel %vm3675, %v3676, %v3671
        %v3678 = vadd.s32 %v3672, 1
        %v3679 = vsel %vm3675, %v3678, %v3672
        %v3680 = vshrl.u32 %v3679, 31
        %v3681 = vshll.u32 %v3677, 1
        %v3682 = vor.u32 %v3681, %v3680
        %v3683 = vshll.u32 %v3679, 1
        %v3684 = vadd.s32 %v3682, 2147483648
        %v3685 = vadd.s32 %v3360, 2147483648
        %vm3686 = vcmp.ge.s32.totalorder %v3684, %v3685
        %v3687 = vsub.s32 %v3682, %v3360
        %v3688 = vsel %vm3686, %v3687, %v3682
        %v3689 = vadd.s32 %v3683, 1
        %v3690 = vsel %vm3686, %v3689, %v3683
        %v3691 = vshrl.u32 %v3690, 31
        %v3692 = vshll.u32 %v3688, 1
        %v3693 = vor.u32 %v3692, %v3691
        %v3694 = vshll.u32 %v3690, 1
        %v3695 = vadd.s32 %v3693, 2147483648
        %v3696 = vadd.s32 %v3360, 2147483648
        %vm3697 = vcmp.ge.s32.totalorder %v3695, %v3696
        %v3698 = vsub.s32 %v3693, %v3360
        %v3699 = vsel %vm3697, %v3698, %v3693
        %v3700 = vadd.s32 %v3694, 1
        %v3701 = vsel %vm3697, %v3700, %v3694
        %v3702 = vshrl.u32 %v3701, 31
        %v3703 = vshll.u32 %v3699, 1
        %v3704 = vor.u32 %v3703, %v3702
        %v3705 = vshll.u32 %v3701, 1
        %v3706 = vadd.s32 %v3704, 2147483648
        %v3707 = vadd.s32 %v3360, 2147483648
        %vm3708 = vcmp.ge.s32.totalorder %v3706, %v3707
        %v3709 = vsub.s32 %v3704, %v3360
        %v3710 = vsel %vm3708, %v3709, %v3704
        %v3711 = vadd.s32 %v3705, 1
        %v3712 = vsel %vm3708, %v3711, %v3705
        %v3713 = vsub.s32 0, %v3710
        %v3714 = vsel %vm3355, %v3713, %v3710
        %vm3715 = vcmp.ne.s32.totalorder %v3714, 0
        %vm3716 = vcmp.lt.s32.totalorder %v3714, 0
        %vm3717 = vmxor %vm3716, %vm773
        %vm3718 = vmand %vm3717, %vm3715
        %v3719 = vadd.s32 %v3714, %v407
        %v3720 = vsel %vm3718, %v3719, %v3714
        %v3721 = vsel %vm780, %v3352, %v3720
        %v3722 = vperm.slane %v3721, 0
        %vm3723 = vcmp.eq.s32.totalorder %v356, %v3722
        %vm3724 = vcmp.eq.s32.totalorder %v357, %v3722
        %vm3725 = vcmp.eq.s32.totalorder %v358, %v3722
        %vm3726 = vcmp.eq.s32.totalorder %v359, %v3722
        %vm3727 = vcmp.eq.s32.totalorder %v360, %v3722
        %vm3728 = vcmp.eq.s32.totalorder %v361, %v3722
        %vm3729 = vcmp.eq.s32.totalorder %v362, %v3722
        %vm3730 = vcmp.eq.s32.totalorder %v363, %v3722
        %vm3731 = vcmp.eq.s32.totalorder %v364, %v3722
        %vm3732 = vcmp.eq.s32.totalorder %v365, %v3722
        %vm3733 = vcmp.eq.s32.totalorder %v366, %v3722
        %vm3734 = vcmp.eq.s32.totalorder %v367, %v3722
        %vm3735 = vcmp.eq.s32.totalorder %v368, %v3722
        %vm3736 = vcmp.eq.s32.totalorder %v369, %v3722
        %vm3737 = vcmp.eq.s32.totalorder %v370, %v3722
        %vm3738 = vcmp.eq.s32.totalorder %v371, %v3722
        %vm3739 = vcmp.eq.s32.totalorder %v372, %v3722
        %vm3740 = vcmp.eq.s32.totalorder %v373, %v3722
        %vm3741 = vcmp.eq.s32.totalorder %v374, %v3722
        %vm3742 = vcmp.eq.s32.totalorder %v375, %v3722
        %vm3743 = vcmp.eq.s32.totalorder %v376, %v3722
        %vm3744 = vcmp.eq.s32.totalorder %v377, %v3722
        %vm3745 = vcmp.eq.s32.totalorder %v378, %v3722
        %vm3746 = vcmp.eq.s32.totalorder %v379, %v3722
        %vm3747 = vcmp.eq.s32.totalorder %v380, %v3722
        %vm3748 = vcmp.eq.s32.totalorder %v381, %v3722
        %vm3749 = vcmp.eq.s32.totalorder %v382, %v3722
        %vm3750 = vcmp.eq.s32.totalorder %v383, %v3722
        %vm3751 = vcmp.eq.s32.totalorder %v384, %v3722
        %vm3752 = vcmp.eq.s32.totalorder %v385, %v3722
        %vm3753 = vcmp.eq.s32.totalorder %v386, %v3722
        %vm3754 = vcmp.eq.s32.totalorder %v387, %v3722
        %v3755 = vsel %vm3723, 1.0, 0.0
        %v3756 = vsel %vm3724, 1.0, 0.0
        %v3757 = vsel %vm3725, 1.0, 0.0
        %v3758 = vsel %vm3726, 1.0, 0.0
        %v3759 = vsel %vm3727, 1.0, 0.0
        %v3760 = vsel %vm3728, 1.0, 0.0
        %v3761 = vsel %vm3729, 1.0, 0.0
        %v3762 = vsel %vm3730, 1.0, 0.0
        %v3763 = vsel %vm3731, 1.0, 0.0
        %v3764 = vsel %vm3732, 1.0, 0.0
        %v3765 = vsel %vm3733, 1.0, 0.0
        %v3766 = vsel %vm3734, 1.0, 0.0
        %v3767 = vsel %vm3735, 1.0, 0.0
        %v3768 = vsel %vm3736, 1.0, 0.0
        %v3769 = vsel %vm3737, 1.0, 0.0
        %v3770 = vsel %vm3738, 1.0, 0.0
        %v3771 = vsel %vm3739, 1.0, 0.0
        %v3772 = vsel %vm3740, 1.0, 0.0
        %v3773 = vsel %vm3741, 1.0, 0.0
        %v3774 = vsel %vm3742, 1.0, 0.0
        %v3775 = vsel %vm3743, 1.0, 0.0
        %v3776 = vsel %vm3744, 1.0, 0.0
        %v3777 = vsel %vm3745, 1.0, 0.0
        %v3778 = vsel %vm3746, 1.0, 0.0
        %v3779 = vsel %vm3747, 1.0, 0.0
        %v3780 = vsel %vm3748, 1.0, 0.0
        %v3781 = vsel %vm3749, 1.0, 0.0
        %v3782 = vsel %vm3750, 1.0, 0.0
        %v3783 = vsel %vm3751, 1.0, 0.0
        %v3784 = vsel %vm3752, 1.0, 0.0
        %v3785 = vsel %vm3753, 1.0, 0.0
        %v3786 = vsel %vm3754, 1.0, 0.0
        %3788 = vst [vmem:[#allocation1] ss:$4 sm:$0xff] %v354
        %v3789 = vld.sshfl [vmem:[#allocation1] sm:$0xff pattern:$0x73625140]
        %v3790 = vld.sshfl [vmem:[#allocation1 + $0x8] sm:$0xff pattern:$0x73625140]
        %3793 = vmatpush.msra.mxu0 %v3770
        %3794 = vmatpush.msra.mxu0 %v3769
        %3795 = vmatpush.msra.mxu0 %v3768
        %3796 = vmatpush.msra.mxu0 %v3767
        %3797 = vmatpush.msra.mxu0 %v3766
        %3798 = vmatpush.msra.mxu0 %v3765
        %3799 = vmatpush.msra.mxu0 %v3764
        %3800 = vmatpush.msra.mxu0 %v3763
        %3801 = vmatpush.msra.mxu0 %v3762
        %3802 = vmatpush.msra.mxu0 %v3761
        %3803 = vmatpush.msra.mxu0 %v3760
        %3804 = vmatpush.msra.mxu0 %v3759
        %3805 = vmatpush.msra.mxu0 %v3758
        %3806 = vmatpush.msra.mxu0 %v3757
        %3807 = vmatpush.msra.mxu0 %v3756
        %3808 = vmatpush.msra.mxu0 %v3755
        %3809 = vmatmul.f32.gmra.mxu0 %v3789
        %v3810 = vpop.f32.mrf.mxu0
        %v3811 = vadd.f32 0.0, %v3810
        %3812 = vdwg.mxu0
        %3813 = vmatpush.msra.mxu0 %v3786
        %3814 = vmatpush.msra.mxu0 %v3785
        %3815 = vmatpush.msra.mxu0 %v3784
        %3816 = vmatpush.msra.mxu0 %v3783
        %3817 = vmatpush.msra.mxu0 %v3782
        %3818 = vmatpush.msra.mxu0 %v3781
        %3819 = vmatpush.msra.mxu0 %v3780
        %3820 = vmatpush.msra.mxu0 %v3779
        %3821 = vmatpush.msra.mxu0 %v3778
        %3822 = vmatpush.msra.mxu0 %v3777
        %3823 = vmatpush.msra.mxu0 %v3776
        %3824 = vmatpush.msra.mxu0 %v3775
        %3825 = vmatpush.msra.mxu0 %v3774
        %3826 = vmatpush.msra.mxu0 %v3773
        %3827 = vmatpush.msra.mxu0 %v3772
        %3828 = vmatpush.msra.mxu0 %v3771
        %3829 = vmatmul.f32.gmra.mxu0 %v3790
        %v3830 = vpop.f32.mrf.mxu0
        %v3831 = vadd.f32 %v3811, %v3830
        %3832 = vdwg.mxu0
        %v3833 = vmul.f32 %v1392, %v1887
        %v3834 = vmul.f32 %v3833, %v899
        %v3835 = vperm.slane %v3834, 0
        %v3836 = vmul.f32 %v3831, %v3835
        %v3837 = vadd.f32 %v3349, %v3836
        %v3838 = vxor.u32 %v3350, %v908
        %v3839 = vand.u32 %v3838, %v395
        %v3840 = vadd.s32 %v3353, %v912
        %vm3841 = vcmp.lt.s32.totalorder %v3840, 0
        %v3842 = vsub.s32 0, %v3840
        %v3843 = vsel %vm3841, %v3842, %v3840
        %vm3844 = vcmp.lt.s32.totalorder %v407, 0
        %v3845 = vsub.s32 0, %v407
        %v3846 = vsel %vm3844, %v3845, %v407
        %v3847 = vshrl.u32 %v3843, 31
        %v3849 = vor.u32 0, %v3847
        %v3850 = vshll.u32 %v3843, 1
        %v3851 = vadd.s32 %v3849, 2147483648
        %v3852 = vadd.s32 %v3846, 2147483648
        %vm3853 = vcmp.ge.s32.totalorder %v3851, %v3852
        %v3854 = vsub.s32 %v3849, %v3846
        %v3855 = vsel %vm3853, %v3854, %v3849
        %v3856 = vadd.s32 %v3850, 1
        %v3857 = vsel %vm3853, %v3856, %v3850
        %v3858 = vshrl.u32 %v3857, 31
        %v3859 = vshll.u32 %v3855, 1
        %v3860 = vor.u32 %v3859, %v3858
        %v3861 = vshll.u32 %v3857, 1
        %v3862 = vadd.s32 %v3860, 2147483648
        %v3863 = vadd.s32 %v3846, 2147483648
        %vm3864 = vcmp.ge.s32.totalorder %v3862, %v3863
        %v3865 = vsub.s32 %v3860, %v3846
        %v3866 = vsel %vm3864, %v3865, %v3860
        %v3867 = vadd.s32 %v3861, 1
        %v3868 = vsel %vm3864, %v3867, %v3861
        %v3869 = vshrl.u32 %v3868, 31
        %v3870 = vshll.u32 %v3866, 1
        %v3871 = vor.u32 %v3870, %v3869
        %v3872 = vshll.u32 %v3868, 1
        %v3873 = vadd.s32 %v3871, 2147483648
        %v3874 = vadd.s32 %v3846, 2147483648
        %vm3875 = vcmp.ge.s32.totalorder %v3873, %v3874
        %v3876 = vsub.s32 %v3871, %v3846
        %v3877 = vsel %vm3875, %v3876, %v3871
        %v3878 = vadd.s32 %v3872, 1
        %v3879 = vsel %vm3875, %v3878, %v3872
        %v3880 = vshrl.u32 %v3879, 31
        %v3881 = vshll.u32 %v3877, 1
        %v3882 = vor.u32 %v3881, %v3880
        %v3883 = vshll.u32 %v3879, 1
        %v3884 = vadd.s32 %v3882, 2147483648
        %v3885 = vadd.s32 %v3846, 2147483648
        %vm3886 = vcmp.ge.s32.totalorder %v3884, %v3885
        %v3887 = vsub.s32 %v3882, %v3846
        %v3888 = vsel %vm3886, %v3887, %v3882
        %v3889 = vadd.s32 %v3883, 1
        %v3890 = vsel %vm3886, %v3889, %v3883
        %v3891 = vshrl.u32 %v3890, 31
        %v3892 = vshll.u32 %v3888, 1
        %v3893 = vor.u32 %v3892, %v3891
        %v3894 = vshll.u32 %v3890, 1
        %v3895 = vadd.s32 %v3893, 2147483648
        %v3896 = vadd.s32 %v3846, 2147483648
        %vm3897 = vcmp.ge.s32.totalorder %v3895, %v3896
        %v3898 = vsub.s32 %v3893, %v3846
        %v3899 = vsel %vm3897, %v3898, %v3893
        %v3900 = vadd.s32 %v3894, 1
        %v3901 = vsel %vm3897, %v3900, %v3894
        %v3902 = vshrl.u32 %v3901, 31
        %v3903 = vshll.u32 %v3899, 1
        %v3904 = vor.u32 %v3903, %v3902
        %v3905 = vshll.u32 %v3901, 1
        %v3906 = vadd.s32 %v3904, 2147483648
        %v3907 = vadd.s32 %v3846, 2147483648
        %vm3908 = vcmp.ge.s32.totalorder %v3906, %v3907
        %v3909 = vsub.s32 %v3904, %v3846
        %v3910 = vsel %vm3908, %v3909, %v3904
        %v3911 = vadd.s32 %v3905, 1
        %v3912 = vsel %vm3908, %v3911, %v3905
        %v3913 = vshrl.u32 %v3912, 31
        %v3914 = vshll.u32 %v3910, 1
        %v3915 = vor.u32 %v3914, %v3913
        %v3916 = vshll.u32 %v3912, 1
        %v3917 = vadd.s32 %v3915, 2147483648
        %v3918 = vadd.s32 %v3846, 2147483648
        %vm3919 = vcmp.ge.s32.totalorder %v3917, %v3918
        %v3920 = vsub.s32 %v3915, %v3846
        %v3921 = vsel %vm3919, %v3920, %v3915
        %v3922 = vadd.s32 %v3916, 1
        %v3923 = vsel %vm3919, %v3922, %v3916
        %v3924 = vshrl.u32 %v3923, 31
        %v3925 = vshll.u32 %v3921, 1
        %v3926 = vor.u32 %v3925, %v3924
        %v3927 = vshll.u32 %v3923, 1
        %v3928 = vadd.s32 %v3926, 2147483648
        %v3929 = vadd.s32 %v3846, 2147483648
        %vm3930 = vcmp.ge.s32.totalorder %v3928, %v3929
        %v3931 = vsub.s32 %v3926, %v3846
        %v3932 = vsel %vm3930, %v3931, %v3926
        %v3933 = vadd.s32 %v3927, 1
        %v3934 = vsel %vm3930, %v3933, %v3927
        %v3935 = vshrl.u32 %v3934, 31
        %v3936 = vshll.u32 %v3932, 1
        %v3937 = vor.u32 %v3936, %v3935
        %v3938 = vshll.u32 %v3934, 1
        %v3939 = vadd.s32 %v3937, 2147483648
        %v3940 = vadd.s32 %v3846, 2147483648
        %vm3941 = vcmp.ge.s32.totalorder %v3939, %v3940
        %v3942 = vsub.s32 %v3937, %v3846
        %v3943 = vsel %vm3941, %v3942, %v3937
        %v3944 = vadd.s32 %v3938, 1
        %v3945 = vsel %vm3941, %v3944, %v3938
        %v3946 = vshrl.u32 %v3945, 31
        %v3947 = vshll.u32 %v3943, 1
        %v3948 = vor.u32 %v3947, %v3946
        %v3949 = vshll.u32 %v3945, 1
        %v3950 = vadd.s32 %v3948, 2147483648
        %v3951 = vadd.s32 %v3846, 2147483648
        %vm3952 = vcmp.ge.s32.totalorder %v3950, %v3951
        %v3953 = vsub.s32 %v3948, %v3846
        %v3954 = vsel %vm3952, %v3953, %v3948
        %v3955 = vadd.s32 %v3949, 1
        %v3956 = vsel %vm3952, %v3955, %v3949
        %v3957 = vshrl.u32 %v3956, 31
        %v3958 = vshll.u32 %v3954, 1
        %v3959 = vor.u32 %v3958, %v3957
        %v3960 = vshll.u32 %v3956, 1
        %v3961 = vadd.s32 %v3959, 2147483648
        %v3962 = vadd.s32 %v3846, 2147483648
        %vm3963 = vcmp.ge.s32.totalorder %v3961, %v3962
        %v3964 = vsub.s32 %v3959, %v3846
        %v3965 = vsel %vm3963, %v3964, %v3959
        %v3966 = vadd.s32 %v3960, 1
        %v3967 = vsel %vm3963, %v3966, %v3960
        %v3968 = vshrl.u32 %v3967, 31
        %v3969 = vshll.u32 %v3965, 1
        %v3970 = vor.u32 %v3969, %v3968
        %v3971 = vshll.u32 %v3967, 1
        %v3972 = vadd.s32 %v3970, 2147483648
        %v3973 = vadd.s32 %v3846, 2147483648
        %vm3974 = vcmp.ge.s32.totalorder %v3972, %v3973
        %v3975 = vsub.s32 %v3970, %v3846
        %v3976 = vsel %vm3974, %v3975, %v3970
        %v3977 = vadd.s32 %v3971, 1
        %v3978 = vsel %vm3974, %v3977, %v3971
        %v3979 = vshrl.u32 %v3978, 31
        %v3980 = vshll.u32 %v3976, 1
        %v3981 = vor.u32 %v3980, %v3979
        %v3982 = vshll.u32 %v3978, 1
        %v3983 = vadd.s32 %v3981, 2147483648
        %v3984 = vadd.s32 %v3846, 2147483648
        %vm3985 = vcmp.ge.s32.totalorder %v3983, %v3984
        %v3986 = vsub.s32 %v3981, %v3846
        %v3987 = vsel %vm3985, %v3986, %v3981
        %v3988 = vadd.s32 %v3982, 1
        %v3989 = vsel %vm3985, %v3988, %v3982
        %v3990 = vshrl.u32 %v3989, 31
        %v3991 = vshll.u32 %v3987, 1
        %v3992 = vor.u32 %v3991, %v3990
        %v3993 = vshll.u32 %v3989, 1
        %v3994 = vadd.s32 %v3992, 2147483648
        %v3995 = vadd.s32 %v3846, 2147483648
        %vm3996 = vcmp.ge.s32.totalorder %v3994, %v3995
        %v3997 = vsub.s32 %v3992, %v3846
        %v3998 = vsel %vm3996, %v3997, %v3992
        %v3999 = vadd.s32 %v3993, 1
        %v4000 = vsel %vm3996, %v3999, %v3993
        %v4001 = vshrl.u32 %v4000, 31
        %v4002 = vshll.u32 %v3998, 1
        %v4003 = vor.u32 %v4002, %v4001
        %v4004 = vshll.u32 %v4000, 1
        %v4005 = vadd.s32 %v4003, 2147483648
        %v4006 = vadd.s32 %v3846, 2147483648
        %vm4007 = vcmp.ge.s32.totalorder %v4005, %v4006
        %v4008 = vsub.s32 %v4003, %v3846
        %v4009 = vsel %vm4007, %v4008, %v4003
        %v4010 = vadd.s32 %v4004, 1
        %v4011 = vsel %vm4007, %v4010, %v4004
        %v4012 = vshrl.u32 %v4011, 31
        %v4013 = vshll.u32 %v4009, 1
        %v4014 = vor.u32 %v4013, %v4012
        %v4015 = vshll.u32 %v4011, 1
        %v4016 = vadd.s32 %v4014, 2147483648
        %v4017 = vadd.s32 %v3846, 2147483648
        %vm4018 = vcmp.ge.s32.totalorder %v4016, %v4017
        %v4019 = vsub.s32 %v4014, %v3846
        %v4020 = vsel %vm4018, %v4019, %v4014
        %v4021 = vadd.s32 %v4015, 1
        %v4022 = vsel %vm4018, %v4021, %v4015
        %v4023 = vshrl.u32 %v4022, 31
        %v4024 = vshll.u32 %v4020, 1
        %v4025 = vor.u32 %v4024, %v4023
        %v4026 = vshll.u32 %v4022, 1
        %v4027 = vadd.s32 %v4025, 2147483648
        %v4028 = vadd.s32 %v3846, 2147483648
        %vm4029 = vcmp.ge.s32.totalorder %v4027, %v4028
        %v4030 = vsub.s32 %v4025, %v3846
        %v4031 = vsel %vm4029, %v4030, %v4025
        %v4032 = vadd.s32 %v4026, 1
        %v4033 = vsel %vm4029, %v4032, %v4026
        %v4034 = vshrl.u32 %v4033, 31
        %v4035 = vshll.u32 %v4031, 1
        %v4036 = vor.u32 %v4035, %v4034
        %v4037 = vshll.u32 %v4033, 1
        %v4038 = vadd.s32 %v4036, 2147483648
        %v4039 = vadd.s32 %v3846, 2147483648
        %vm4040 = vcmp.ge.s32.totalorder %v4038, %v4039
        %v4041 = vsub.s32 %v4036, %v3846
        %v4042 = vsel %vm4040, %v4041, %v4036
        %v4043 = vadd.s32 %v4037, 1
        %v4044 = vsel %vm4040, %v4043, %v4037
        %v4045 = vshrl.u32 %v4044, 31
        %v4046 = vshll.u32 %v4042, 1
        %v4047 = vor.u32 %v4046, %v4045
        %v4048 = vshll.u32 %v4044, 1
        %v4049 = vadd.s32 %v4047, 2147483648
        %v4050 = vadd.s32 %v3846, 2147483648
        %vm4051 = vcmp.ge.s32.totalorder %v4049, %v4050
        %v4052 = vsub.s32 %v4047, %v3846
        %v4053 = vsel %vm4051, %v4052, %v4047
        %v4054 = vadd.s32 %v4048, 1
        %v4055 = vsel %vm4051, %v4054, %v4048
        %v4056 = vshrl.u32 %v4055, 31
        %v4057 = vshll.u32 %v4053, 1
        %v4058 = vor.u32 %v4057, %v4056
        %v4059 = vshll.u32 %v4055, 1
        %v4060 = vadd.s32 %v4058, 2147483648
        %v4061 = vadd.s32 %v3846, 2147483648
        %vm4062 = vcmp.ge.s32.totalorder %v4060, %v4061
        %v4063 = vsub.s32 %v4058, %v3846
        %v4064 = vsel %vm4062, %v4063, %v4058
        %v4065 = vadd.s32 %v4059, 1
        %v4066 = vsel %vm4062, %v4065, %v4059
        %v4067 = vshrl.u32 %v4066, 31
        %v4068 = vshll.u32 %v4064, 1
        %v4069 = vor.u32 %v4068, %v4067
        %v4070 = vshll.u32 %v4066, 1
        %v4071 = vadd.s32 %v4069, 2147483648
        %v4072 = vadd.s32 %v3846, 2147483648
        %vm4073 = vcmp.ge.s32.totalorder %v4071, %v4072
        %v4074 = vsub.s32 %v4069, %v3846
        %v4075 = vsel %vm4073, %v4074, %v4069
        %v4076 = vadd.s32 %v4070, 1
        %v4077 = vsel %vm4073, %v4076, %v4070
        %v4078 = vshrl.u32 %v4077, 31
        %v4079 = vshll.u32 %v4075, 1
        %v4080 = vor.u32 %v4079, %v4078
        %v4081 = vshll.u32 %v4077, 1
        %v4082 = vadd.s32 %v4080, 2147483648
        %v4083 = vadd.s32 %v3846, 2147483648
        %vm4084 = vcmp.ge.s32.totalorder %v4082, %v4083
        %v4085 = vsub.s32 %v4080, %v3846
        %v4086 = vsel %vm4084, %v4085, %v4080
        %v4087 = vadd.s32 %v4081, 1
        %v4088 = vsel %vm4084, %v4087, %v4081
        %v4089 = vshrl.u32 %v4088, 31
        %v4090 = vshll.u32 %v4086, 1
        %v4091 = vor.u32 %v4090, %v4089
        %v4092 = vshll.u32 %v4088, 1
        %v4093 = vadd.s32 %v4091, 2147483648
        %v4094 = vadd.s32 %v3846, 2147483648
        %vm4095 = vcmp.ge.s32.totalorder %v4093, %v4094
        %v4096 = vsub.s32 %v4091, %v3846
        %v4097 = vsel %vm4095, %v4096, %v4091
        %v4098 = vadd.s32 %v4092, 1
        %v4099 = vsel %vm4095, %v4098, %v4092
        %v4100 = vshrl.u32 %v4099, 31
        %v4101 = vshll.u32 %v4097, 1
        %v4102 = vor.u32 %v4101, %v4100
        %v4103 = vshll.u32 %v4099, 1
        %v4104 = vadd.s32 %v4102, 2147483648
        %v4105 = vadd.s32 %v3846, 2147483648
        %vm4106 = vcmp.ge.s32.totalorder %v4104, %v4105
        %v4107 = vsub.s32 %v4102, %v3846
        %v4108 = vsel %vm4106, %v4107, %v4102
        %v4109 = vadd.s32 %v4103, 1
        %v4110 = vsel %vm4106, %v4109, %v4103
        %v4111 = vshrl.u32 %v4110, 31
        %v4112 = vshll.u32 %v4108, 1
        %v4113 = vor.u32 %v4112, %v4111
        %v4114 = vshll.u32 %v4110, 1
        %v4115 = vadd.s32 %v4113, 2147483648
        %v4116 = vadd.s32 %v3846, 2147483648
        %vm4117 = vcmp.ge.s32.totalorder %v4115, %v4116
        %v4118 = vsub.s32 %v4113, %v3846
        %v4119 = vsel %vm4117, %v4118, %v4113
        %v4120 = vadd.s32 %v4114, 1
        %v4121 = vsel %vm4117, %v4120, %v4114
        %v4122 = vshrl.u32 %v4121, 31
        %v4123 = vshll.u32 %v4119, 1
        %v4124 = vor.u32 %v4123, %v4122
        %v4125 = vshll.u32 %v4121, 1
        %v4126 = vadd.s32 %v4124, 2147483648
        %v4127 = vadd.s32 %v3846, 2147483648
        %vm4128 = vcmp.ge.s32.totalorder %v4126, %v4127
        %v4129 = vsub.s32 %v4124, %v3846
        %v4130 = vsel %vm4128, %v4129, %v4124
        %v4131 = vadd.s32 %v4125, 1
        %v4132 = vsel %vm4128, %v4131, %v4125
        %v4133 = vshrl.u32 %v4132, 31
        %v4134 = vshll.u32 %v4130, 1
        %v4135 = vor.u32 %v4134, %v4133
        %v4136 = vshll.u32 %v4132, 1
        %v4137 = vadd.s32 %v4135, 2147483648
        %v4138 = vadd.s32 %v3846, 2147483648
        %vm4139 = vcmp.ge.s32.totalorder %v4137, %v4138
        %v4140 = vsub.s32 %v4135, %v3846
        %v4141 = vsel %vm4139, %v4140, %v4135
        %v4142 = vadd.s32 %v4136, 1
        %v4143 = vsel %vm4139, %v4142, %v4136
        %v4144 = vshrl.u32 %v4143, 31
        %v4145 = vshll.u32 %v4141, 1
        %v4146 = vor.u32 %v4145, %v4144
        %v4147 = vshll.u32 %v4143, 1
        %v4148 = vadd.s32 %v4146, 2147483648
        %v4149 = vadd.s32 %v3846, 2147483648
        %vm4150 = vcmp.ge.s32.totalorder %v4148, %v4149
        %v4151 = vsub.s32 %v4146, %v3846
        %v4152 = vsel %vm4150, %v4151, %v4146
        %v4153 = vadd.s32 %v4147, 1
        %v4154 = vsel %vm4150, %v4153, %v4147
        %v4155 = vshrl.u32 %v4154, 31
        %v4156 = vshll.u32 %v4152, 1
        %v4157 = vor.u32 %v4156, %v4155
        %v4158 = vshll.u32 %v4154, 1
        %v4159 = vadd.s32 %v4157, 2147483648
        %v4160 = vadd.s32 %v3846, 2147483648
        %vm4161 = vcmp.ge.s32.totalorder %v4159, %v4160
        %v4162 = vsub.s32 %v4157, %v3846
        %v4163 = vsel %vm4161, %v4162, %v4157
        %v4164 = vadd.s32 %v4158, 1
        %v4165 = vsel %vm4161, %v4164, %v4158
        %v4166 = vshrl.u32 %v4165, 31
        %v4167 = vshll.u32 %v4163, 1
        %v4168 = vor.u32 %v4167, %v4166
        %v4169 = vshll.u32 %v4165, 1
        %v4170 = vadd.s32 %v4168, 2147483648
        %v4171 = vadd.s32 %v3846, 2147483648
        %vm4172 = vcmp.ge.s32.totalorder %v4170, %v4171
        %v4173 = vsub.s32 %v4168, %v3846
        %v4174 = vsel %vm4172, %v4173, %v4168
        %v4175 = vadd.s32 %v4169, 1
        %v4176 = vsel %vm4172, %v4175, %v4169
        %v4177 = vshrl.u32 %v4176, 31
        %v4178 = vshll.u32 %v4174, 1
        %v4179 = vor.u32 %v4178, %v4177
        %v4180 = vshll.u32 %v4176, 1
        %v4181 = vadd.s32 %v4179, 2147483648
        %v4182 = vadd.s32 %v3846, 2147483648
        %vm4183 = vcmp.ge.s32.totalorder %v4181, %v4182
        %v4184 = vsub.s32 %v4179, %v3846
        %v4185 = vsel %vm4183, %v4184, %v4179
        %v4186 = vadd.s32 %v4180, 1
        %v4187 = vsel %vm4183, %v4186, %v4180
        %v4188 = vshrl.u32 %v4187, 31
        %v4189 = vshll.u32 %v4185, 1
        %v4190 = vor.u32 %v4189, %v4188
        %v4191 = vshll.u32 %v4187, 1
        %v4192 = vadd.s32 %v4190, 2147483648
        %v4193 = vadd.s32 %v3846, 2147483648
        %vm4194 = vcmp.ge.s32.totalorder %v4192, %v4193
        %v4195 = vsub.s32 %v4190, %v3846
        %v4196 = vsel %vm4194, %v4195, %v4190
        %v4197 = vadd.s32 %v4191, 1
        %v4198 = vsel %vm4194, %v4197, %v4191
        %v4199 = vsub.s32 0, %v4196
        %v4200 = vsel %vm3841, %v4199, %v4196
        %vm4201 = vcmp.ne.s32.totalorder %v4200, 0
        %vm4202 = vcmp.lt.s32.totalorder %v4200, 0
        %vm4203 = vmxor %vm4202, %vm773
        %vm4204 = vmand %vm4203, %vm4201
        %v4205 = vadd.s32 %v4200, %v407
        %v4206 = vsel %vm4204, %v4205, %v4200
        %v4207 = vsel %vm780, %v3839, %v4206
        %v4208 = vperm.slane %v4207, 0
        %vm4209 = vcmp.eq.s32.totalorder %v356, %v4208
        %vm4210 = vcmp.eq.s32.totalorder %v357, %v4208
        %vm4211 = vcmp.eq.s32.totalorder %v358, %v4208
        %vm4212 = vcmp.eq.s32.totalorder %v359, %v4208
        %vm4213 = vcmp.eq.s32.totalorder %v360, %v4208
        %vm4214 = vcmp.eq.s32.totalorder %v361, %v4208
        %vm4215 = vcmp.eq.s32.totalorder %v362, %v4208
        %vm4216 = vcmp.eq.s32.totalorder %v363, %v4208
        %vm4217 = vcmp.eq.s32.totalorder %v364, %v4208
        %vm4218 = vcmp.eq.s32.totalorder %v365, %v4208
        %vm4219 = vcmp.eq.s32.totalorder %v366, %v4208
        %vm4220 = vcmp.eq.s32.totalorder %v367, %v4208
        %vm4221 = vcmp.eq.s32.totalorder %v368, %v4208
        %vm4222 = vcmp.eq.s32.totalorder %v369, %v4208
        %vm4223 = vcmp.eq.s32.totalorder %v370, %v4208
        %vm4224 = vcmp.eq.s32.totalorder %v371, %v4208
        %vm4225 = vcmp.eq.s32.totalorder %v372, %v4208
        %vm4226 = vcmp.eq.s32.totalorder %v373, %v4208
        %vm4227 = vcmp.eq.s32.totalorder %v374, %v4208
        %vm4228 = vcmp.eq.s32.totalorder %v375, %v4208
        %vm4229 = vcmp.eq.s32.totalorder %v376, %v4208
        %vm4230 = vcmp.eq.s32.totalorder %v377, %v4208
        %vm4231 = vcmp.eq.s32.totalorder %v378, %v4208
        %vm4232 = vcmp.eq.s32.totalorder %v379, %v4208
        %vm4233 = vcmp.eq.s32.totalorder %v380, %v4208
        %vm4234 = vcmp.eq.s32.totalorder %v381, %v4208
        %vm4235 = vcmp.eq.s32.totalorder %v382, %v4208
        %vm4236 = vcmp.eq.s32.totalorder %v383, %v4208
        %vm4237 = vcmp.eq.s32.totalorder %v384, %v4208
        %vm4238 = vcmp.eq.s32.totalorder %v385, %v4208
        %vm4239 = vcmp.eq.s32.totalorder %v386, %v4208
        %vm4240 = vcmp.eq.s32.totalorder %v387, %v4208
        %v4241 = vsel %vm4209, 1.0, 0.0
        %v4242 = vsel %vm4210, 1.0, 0.0
        %v4243 = vsel %vm4211, 1.0, 0.0
        %v4244 = vsel %vm4212, 1.0, 0.0
        %v4245 = vsel %vm4213, 1.0, 0.0
        %v4246 = vsel %vm4214, 1.0, 0.0
        %v4247 = vsel %vm4215, 1.0, 0.0
        %v4248 = vsel %vm4216, 1.0, 0.0
        %v4249 = vsel %vm4217, 1.0, 0.0
        %v4250 = vsel %vm4218, 1.0, 0.0
        %v4251 = vsel %vm4219, 1.0, 0.0
        %v4252 = vsel %vm4220, 1.0, 0.0
        %v4253 = vsel %vm4221, 1.0, 0.0
        %v4254 = vsel %vm4222, 1.0, 0.0
        %v4255 = vsel %vm4223, 1.0, 0.0
        %v4256 = vsel %vm4224, 1.0, 0.0
        %v4257 = vsel %vm4225, 1.0, 0.0
        %v4258 = vsel %vm4226, 1.0, 0.0
        %v4259 = vsel %vm4227, 1.0, 0.0
        %v4260 = vsel %vm4228, 1.0, 0.0
        %v4261 = vsel %vm4229, 1.0, 0.0
        %v4262 = vsel %vm4230, 1.0, 0.0
        %v4263 = vsel %vm4231, 1.0, 0.0
        %v4264 = vsel %vm4232, 1.0, 0.0
        %v4265 = vsel %vm4233, 1.0, 0.0
        %v4266 = vsel %vm4234, 1.0, 0.0
        %v4267 = vsel %vm4235, 1.0, 0.0
        %v4268 = vsel %vm4236, 1.0, 0.0
        %v4269 = vsel %vm4237, 1.0, 0.0
        %v4270 = vsel %vm4238, 1.0, 0.0
        %v4271 = vsel %vm4239, 1.0, 0.0
        %v4272 = vsel %vm4240, 1.0, 0.0
        %4273 = vst [vmem:[#allocation1] ss:$4 sm:$0xff] %v354
        %v4274 = vld.sshfl [vmem:[#allocation1 + $0x10] sm:$0xff pattern:$0x73625140]
        %v4275 = vld.sshfl [vmem:[#allocation1 + $0x18] sm:$0xff pattern:$0x73625140]
        %4278 = vmatpush.msra.mxu0 %v4256
        %4279 = vmatpush.msra.mxu0 %v4255
        %4280 = vmatpush.msra.mxu0 %v4254
        %4281 = vmatpush.msra.mxu0 %v4253
        %4282 = vmatpush.msra.mxu0 %v4252
        %4283 = vmatpush.msra.mxu0 %v4251
        %4284 = vmatpush.msra.mxu0 %v4250
        %4285 = vmatpush.msra.mxu0 %v4249
        %4286 = vmatpush.msra.mxu0 %v4248
        %4287 = vmatpush.msra.mxu0 %v4247
        %4288 = vmatpush.msra.mxu0 %v4246
        %4289 = vmatpush.msra.mxu0 %v4245
        %4290 = vmatpush.msra.mxu0 %v4244
        %4291 = vmatpush.msra.mxu0 %v4243
        %4292 = vmatpush.msra.mxu0 %v4242
        %4293 = vmatpush.msra.mxu0 %v4241
        %4294 = vmatmul.f32.gmra.mxu0 %v4274
        %v4295 = vpop.f32.mrf.mxu0
        %v4296 = vadd.f32 0.0, %v4295
        %4297 = vdwg.mxu0
        %4298 = vmatpush.msra.mxu0 %v4272
        %4299 = vmatpush.msra.mxu0 %v4271
        %4300 = vmatpush.msra.mxu0 %v4270
        %4301 = vmatpush.msra.mxu0 %v4269
        %4302 = vmatpush.msra.mxu0 %v4268
        %4303 = vmatpush.msra.mxu0 %v4267
        %4304 = vmatpush.msra.mxu0 %v4266
        %4305 = vmatpush.msra.mxu0 %v4265
        %4306 = vmatpush.msra.mxu0 %v4264
        %4307 = vmatpush.msra.mxu0 %v4263
        %4308 = vmatpush.msra.mxu0 %v4262
        %4309 = vmatpush.msra.mxu0 %v4261
        %4310 = vmatpush.msra.mxu0 %v4260
        %4311 = vmatpush.msra.mxu0 %v4259
        %4312 = vmatpush.msra.mxu0 %v4258
        %4313 = vmatpush.msra.mxu0 %v4257
        %4314 = vmatmul.f32.gmra.mxu0 %v4275
        %v4315 = vpop.f32.mrf.mxu0
        %v4316 = vadd.f32 %v4296, %v4315
        %4317 = vdwg.mxu0
        %v4318 = vmul.f32 %v3833, %v1394
        %v4319 = vperm.slane %v4318, 0
        %v4320 = vmul.f32 %v4316, %v4319
        %v4321 = vadd.f32 %v3837, %v4320
        %4322 = vst [vmem:[%s335] sm:$0x3] %v4321
        %s4323 = sand.u32 %s165, 1
        %s4324 = scalar_lea.sflag [#allocation4], %s4323
        %s4325 = sand.u32 %s165, 1
        %s4326 = smul.addr %s4325, 2
        %s4327 = scalar_lea.vmem [#allocation13], %s4326
        // Predicated region
        $region61: #{tpu_custom_call.1} parent=39 // pred_check
          %p4328 = pneg %p175
        $region62: #{tpu_custom_call.1} parent=39 // pred_check_branch
          %4330 = sbr.rel (%p4328) target = $region64
        $region63: #{tpu_custom_call.1} parent=39 // pred_region
          %4332 = vsyncadd %s4324, 0
          %s4333 = smul.addr %s32, 2
          %s4334 = sadd.s32 %s33, %s4333
          %s4335 = smul.addr %s4334, 2
          %s4336 = scalar_lea.hbm %s5, %s4335
          %s4338 = sshll.u32 %s4327, 4
          %s4339 = int_to_ptr.vmem [resolvable:$true] %s4338
          %s4340 = sshll.u32 %s4336, 4
          %s4341 = int_to_ptr.hbm [resolvable:$true] %s4340
          %4343 = dma.vmem_to_hbm [thread:$0]  %s4339, 32, %s4341, %s4324
        $region64: #{tpu_custom_call.1} parent=39 // pred_fallthru
          _
      $region40: #{tpu_custom_call.1} parent=5 // pred_fallthru
        _
      %p4344 = scmp.le.s32.totalorder 2, %s23
      // Predicated region
      $region65: #{tpu_custom_call.1} parent=5 // pred_check
        %p4345 = pneg %p4344
      $region66: #{tpu_custom_call.1} parent=5 // pred_check_branch
        %4347 = sbr.rel (%p4345) target = $region68
      $region67: #{tpu_custom_call.1} parent=5 // pred_region
        %s4348 = ssub.s32 %s23, 2
        // Predicated region
        $region69: #{tpu_custom_call.1} parent=67 // pred_check
          %p4349 = pneg %p181
        $region70: #{tpu_custom_call.1} parent=67 // pred_check_branch
          %4351 = sbr.rel (%p4349) target = $region72
        $region71: #{tpu_custom_call.1} parent=67 // pred_region
          %s4352 = sand.u32 %s166, 1
          %s4353 = scalar_lea.sflag [#allocation4], %s4352
          %s4354 = sand.u32 %s166, 1
          %s4355 = smul.addr %s4354, 2
          %s4356 = scalar_lea.vmem [#allocation13], %s4355
          %4358 = dma.done %s4353, 32
        $region72: #{tpu_custom_call.1} parent=67 // pred_fallthru
          _
      $region68: #{tpu_custom_call.1} parent=5 // pred_fallthru
        _
    $region6: #{tpu_custom_call.1} parent=1 // loop_footer
      %s27 = sadd.s32 1, %s23
    $region7: #{tpu_custom_call.1} parent=1 // loop_footer_branch
      %22 = sbr.rel target = $region3
    $region8: #{tpu_custom_call.1} parent=1 // loop_exit
      _
    %4359 = vsyncpa [#allocation3], 1
    %s4360 = scalar_lea.sflag [#allocation3], 1
    %4361 = vsyncpa %s4360, 1
    %4362 = vsyncpa [#allocation12], 1
    %s4363 = scalar_lea.sflag [#allocation12], 1
    %4364 = vsyncpa %s4363, 1
    %4365 = vsyncpa [#allocation4], 1
    %s4366 = scalar_lea.sflag [#allocation4], 1
    %4367 = vsyncpa %s4366, 1
    %4368 = vsyncpa [#allocation5], 1
    %s4369 = scalar_lea.sflag [#allocation5], 1
    %4370 = vsyncpa %s4369, 1
    %4371 = vsyncpa [#allocation8], 1
    %4372 = vsyncpa [#allocation6], 1
    %s4373 = scalar_lea.sflag [#allocation6], 1
    %4374 = vsyncpa %s4373, 1

</llo_original>
